<compile_context>
chip_gen: v5e
topology: v5e:2x2
jax: 0.10.0
libtpu: 0.0.40
codegen_flags: <defaults>
</compile_context>

<pallas_src>
import functools

import jax
import jax.numpy as jnp
import numpy as np
from jax.experimental import pallas as pl
from jax.experimental.pallas import tpu as pltpu

BN_EPS = 1e-5


# ----------------------------------------------------------------------------
# VMEM / tile budgeting
# ----------------------------------------------------------------------------
def _vmem_budget_bytes():
    """Per-generation scoped-VMEM budget (~54 MiB v7x, ~108 MiB v5e/v6e)."""
    try:
        cap = int(pltpu.get_tpu_info().vmem_capacity_bytes)
    except Exception:
        cap = 64 * 1024 * 1024          # conservative fallback (v7x per-core VMEM)
    return int(cap * 0.85)


def _pick_row_block(H, W, C, Cout, budget_bytes):
    """Largest divisor of H whose per-grid-step working set fits the budget."""
    for th in sorted((d for d in range(1, H + 1) if H % d == 0), reverse=True):
        x_resident = 2 * H * W * C * 4            # full image per b, double-buffered
        slab = (th + 2) * W * 3 * C * 2           # bf16 im2col row slab
        y_tile = 2 * th * W * Cout * 4            # f32 conv-out tile, double-buffered
        weights = 2 * 9 * C * Cout * 2
        misc = 1 << 16
        if x_resident + slab + y_tile + weights + misc <= budget_bytes:
            return th
    return 1


# ----------------------------------------------------------------------------
# Kernel 1/2: 3x3 conv (+ optional fused input BN+ReLU) + per-tile BN partials
# ----------------------------------------------------------------------------
def _conv3x3_bn_stats_kernel(*refs, th, n_row_blocks, fuse_input_bn_relu):
    if fuse_input_bn_relu:
        x_ref, w_ref, scale_ref, shift_ref, y_ref, sum_ref, sq_ref, slab = refs
    else:
        x_ref, w_ref, y_ref, sum_ref, sq_ref, slab = refs
        scale_ref = shift_ref = None

    _, W, C = x_ref.shape
    Cout = y_ref.shape[-1]
    r = pl.program_id(1)
    row0 = r * th

    def prep(v):
        # Optional fused BN-affine + ReLU on the conv input, then cast to bf16
        # for the MXU (accumulation stays f32).
        v = v.astype(jnp.float32)
        if fuse_input_bn_relu:
            sc = scale_ref[...].astype(jnp.float32).reshape(1, 1, C)
            sh = shift_ref[...].astype(jnp.float32).reshape(1, 1, C)
            v = jnp.maximum(v * sc + sh, 0.0)
        return v.astype(slab.dtype)

    def fill_rows(dst0, nrows, src):
        # Pack the 3 dx taps of `src` (nrows, W, C) into slab rows
        # [dst0, dst0+nrows).  Out-of-image columns keep the zeroed strips.
        for dx in range(3):
            c0 = max(0, 1 - dx)
            c1 = min(W, W + 1 - dx)
            slab[dst0:dst0 + nrows, c0:c1, dx * C:(dx + 1) * C] = (
                src[:, c0 + dx - 1:c1 + dx - 1, :])

    # Halo-only zeroing: only the two column strips no tap ever writes.  Done
    # every step (tiny) so correctness is independent of which TensorCore owns
    # which grid slice on v7x megacore.
    slab[:, 0:1, 0:C] = jnp.zeros((th + 2, 1, C), slab.dtype)
    slab[:, W - 1:W, 2 * C:3 * C] = jnp.zeros((th + 2, 1, C), slab.dtype)

    # Center rows of this tile (always in-image).
    fill_rows(1, th, prep(x_ref[pl.ds(row0, th), :, :]))

    # Top halo row (input row row0-1), or zeros at the image edge.
    @pl.when(r == 0)
    def _():
        slab[0:1, :, :] = jnp.zeros((1, W, 3 * C), slab.dtype)

    @pl.when(r > 0)
    def _():
        fill_rows(0, 1, prep(x_ref[pl.ds(row0 - 1, 1), :, :]))

    # Bottom halo row (input row row0+th), or zeros at the image edge.
    @pl.when(r == n_row_blocks - 1)
    def _():
        slab[th + 1:th + 2, :, :] = jnp.zeros((1, W, 3 * C), slab.dtype)

    @pl.when(r < n_row_blocks - 1)
    def _():
        fill_rows(th + 1, 1, prep(x_ref[pl.ds(row0 + th, 1), :, :]))

    # 3x3 conv = 3 dy contributions, each one MXU matmul with K = 3*C
    # (bf16 operands, f32 accumulation).
    w = w_ref[...]                       # (3, 3*C, Cout) bf16
    m = th * W
    acc = jnp.dot(slab[0:th, :, :].reshape(m, 3 * C), w[0],
                  preferred_element_type=jnp.float32)
    acc = acc + jnp.dot(slab[1:th + 1, :, :].reshape(m, 3 * C), w[1],
                        preferred_element_type=jnp.float32)
    acc = acc + jnp.dot(slab[2:th + 2, :, :].reshape(m, 3 * C), w[2],
                        preferred_element_type=jnp.float32)

    # Conv output tile + per-tile BN partial statistics (sum, sum-of-squares),
    # computed from the f32 accumulator before any rounding.  The cross-sublane
    # reductions land in the XLU slot, which has slack here.
    y_ref[...] = acc.reshape(th, W, Cout).astype(y_ref.dtype)
    sum_ref[...] = jnp.sum(acc, axis=0, keepdims=True).reshape(1, 1, Cout)
    sq_ref[...] = jnp.sum(acc * acc, axis=0, keepdims=True).reshape(1, 1, Cout)


def _conv3x3_bn_stats(x, w_packed, scale, shift, *, th, vmem_limit):
    B, H, W, C = x.shape
    Cout = w_packed.shape[-1]
    hb = H // th
    fuse = scale is not None

    kernel = functools.partial(
        _conv3x3_bn_stats_kernel, th=th, n_row_blocks=hb,
        fuse_input_bn_relu=fuse)

    in_specs = [
        # Full image resident per batch element (small next to the slab);
        # rows for this tile + halo are sliced inside the kernel.
        pl.BlockSpec((None, H, W, C), lambda b, r: (b, 0, 0, 0)),
        pl.BlockSpec((3, 3 * C, Cout), lambda b, r: (0, 0, 0)),
    ]
    args = [x, w_packed]
    if fuse:
        in_specs += [pl.BlockSpec((1, C), lambda b, r: (0, 0)),
                     pl.BlockSpec((1, C), lambda b, r: (0, 0))]
        args += [scale, shift]

    out_shape = (
        jax.ShapeDtypeStruct((B, H, W, Cout), jnp.float32),   # raw conv output
        jax.ShapeDtypeStruct((B, hb, 1, Cout), jnp.float32),  # per-tile sum
        jax.ShapeDtypeStruct((B, hb, 1, Cout), jnp.float32),  # per-tile sum(x^2)
    )
    out_specs = (
        pl.BlockSpec((None, th, W, Cout), lambda b, r: (b, r, 0, 0)),
        pl.BlockSpec((None, 1, 1, Cout), lambda b, r: (b, r, 0, 0)),
        pl.BlockSpec((None, 1, 1, Cout), lambda b, r: (b, r, 0, 0)),
    )

    return pl.pallas_call(
        kernel,
        out_shape=out_shape,
        grid_spec=pltpu.PrefetchScalarGridSpec(
            num_scalar_prefetch=0,
            grid=(B, hb),
            in_specs=in_specs,
            out_specs=out_specs,
            scratch_shapes=[pltpu.VMEM((th + 2, W, 3 * C), jnp.bfloat16)]),
        compiler_params=pltpu.CompilerParams(
            dimension_semantics=("parallel", "parallel"),
            vmem_limit_bytes=vmem_limit),
    )(*args)


# ----------------------------------------------------------------------------
# Kernel 3: BN2 affine + residual add + ReLU
# ----------------------------------------------------------------------------
def _bn_residual_relu_kernel(y_ref, x_ref, scale_ref, shift_ref, o_ref):
    C = o_ref.shape[-1]
    scale = scale_ref[...].astype(jnp.float32).reshape(1, 1, C)
    shift = shift_ref[...].astype(jnp.float32).reshape(1, 1, C)
    out = (y_ref[...].astype(jnp.float32) * scale + shift
           + x_ref[...].astype(jnp.float32))
    o_ref[...] = jnp.maximum(out, 0.0).astype(o_ref.dtype)


def _bn_residual_relu(y2, x, scale, shift, *, th, vmem_limit):
    B, H, W, C = x.shape
    hb = H // th
    tile = pl.BlockSpec((None, th, W, C), lambda b, r: (b, r, 0, 0))
    chan = pl.BlockSpec((1, C), lambda b, r: (0, 0))
    return pl.pallas_call(
        _bn_residual_relu_kernel,
        out_shape=jax.ShapeDtypeStruct((B, H, W, C), x.dtype),
        grid_spec=pltpu.PrefetchScalarGridSpec(
            num_scalar_prefetch=0,
            grid=(B, hb),
            in_specs=[tile, tile, chan, chan],
            out_specs=tile),
        compiler_params=pltpu.CompilerParams(
            dimension_semantics=("parallel", "parallel"),
            vmem_limit_bytes=vmem_limit),
    )(y2, x, scale, shift)


# ----------------------------------------------------------------------------
# BN finalize (tiny per-channel math; partial sums merged across tiles in f32)
# ----------------------------------------------------------------------------
def _finalize_bn_scale_shift(psum, psq, count, gamma, beta):
    s = jnp.sum(psum, axis=(0, 1, 2))
    ss = jnp.sum(psq, axis=(0, 1, 2))
    mean = s / count
    var = jnp.maximum(ss / count - mean * mean, 0.0)   # guard cancellation
    inv_std = jax.lax.rsqrt(var + BN_EPS)
    scale = gamma.astype(jnp.float32) * inv_std
    shift = beta.astype(jnp.float32) - mean * scale
    C = scale.shape[0]
    return scale.reshape(1, C), shift.reshape(1, C)


# ----------------------------------------------------------------------------
# Forward pass (NHWC core + NCHW adaptor to match the PyTorch interface)
# ----------------------------------------------------------------------------
@functools.partial(jax.jit, static_argnames=("row_block",))
def residual_block_forward_nhwc(x, w1, g1, b1, w2, g2, b2, row_block=None):
    """x: (B, H, W, C) NHWC; w*: (3, 3, Cin, Cout) HWIO. stride=1, no downsample."""
    B, H, W, C = x.shape
    Cout = w1.shape[-1]
    if w1.shape[2] != C or Cout != C:
        raise NotImplementedError(
            "Residual add requires Cin == Cout (stride=1, downsample=None).")

    vmem_limit = _vmem_budget_bytes()
    th = row_block if row_block is not None else _pick_row_block(
        H, W, C, Cout, (vmem_limit * 2) // 3)
    if H % th != 0:
        raise ValueError("row_block must evenly divide H")
    count = B * H * W

    # Weight packing for the 3*C-K slab matmuls: (3,3,Ci,Co) -> (dy, dx*Ci, Co)
    # in (dx, ci) row order, cast to bf16 for the MXU.
    w1p = w1.astype(jnp.bfloat16).reshape(3, 3 * C, Cout)
    w2p = w2.astype(jnp.bfloat16).reshape(3, 3 * Cout, Cout)

    # Phase 1: conv1 + bn1 partial stats.
    y1, s1, q1 = _conv3x3_bn_stats(x, w1p, None, None, th=th, vmem_limit=vmem_limit)
    sc1, sh1 = _finalize_bn_scale_shift(s1, q1, count, g1, b1)

    # Phase 2: bn1+ReLU fused into conv2's input path; conv2 + bn2 partial stats.
    y2, s2, q2 = _conv3x3_bn_stats(y1, w2p, sc1, sh1, th=th, vmem_limit=vmem_limit)
    sc2, sh2 = _finalize_bn_scale_shift(s2, q2, count, g2, b2)

    # Phase 3: bn2 affine + residual add + ReLU.
    return _bn_residual_relu(y2, x, sc2, sh2, th=th, vmem_limit=vmem_limit)


def residual_block_forward(x_nchw, w1, g1, b1, w2, g2, b2, row_block=None):
    # TODO(synk): in a full NHWC network these transposes disappear (keep NHWC
    # end-to-end); they are kept only to match the PyTorch NCHW interface.
    x = jnp.transpose(x_nchw, (0, 2, 3, 1))
    out = residual_block_forward_nhwc(x, w1, g1, b1, w2, g2, b2, row_block=row_block)
    return jnp.transpose(out, (0, 3, 1, 2))


# ------------------------- pure-JAX reference -------------------------
def _conv3x3_ref(x_nhwc, w_hwio):
    return jax.lax.conv_general_dilated(
        x_nhwc, w_hwio, window_strides=(1, 1), padding=((1, 1), (1, 1)),
        dimension_numbers=("NHWC", "HWIO", "NHWC"))


def _bn_ref(x, g, b):
    m = jnp.mean(x, axis=(0, 1, 2), keepdims=True)
    v = jnp.mean((x - m) ** 2, axis=(0, 1, 2), keepdims=True)
    return ((x - m) * jax.lax.rsqrt(v + BN_EPS) * g.reshape(1, 1, 1, -1)
            + b.reshape(1, 1, 1, -1))


def residual_block_ref(x_nchw, w1, g1, b1, w2, g2, b2):
    x = jnp.transpose(x_nchw, (0, 2, 3, 1))
    out = jnp.maximum(_bn_ref(_conv3x3_ref(x, w1), g1, b1), 0.0)
    out = _bn_ref(_conv3x3_ref(out, w2), g2, b2)
    out = jnp.maximum(out + x, 0.0)
    return jnp.transpose(out, (0, 3, 1, 2))


if __name__ == "__main__":
    B, C, H, W = 2, 4, 16, 16          # in_channels == out_channels, stride=1
    key = jax.random.PRNGKey(0)
    kx, k1, k2 = jax.random.split(key, 3)

    x = jax.random.normal(kx, (B, C, H, W), dtype=jnp.float32)

    fan_in = C * 3 * 3
    w1 = jax.random.normal(k1, (3, 3, C, C), jnp.float32) * (2.0 / fan_in) ** 0.5
    w2 = jax.random.normal(k2, (3, 3, C, C), jnp.float32) * (2.0 / fan_in) ** 0.5
    # BatchNorm affine params: PyTorch defaults (gamma=1, beta=0).
    g1 = jnp.ones((C,), jnp.float32)
    b1 = jnp.zeros((C,), jnp.float32)
    g2 = jnp.ones((C,), jnp.float32)
    b2 = jnp.zeros((C,), jnp.float32)

    ref = residual_block_ref(x, w1, g1, b1, w2, g2, b2)

    # Auto row-block (whole image) and an explicit 4-row block (exercises the
    # interior-halo path of the row-tiled grid).
    out_auto = jax.block_until_ready(
        residual_block_forward(x, w1, g1, b1, w2, g2, b2))
    out_t4 = jax.block_until_ready(
        residual_block_forward(x, w1, g1, b1, w2, g2, b2, row_block=4))

    # bf16 MXU inputs (f32 accumulation) -> bf16-level tolerance vs f32 ref.
    np.testing.assert_allclose(np.asarray(out_auto), np.asarray(ref),
                               atol=3e-2, rtol=3e-2)
    np.testing.assert_allclose(np.asarray(out_t4), np.asarray(ref),
                               atol=3e-2, rtol=3e-2)
    np.testing.assert_allclose(np.asarray(out_auto), np.asarray(out_t4),
                               atol=2e-3, rtol=2e-3)

    print("KERNEL_OK")
</pallas_src>

<mosaic_0001>
module attributes {stable_mosaic.version = 11 : i64} {
  func.func @_conv3x3_bn_stats_kernel(%arg0: i32, %arg1: i32, %arg2: memref<1x16x16x4xf32, #tpu.memory_space<vmem>>, %arg3: memref<3x12x4xbf16, #tpu.memory_space<vmem>>, %arg4: memref<1x16x16x4xf32, #tpu.memory_space<vmem>>, %arg5: memref<1x1x1x4xf32, #tpu.memory_space<vmem>>, %arg6: memref<1x1x1x4xf32, #tpu.memory_space<vmem>>, %arg7: memref<18x16x12xbf16, #tpu.memory_space<vmem>>) attributes {dimension_semantics = [#tpu.dimension_semantics<parallel>, #tpu.dimension_semantics<parallel>], iteration_bounds = array<i64: 2, 1>, scalar_prefetch = 0 : i64, scratch_operands = 1 : i64, tpu.core_type = #tpu.core_type<tc>, window_params = [{transform_indices = @transform_0, window_bounds = array<i64: 1, 16, 16, 4>}, {pipeline_mode = #tpu.pipeline_mode<synchronous>, transform_indices = @transform_1, window_bounds = array<i64: 3, 12, 4>}, {transform_indices = @transform_2, window_bounds = array<i64: 1, 16, 16, 4>}, {transform_indices = @transform_3, window_bounds = array<i64: 1, 1, 1, 4>}, {transform_indices = @transform_4, window_bounds = array<i64: 1, 1, 1, 4>}]} {
    %c16_i32 = arith.constant 16 : i32
    %0 = arith.muli %arg1, %c16_i32 : i32
    %cst = arith.constant 0.000000e+00 : bf16
    %1 = vector.broadcast %cst : bf16 to vector<18x1x4xbf16>
    %c0 = arith.constant 0 : index
    %c0_0 = arith.constant 0 : index
    %c0_1 = arith.constant 0 : index
    %2 = vector.load %arg7[%c0, %c0_0, %c0_1] : memref<18x16x12xbf16, #tpu.memory_space<vmem>>, vector<18x1x4xbf16>
    tpu.vector_store %arg7[%c0, %c0_0, %c0_1], %1 {strides = array<i32>} : memref<18x16x12xbf16, #tpu.memory_space<vmem>>, vector<18x1x4xbf16>,
    %cst_2 = arith.constant 0.000000e+00 : bf16
    %3 = vector.broadcast %cst_2 : bf16 to vector<18x1x4xbf16>
    %c0_3 = arith.constant 0 : index
    %c15 = arith.constant 15 : index
    %c8 = arith.constant 8 : index
    %4 = vector.load %arg7[%c0_3, %c15, %c8] : memref<18x16x12xbf16, #tpu.memory_space<vmem>>, vector<18x1x4xbf16>
    tpu.vector_store %arg7[%c0_3, %c15, %c8], %3 {strides = array<i32>} : memref<18x16x12xbf16, #tpu.memory_space<vmem>>, vector<18x1x4xbf16>,
    %c0_4 = arith.constant 0 : index
    %5 = arith.index_cast %0 : i32 to index
    %c0_5 = arith.constant 0 : index
    %c0_6 = arith.constant 0 : index
    %6 = vector.load %arg2[%c0_4, %5, %c0_5, %c0_6] : memref<1x16x16x4xf32, #tpu.memory_space<vmem>>, vector<1x16x16x4xf32>
    %7 = vector.shape_cast %6 : vector<1x16x16x4xf32> to vector<16x16x4xf32>
    %8 = arith.truncf %7 : vector<16x16x4xf32> to vector<16x16x4xbf16>
    %9 = vector.extract_strided_slice %8 {offsets = [0, 0, 0], sizes = [16, 15, 4], strides = [1, 1, 1]} : vector<16x16x4xbf16> to vector<16x15x4xbf16>
    %c1 = arith.constant 1 : index
    %c1_7 = arith.constant 1 : index
    %c0_8 = arith.constant 0 : index
    %10 = vector.load %arg7[%c1, %c1_7, %c0_8] : memref<18x16x12xbf16, #tpu.memory_space<vmem>>, vector<16x15x4xbf16>
    tpu.vector_store %arg7[%c1, %c1_7, %c0_8], %9 {strides = array<i32>} : memref<18x16x12xbf16, #tpu.memory_space<vmem>>, vector<16x15x4xbf16>,
    %c1_9 = arith.constant 1 : index
    %c0_10 = arith.constant 0 : index
    %c4 = arith.constant 4 : index
    %11 = vector.load %arg7[%c1_9, %c0_10, %c4] : memref<18x16x12xbf16, #tpu.memory_space<vmem>>, vector<16x16x4xbf16>
    tpu.vector_store %arg7[%c1_9, %c0_10, %c4], %8 {strides = array<i32>} : memref<18x16x12xbf16, #tpu.memory_space<vmem>>, vector<16x16x4xbf16>,
    %12 = vector.extract_strided_slice %8 {offsets = [0, 1, 0], sizes = [16, 15, 4], strides = [1, 1, 1]} : vector<16x16x4xbf16> to vector<16x15x4xbf16>
    %c1_11 = arith.constant 1 : index
    %c0_12 = arith.constant 0 : index
    %c8_13 = arith.constant 8 : index
    %13 = vector.load %arg7[%c1_11, %c0_12, %c8_13] : memref<18x16x12xbf16, #tpu.memory_space<vmem>>, vector<16x15x4xbf16>
    tpu.vector_store %arg7[%c1_11, %c0_12, %c8_13], %12 {strides = array<i32>} : memref<18x16x12xbf16, #tpu.memory_space<vmem>>, vector<16x15x4xbf16>,
    %c0_i32 = arith.constant 0 : i32
    %14 = arith.cmpi eq, %arg1, %c0_i32 : i32
    %15 = arith.extui %14 : i1 to i32
    %c0_i32_14 = arith.constant 0 : i32
    %16 = arith.cmpi ne, %15, %c0_i32_14 : i32
    scf.if %16 {
      %cst_49 = arith.constant 0.000000e+00 : bf16
      %61 = vector.broadcast %cst_49 : bf16 to vector<1x16x12xbf16>
      %c0_50 = arith.constant 0 : index
      %c0_51 = arith.constant 0 : index
      %c0_52 = arith.constant 0 : index
      %62 = vector.load %arg7[%c0_50, %c0_51, %c0_52] : memref<18x16x12xbf16, #tpu.memory_space<vmem>>, vector<1x16x12xbf16>
      tpu.vector_store %arg7[%c0_50, %c0_51, %c0_52], %61 {strides = array<i32>} : memref<18x16x12xbf16, #tpu.memory_space<vmem>>, vector<1x16x12xbf16>,
    } else {
    }
    %c0_i32_15 = arith.constant 0 : i32
    %17 = arith.cmpi sgt, %arg1, %c0_i32_15 : i32
    %18 = arith.extui %17 : i1 to i32
    %c0_i32_16 = arith.constant 0 : i32
    %19 = arith.cmpi ne, %18, %c0_i32_16 : i32
    scf.if %19 {
      %c1_i32 = arith.constant 1 : i32
      %61 = arith.subi %0, %c1_i32 : i32
      %c0_49 = arith.constant 0 : index
      %62 = arith.index_cast %61 : i32 to index
      %c0_50 = arith.constant 0 : index
      %c0_51 = arith.constant 0 : index
      %63 = vector.load %arg2[%c0_49, %62, %c0_50, %c0_51] : memref<1x16x16x4xf32, #tpu.memory_space<vmem>>, vector<1x1x16x4xf32>
      %64 = vector.shape_cast %63 : vector<1x1x16x4xf32> to vector<1x16x4xf32>
      %65 = arith.truncf %64 : vector<1x16x4xf32> to vector<1x16x4xbf16>
      %66 = vector.extract_strided_slice %65 {offsets = [0, 0, 0], sizes = [1, 15, 4], strides = [1, 1, 1]} : vector<1x16x4xbf16> to vector<1x15x4xbf16>
      %c0_52 = arith.constant 0 : index
      %c1_53 = arith.constant 1 : index
      %c0_54 = arith.constant 0 : index
      %67 = vector.load %arg7[%c0_52, %c1_53, %c0_54] : memref<18x16x12xbf16, #tpu.memory_space<vmem>>, vector<1x15x4xbf16>
      tpu.vector_store %arg7[%c0_52, %c1_53, %c0_54], %66 {strides = array<i32>} : memref<18x16x12xbf16, #tpu.memory_space<vmem>>, vector<1x15x4xbf16>,
      %c0_55 = arith.constant 0 : index
      %c0_56 = arith.constant 0 : index
      %c4_57 = arith.constant 4 : index
      %68 = vector.load %arg7[%c0_55, %c0_56, %c4_57] : memref<18x16x12xbf16, #tpu.memory_space<vmem>>, vector<1x16x4xbf16>
      tpu.vector_store %arg7[%c0_55, %c0_56, %c4_57], %65 {strides = array<i32>} : memref<18x16x12xbf16, #tpu.memory_space<vmem>>, vector<1x16x4xbf16>,
      %69 = vector.extract_strided_slice %65 {offsets = [0, 1, 0], sizes = [1, 15, 4], strides = [1, 1, 1]} : vector<1x16x4xbf16> to vector<1x15x4xbf16>
      %c0_58 = arith.constant 0 : index
      %c0_59 = arith.constant 0 : index
      %c8_60 = arith.constant 8 : index
      %70 = vector.load %arg7[%c0_58, %c0_59, %c8_60] : memref<18x16x12xbf16, #tpu.memory_space<vmem>>, vector<1x15x4xbf16>
      tpu.vector_store %arg7[%c0_58, %c0_59, %c8_60], %69 {strides = array<i32>} : memref<18x16x12xbf16, #tpu.memory_space<vmem>>, vector<1x15x4xbf16>,
    } else {
    }
    %c0_i32_17 = arith.constant 0 : i32
    %20 = arith.cmpi eq, %arg1, %c0_i32_17 : i32
    %21 = arith.extui %20 : i1 to i32
    %c0_i32_18 = arith.constant 0 : i32
    %22 = arith.cmpi ne, %21, %c0_i32_18 : i32
    scf.if %22 {
      %cst_49 = arith.constant 0.000000e+00 : bf16
      %61 = vector.broadcast %cst_49 : bf16 to vector<1x16x12xbf16>
      %c17 = arith.constant 17 : index
      %c0_50 = arith.constant 0 : index
      %c0_51 = arith.constant 0 : index
      %62 = vector.load %arg7[%c17, %c0_50, %c0_51] : memref<18x16x12xbf16, #tpu.memory_space<vmem>>, vector<1x16x12xbf16>
      tpu.vector_store %arg7[%c17, %c0_50, %c0_51], %61 {strides = array<i32>} : memref<18x16x12xbf16, #tpu.memory_space<vmem>>, vector<1x16x12xbf16>,
    } else {
    }
    %c0_i32_19 = arith.constant 0 : i32
    %23 = arith.cmpi slt, %arg1, %c0_i32_19 : i32
    %24 = arith.extui %23 : i1 to i32
    %c0_i32_20 = arith.constant 0 : i32
    %25 = arith.cmpi ne, %24, %c0_i32_20 : i32
    scf.if %25 {
      %c16_i32_49 = arith.constant 16 : i32
      %61 = arith.addi %0, %c16_i32_49 : i32
      %c0_50 = arith.constant 0 : index
      %62 = arith.index_cast %61 : i32 to index
      %c0_51 = arith.constant 0 : index
      %c0_52 = arith.constant 0 : index
      %63 = vector.load %arg2[%c0_50, %62, %c0_51, %c0_52] : memref<1x16x16x4xf32, #tpu.memory_space<vmem>>, vector<1x1x16x4xf32>
      %64 = vector.shape_cast %63 : vector<1x1x16x4xf32> to vector<1x16x4xf32>
      %65 = arith.truncf %64 : vector<1x16x4xf32> to vector<1x16x4xbf16>
      %66 = vector.extract_strided_slice %65 {offsets = [0, 0, 0], sizes = [1, 15, 4], strides = [1, 1, 1]} : vector<1x16x4xbf16> to vector<1x15x4xbf16>
      %c17 = arith.constant 17 : index
      %c1_53 = arith.constant 1 : index
      %c0_54 = arith.constant 0 : index
      %67 = vector.load %arg7[%c17, %c1_53, %c0_54] : memref<18x16x12xbf16, #tpu.memory_space<vmem>>, vector<1x15x4xbf16>
      tpu.vector_store %arg7[%c17, %c1_53, %c0_54], %66 {strides = array<i32>} : memref<18x16x12xbf16, #tpu.memory_space<vmem>>, vector<1x15x4xbf16>,
      %c17_55 = arith.constant 17 : index
      %c0_56 = arith.constant 0 : index
      %c4_57 = arith.constant 4 : index
      %68 = vector.load %arg7[%c17_55, %c0_56, %c4_57] : memref<18x16x12xbf16, #tpu.memory_space<vmem>>, vector<1x16x4xbf16>
      tpu.vector_store %arg7[%c17_55, %c0_56, %c4_57], %65 {strides = array<i32>} : memref<18x16x12xbf16, #tpu.memory_space<vmem>>, vector<1x16x4xbf16>,
      %69 = vector.extract_strided_slice %65 {offsets = [0, 1, 0], sizes = [1, 15, 4], strides = [1, 1, 1]} : vector<1x16x4xbf16> to vector<1x15x4xbf16>
      %c17_58 = arith.constant 17 : index
      %c0_59 = arith.constant 0 : index
      %c8_60 = arith.constant 8 : index
      %70 = vector.load %arg7[%c17_58, %c0_59, %c8_60] : memref<18x16x12xbf16, #tpu.memory_space<vmem>>, vector<1x15x4xbf16>
      tpu.vector_store %arg7[%c17_58, %c0_59, %c8_60], %69 {strides = array<i32>} : memref<18x16x12xbf16, #tpu.memory_space<vmem>>, vector<1x15x4xbf16>,
    } else {
    }
    %c0_21 = arith.constant 0 : index
    %c0_22 = arith.constant 0 : index
    %c0_23 = arith.constant 0 : index
    %26 = vector.load %arg3[%c0_21, %c0_22, %c0_23] : memref<3x12x4xbf16, #tpu.memory_space<vmem>>, vector<3x12x4xbf16>
    %c0_24 = arith.constant 0 : index
    %c0_25 = arith.constant 0 : index
    %c0_26 = arith.constant 0 : index
    %27 = vector.load %arg7[%c0_24, %c0_25, %c0_26] : memref<18x16x12xbf16, #tpu.memory_space<vmem>>, vector<16x16x12xbf16>
    %28 = vector.shape_cast %27 : vector<16x16x12xbf16> to vector<256x12xbf16>
    %29 = vector.extract_strided_slice %26 {offsets = [0, 0, 0], sizes = [1, 12, 4], strides = [1, 1, 1]} : vector<3x12x4xbf16> to vector<1x12x4xbf16>
    %30 = vector.shape_cast %29 : vector<1x12x4xbf16> to vector<12x4xbf16>
    %cst_27 = arith.constant dense<0.000000e+00> : vector<256x4xf32>
    %31 = tpu.matmul %28, %30, %cst_27 {dimension_numbers = #tpu.dot_dimension_numbers<[1], [0], [0], [1], [0, 0, 1, 1], [], []>} : vector<256x12xbf16>, vector<12x4xbf16>, vector<256x4xf32> -> vector<256x4xf32>
    %c1_28 = arith.constant 1 : index
    %c0_29 = arith.constant 0 : index
    %c0_30 = arith.constant 0 : index
    %32 = vector.load %arg7[%c1_28, %c0_29, %c0_30] : memref<18x16x12xbf16, #tpu.memory_space<vmem>>, vector<16x16x12xbf16>
    %33 = vector.shape_cast %32 : vector<16x16x12xbf16> to vector<256x12xbf16>
    %34 = vector.extract_strided_slice %26 {offsets = [1, 0, 0], sizes = [1, 12, 4], strides = [1, 1, 1]} : vector<3x12x4xbf16> to vector<1x12x4xbf16>
    %35 = vector.shape_cast %34 : vector<1x12x4xbf16> to vector<12x4xbf16>
    %cst_31 = arith.constant dense<0.000000e+00> : vector<256x4xf32>
    %36 = tpu.matmul %33, %35, %cst_31 {dimension_numbers = #tpu.dot_dimension_numbers<[1], [0], [0], [1], [0, 0, 1, 1], [], []>} : vector<256x12xbf16>, vector<12x4xbf16>, vector<256x4xf32> -> vector<256x4xf32>
    %37 = arith.addf %31, %36 : vector<256x4xf32>
    %c2 = arith.constant 2 : index
    %c0_32 = arith.constant 0 : index
    %c0_33 = arith.constant 0 : index
    %38 = vector.load %arg7[%c2, %c0_32, %c0_33] : memref<18x16x12xbf16, #tpu.memory_space<vmem>>, vector<16x16x12xbf16>
    %39 = vector.shape_cast %38 : vector<16x16x12xbf16> to vector<256x12xbf16>
    %40 = vector.extract_strided_slice %26 {offsets = [2, 0, 0], sizes = [1, 12, 4], strides = [1, 1, 1]} : vector<3x12x4xbf16> to vector<1x12x4xbf16>
    %41 = vector.shape_cast %40 : vector<1x12x4xbf16> to vector<12x4xbf16>
    %cst_34 = arith.constant dense<0.000000e+00> : vector<256x4xf32>
    %42 = tpu.matmul %39, %41, %cst_34 {dimension_numbers = #tpu.dot_dimension_numbers<[1], [0], [0], [1], [0, 0, 1, 1], [], []>} : vector<256x12xbf16>, vector<12x4xbf16>, vector<256x4xf32> -> vector<256x4xf32>
    %43 = arith.addf %37, %42 : vector<256x4xf32>
    %44 = vector.shape_cast %43 : vector<256x4xf32> to vector<16x16x4xf32>
    %c0_35 = arith.constant 0 : index
    %c0_36 = arith.constant 0 : index
    %c0_37 = arith.constant 0 : index
    %c0_38 = arith.constant 0 : index
    %45 = vector.load %arg4[%c0_35, %c0_36, %c0_37, %c0_38] : memref<1x16x16x4xf32, #tpu.memory_space<vmem>>, vector<1x16x16x4xf32>
    %46 = vector.shape_cast %45 : vector<1x16x16x4xf32> to vector<16x16x4xf32>
    %47 = vector.shape_cast %44 : vector<16x16x4xf32> to vector<1x16x16x4xf32>
    tpu.vector_store %arg4[%c0_35, %c0_36, %c0_37, %c0_38], %47 {strides = array<i32>} : memref<1x16x16x4xf32, #tpu.memory_space<vmem>>, vector<1x16x16x4xf32>,
    %cst_39 = arith.constant dense<0.000000e+00> : vector<4xf32>
    %48 = vector.multi_reduction <add>, %43, %cst_39 [0] : vector<256x4xf32> to vector<4xf32>
    %49 = vector.shape_cast %48 : vector<4xf32> to vector<1x4xf32>
    %50 = vector.shape_cast %49 : vector<1x4xf32> to vector<1x1x4xf32>
    %c0_40 = arith.constant 0 : index
    %c0_41 = arith.constant 0 : index
    %c0_42 = arith.constant 0 : index
    %c0_43 = arith.constant 0 : index
    %51 = vector.load %arg5[%c0_40, %c0_41, %c0_42, %c0_43] : memref<1x1x1x4xf32, #tpu.memory_space<vmem>>, vector<1x1x1x4xf32>
    %52 = vector.shape_cast %51 : vector<1x1x1x4xf32> to vector<1x1x4xf32>
    %53 = vector.shape_cast %50 : vector<1x1x4xf32> to vector<1x1x1x4xf32>
    tpu.vector_store %arg5[%c0_40, %c0_41, %c0_42, %c0_43], %53 {strides = array<i32>} : memref<1x1x1x4xf32, #tpu.memory_space<vmem>>, vector<1x1x1x4xf32>,
    %54 = arith.mulf %43, %43 : vector<256x4xf32>
    %cst_44 = arith.constant dense<0.000000e+00> : vector<4xf32>
    %55 = vector.multi_reduction <add>, %54, %cst_44 [0] : vector<256x4xf32> to vector<4xf32>
    %56 = vector.shape_cast %55 : vector<4xf32> to vector<1x4xf32>
    %57 = vector.shape_cast %56 : vector<1x4xf32> to vector<1x1x4xf32>
    %c0_45 = arith.constant 0 : index
    %c0_46 = arith.constant 0 : index
    %c0_47 = arith.constant 0 : index
    %c0_48 = arith.constant 0 : index
    %58 = vector.load %arg6[%c0_45, %c0_46, %c0_47, %c0_48] : memref<1x1x1x4xf32, #tpu.memory_space<vmem>>, vector<1x1x1x4xf32>
    %59 = vector.shape_cast %58 : vector<1x1x1x4xf32> to vector<1x1x4xf32>
    %60 = vector.shape_cast %57 : vector<1x1x4xf32> to vector<1x1x1x4xf32>
    tpu.vector_store %arg6[%c0_45, %c0_46, %c0_47, %c0_48], %60 {strides = array<i32>} : memref<1x1x1x4xf32, #tpu.memory_space<vmem>>, vector<1x1x1x4xf32>,
    return
  }
  func.func @transform_0(%arg0: i32, %arg1: i32) -> (i32, i32, i32, i32) {
    %c0_i32 = arith.constant 0 : i32
    %c0_i32_0 = arith.constant 0 : i32
    %c0_i32_1 = arith.constant 0 : i32
    %c0_i32_2 = arith.constant 0 : i32
    return %arg0, %c0_i32, %c0_i32_0, %c0_i32_1 : i32, i32, i32, i32
  }
  func.func @transform_1(%arg0: i32, %arg1: i32) -> (i32, i32, i32) {
    %c0_i32 = arith.constant 0 : i32
    %c0_i32_0 = arith.constant 0 : i32
    %c0_i32_1 = arith.constant 0 : i32
    %c0_i32_2 = arith.constant 0 : i32
    return %c0_i32, %c0_i32_0, %c0_i32_1 : i32, i32, i32
  }
  func.func @transform_2(%arg0: i32, %arg1: i32) -> (i32, i32, i32, i32) {
    %c0_i32 = arith.constant 0 : i32
    %c0_i32_0 = arith.constant 0 : i32
    %c0_i32_1 = arith.constant 0 : i32
    return %arg0, %arg1, %c0_i32, %c0_i32_0 : i32, i32, i32, i32
  }
  func.func @transform_3(%arg0: i32, %arg1: i32) -> (i32, i32, i32, i32) {
    %c0_i32 = arith.constant 0 : i32
    %c0_i32_0 = arith.constant 0 : i32
    %c0_i32_1 = arith.constant 0 : i32
    return %arg0, %arg1, %c0_i32, %c0_i32_0 : i32, i32, i32, i32
  }
  func.func @transform_4(%arg0: i32, %arg1: i32) -> (i32, i32, i32, i32) {
    %c0_i32 = arith.constant 0 : i32
    %c0_i32_0 = arith.constant 0 : i32
    %c0_i32_1 = arith.constant 0 : i32
    return %arg0, %arg1, %c0_i32, %c0_i32_0 : i32, i32, i32, i32
  }
}

module attributes {stable_mosaic.version = 11 : i64} {
  func.func @_bn_residual_relu_kernel(%arg0: i32, %arg1: i32, %arg2: memref<1x16x16x4xf32, #tpu.memory_space<vmem>>, %arg3: memref<1x16x16x4xf32, #tpu.memory_space<vmem>>, %arg4: memref<1x4xf32, #tpu.memory_space<vmem>>, %arg5: memref<1x4xf32, #tpu.memory_space<vmem>>, %arg6: memref<1x16x16x4xf32, #tpu.memory_space<vmem>>) attributes {dimension_semantics = [#tpu.dimension_semantics<parallel>, #tpu.dimension_semantics<parallel>], iteration_bounds = array<i64: 2, 1>, scalar_prefetch = 0 : i64, scratch_operands = 0 : i64, tpu.core_type = #tpu.core_type<tc>, window_params = [{transform_indices = @transform_0, window_bounds = array<i64: 1, 16, 16, 4>}, {transform_indices = @transform_1, window_bounds = array<i64: 1, 16, 16, 4>}, {pipeline_mode = #tpu.pipeline_mode<synchronous>, transform_indices = @transform_2, window_bounds = array<i64: 1, 4>}, {pipeline_mode = #tpu.pipeline_mode<synchronous>, transform_indices = @transform_3, window_bounds = array<i64: 1, 4>}, {transform_indices = @transform_4, window_bounds = array<i64: 1, 16, 16, 4>}]} {
    %c0 = arith.constant 0 : index
    %c0_0 = arith.constant 0 : index
    %0 = vector.load %arg4[%c0, %c0_0] : memref<1x4xf32, #tpu.memory_space<vmem>>, vector<1x4xf32>
    %1 = vector.shape_cast %0 : vector<1x4xf32> to vector<1x1x4xf32>
    %c0_1 = arith.constant 0 : index
    %c0_2 = arith.constant 0 : index
    %2 = vector.load %arg5[%c0_1, %c0_2] : memref<1x4xf32, #tpu.memory_space<vmem>>, vector<1x4xf32>
    %3 = vector.shape_cast %2 : vector<1x4xf32> to vector<1x1x4xf32>
    %c0_3 = arith.constant 0 : index
    %c0_4 = arith.constant 0 : index
    %c0_5 = arith.constant 0 : index
    %c0_6 = arith.constant 0 : index
    %4 = vector.load %arg2[%c0_3, %c0_4, %c0_5, %c0_6] : memref<1x16x16x4xf32, #tpu.memory_space<vmem>>, vector<1x16x16x4xf32>
    %5 = vector.shape_cast %4 : vector<1x16x16x4xf32> to vector<16x16x4xf32>
    %6 = vector.broadcast %1 : vector<1x1x4xf32> to vector<16x16x4xf32>
    %7 = arith.mulf %5, %6 : vector<16x16x4xf32>
    %8 = vector.broadcast %3 : vector<1x1x4xf32> to vector<16x16x4xf32>
    %9 = arith.addf %7, %8 : vector<16x16x4xf32>
    %c0_7 = arith.constant 0 : index
    %c0_8 = arith.constant 0 : index
    %c0_9 = arith.constant 0 : index
    %c0_10 = arith.constant 0 : index
    %10 = vector.load %arg3[%c0_7, %c0_8, %c0_9, %c0_10] : memref<1x16x16x4xf32, #tpu.memory_space<vmem>>, vector<1x16x16x4xf32>
    %11 = vector.shape_cast %10 : vector<1x16x16x4xf32> to vector<16x16x4xf32>
    %12 = arith.addf %9, %11 : vector<16x16x4xf32>
    %cst = arith.constant 0.000000e+00 : f32
    %13 = vector.broadcast %cst : f32 to vector<16x16x4xf32>
    %14 = arith.maximumf %12, %13 : vector<16x16x4xf32>
    %c0_11 = arith.constant 0 : index
    %c0_12 = arith.constant 0 : index
    %c0_13 = arith.constant 0 : index
    %c0_14 = arith.constant 0 : index
    %15 = vector.load %arg6[%c0_11, %c0_12, %c0_13, %c0_14] : memref<1x16x16x4xf32, #tpu.memory_space<vmem>>, vector<1x16x16x4xf32>
    %16 = vector.shape_cast %15 : vector<1x16x16x4xf32> to vector<16x16x4xf32>
    %17 = vector.shape_cast %14 : vector<16x16x4xf32> to vector<1x16x16x4xf32>
    tpu.vector_store %arg6[%c0_11, %c0_12, %c0_13, %c0_14], %17 {strides = array<i32>} : memref<1x16x16x4xf32, #tpu.memory_space<vmem>>, vector<1x16x16x4xf32>,
    return
  }
  func.func @transform_0(%arg0: i32, %arg1: i32) -> (i32, i32, i32, i32) {
    %c0_i32 = arith.constant 0 : i32
    %c0_i32_0 = arith.constant 0 : i32
    %c0_i32_1 = arith.constant 0 : i32
    return %arg0, %arg1, %c0_i32, %c0_i32_0 : i32, i32, i32, i32
  }
  func.func @transform_1(%arg0: i32, %arg1: i32) -> (i32, i32, i32, i32) {
    %c0_i32 = arith.constant 0 : i32
    %c0_i32_0 = arith.constant 0 : i32
    %c0_i32_1 = arith.constant 0 : i32
    return %arg0, %arg1, %c0_i32, %c0_i32_0 : i32, i32, i32, i32
  }
  func.func @transform_2(%arg0: i32, %arg1: i32) -> (i32, i32) {
    %c0_i32 = arith.constant 0 : i32
    %c0_i32_0 = arith.constant 0 : i32
    %c0_i32_1 = arith.constant 0 : i32
    return %c0_i32, %c0_i32_0 : i32, i32
  }
  func.func @transform_3(%arg0: i32, %arg1: i32) -> (i32, i32) {
    %c0_i32 = arith.constant 0 : i32
    %c0_i32_0 = arith.constant 0 : i32
    %c0_i32_1 = arith.constant 0 : i32
    return %c0_i32, %c0_i32_0 : i32, i32
  }
  func.func @transform_4(%arg0: i32, %arg1: i32) -> (i32, i32, i32, i32) {
    %c0_i32 = arith.constant 0 : i32
    %c0_i32_0 = arith.constant 0 : i32
    %c0_i32_1 = arith.constant 0 : i32
    return %arg0, %arg1, %c0_i32, %c0_i32_0 : i32, i32, i32, i32
  }
}

module attributes {stable_mosaic.version = 11 : i64} {
  func.func @_conv3x3_bn_stats_kernel(%arg0: i32, %arg1: i32, %arg2: memref<1x16x16x4xf32, #tpu.memory_space<vmem>>, %arg3: memref<3x12x4xbf16, #tpu.memory_space<vmem>>, %arg4: memref<1x4xf32, #tpu.memory_space<vmem>>, %arg5: memref<1x4xf32, #tpu.memory_space<vmem>>, %arg6: memref<1x16x16x4xf32, #tpu.memory_space<vmem>>, %arg7: memref<1x1x1x4xf32, #tpu.memory_space<vmem>>, %arg8: memref<1x1x1x4xf32, #tpu.memory_space<vmem>>, %arg9: memref<18x16x12xbf16, #tpu.memory_space<vmem>>) attributes {dimension_semantics = [#tpu.dimension_semantics<parallel>, #tpu.dimension_semantics<parallel>], iteration_bounds = array<i64: 2, 1>, scalar_prefetch = 0 : i64, scratch_operands = 1 : i64, tpu.core_type = #tpu.core_type<tc>, window_params = [{transform_indices = @transform_0, window_bounds = array<i64: 1, 16, 16, 4>}, {pipeline_mode = #tpu.pipeline_mode<synchronous>, transform_indices = @transform_1, window_bounds = array<i64: 3, 12, 4>}, {pipeline_mode = #tpu.pipeline_mode<synchronous>, transform_indices = @transform_2, window_bounds = array<i64: 1, 4>}, {pipeline_mode = #tpu.pipeline_mode<synchronous>, transform_indices = @transform_3, window_bounds = array<i64: 1, 4>}, {transform_indices = @transform_4, window_bounds = array<i64: 1, 16, 16, 4>}, {transform_indices = @transform_5, window_bounds = array<i64: 1, 1, 1, 4>}, {transform_indices = @transform_6, window_bounds = array<i64: 1, 1, 1, 4>}]} {
    %c16_i32 = arith.constant 16 : i32
    %0 = arith.muli %arg1, %c16_i32 : i32
    %cst = arith.constant 0.000000e+00 : bf16
    %1 = vector.broadcast %cst : bf16 to vector<18x1x4xbf16>
    %c0 = arith.constant 0 : index
    %c0_0 = arith.constant 0 : index
    %c0_1 = arith.constant 0 : index
    %2 = vector.load %arg9[%c0, %c0_0, %c0_1] : memref<18x16x12xbf16, #tpu.memory_space<vmem>>, vector<18x1x4xbf16>
    tpu.vector_store %arg9[%c0, %c0_0, %c0_1], %1 {strides = array<i32>} : memref<18x16x12xbf16, #tpu.memory_space<vmem>>, vector<18x1x4xbf16>,
    %cst_2 = arith.constant 0.000000e+00 : bf16
    %3 = vector.broadcast %cst_2 : bf16 to vector<18x1x4xbf16>
    %c0_3 = arith.constant 0 : index
    %c15 = arith.constant 15 : index
    %c8 = arith.constant 8 : index
    %4 = vector.load %arg9[%c0_3, %c15, %c8] : memref<18x16x12xbf16, #tpu.memory_space<vmem>>, vector<18x1x4xbf16>
    tpu.vector_store %arg9[%c0_3, %c15, %c8], %3 {strides = array<i32>} : memref<18x16x12xbf16, #tpu.memory_space<vmem>>, vector<18x1x4xbf16>,
    %c0_4 = arith.constant 0 : index
    %5 = arith.index_cast %0 : i32 to index
    %c0_5 = arith.constant 0 : index
    %c0_6 = arith.constant 0 : index
    %6 = vector.load %arg2[%c0_4, %5, %c0_5, %c0_6] : memref<1x16x16x4xf32, #tpu.memory_space<vmem>>, vector<1x16x16x4xf32>
    %7 = vector.shape_cast %6 : vector<1x16x16x4xf32> to vector<16x16x4xf32>
    %c0_7 = arith.constant 0 : index
    %c0_8 = arith.constant 0 : index
    %8 = vector.load %arg4[%c0_7, %c0_8] : memref<1x4xf32, #tpu.memory_space<vmem>>, vector<1x4xf32>
    %9 = vector.shape_cast %8 : vector<1x4xf32> to vector<1x1x4xf32>
    %c0_9 = arith.constant 0 : index
    %c0_10 = arith.constant 0 : index
    %10 = vector.load %arg5[%c0_9, %c0_10] : memref<1x4xf32, #tpu.memory_space<vmem>>, vector<1x4xf32>
    %11 = vector.shape_cast %10 : vector<1x4xf32> to vector<1x1x4xf32>
    %12 = vector.broadcast %9 : vector<1x1x4xf32> to vector<16x16x4xf32>
    %13 = arith.mulf %7, %12 : vector<16x16x4xf32>
    %14 = vector.broadcast %11 : vector<1x1x4xf32> to vector<16x16x4xf32>
    %15 = arith.addf %13, %14 : vector<16x16x4xf32>
    %cst_11 = arith.constant 0.000000e+00 : f32
    %16 = vector.broadcast %cst_11 : f32 to vector<16x16x4xf32>
    %17 = arith.maximumf %15, %16 : vector<16x16x4xf32>
    %18 = arith.truncf %17 : vector<16x16x4xf32> to vector<16x16x4xbf16>
    %19 = vector.extract_strided_slice %18 {offsets = [0, 0, 0], sizes = [16, 15, 4], strides = [1, 1, 1]} : vector<16x16x4xbf16> to vector<16x15x4xbf16>
    %c1 = arith.constant 1 : index
    %c1_12 = arith.constant 1 : index
    %c0_13 = arith.constant 0 : index
    %20 = vector.load %arg9[%c1, %c1_12, %c0_13] : memref<18x16x12xbf16, #tpu.memory_space<vmem>>, vector<16x15x4xbf16>
    tpu.vector_store %arg9[%c1, %c1_12, %c0_13], %19 {strides = array<i32>} : memref<18x16x12xbf16, #tpu.memory_space<vmem>>, vector<16x15x4xbf16>,
    %c1_14 = arith.constant 1 : index
    %c0_15 = arith.constant 0 : index
    %c4 = arith.constant 4 : index
    %21 = vector.load %arg9[%c1_14, %c0_15, %c4] : memref<18x16x12xbf16, #tpu.memory_space<vmem>>, vector<16x16x4xbf16>
    tpu.vector_store %arg9[%c1_14, %c0_15, %c4], %18 {strides = array<i32>} : memref<18x16x12xbf16, #tpu.memory_space<vmem>>, vector<16x16x4xbf16>,
    %22 = vector.extract_strided_slice %18 {offsets = [0, 1, 0], sizes = [16, 15, 4], strides = [1, 1, 1]} : vector<16x16x4xbf16> to vector<16x15x4xbf16>
    %c1_16 = arith.constant 1 : index
    %c0_17 = arith.constant 0 : index
    %c8_18 = arith.constant 8 : index
    %23 = vector.load %arg9[%c1_16, %c0_17, %c8_18] : memref<18x16x12xbf16, #tpu.memory_space<vmem>>, vector<16x15x4xbf16>
    tpu.vector_store %arg9[%c1_16, %c0_17, %c8_18], %22 {strides = array<i32>} : memref<18x16x12xbf16, #tpu.memory_space<vmem>>, vector<16x15x4xbf16>,
    %c0_i32 = arith.constant 0 : i32
    %24 = arith.cmpi eq, %arg1, %c0_i32 : i32
    %25 = arith.extui %24 : i1 to i32
    %c0_i32_19 = arith.constant 0 : i32
    %26 = arith.cmpi ne, %25, %c0_i32_19 : i32
    scf.if %26 {
      %cst_54 = arith.constant 0.000000e+00 : bf16
      %71 = vector.broadcast %cst_54 : bf16 to vector<1x16x12xbf16>
      %c0_55 = arith.constant 0 : index
      %c0_56 = arith.constant 0 : index
      %c0_57 = arith.constant 0 : index
      %72 = vector.load %arg9[%c0_55, %c0_56, %c0_57] : memref<18x16x12xbf16, #tpu.memory_space<vmem>>, vector<1x16x12xbf16>
      tpu.vector_store %arg9[%c0_55, %c0_56, %c0_57], %71 {strides = array<i32>} : memref<18x16x12xbf16, #tpu.memory_space<vmem>>, vector<1x16x12xbf16>,
    } else {
    }
    %c0_i32_20 = arith.constant 0 : i32
    %27 = arith.cmpi sgt, %arg1, %c0_i32_20 : i32
    %28 = arith.extui %27 : i1 to i32
    %c0_i32_21 = arith.constant 0 : i32
    %29 = arith.cmpi ne, %28, %c0_i32_21 : i32
    scf.if %29 {
      %c1_i32 = arith.constant 1 : i32
      %71 = arith.subi %0, %c1_i32 : i32
      %c0_54 = arith.constant 0 : index
      %72 = arith.index_cast %71 : i32 to index
      %c0_55 = arith.constant 0 : index
      %c0_56 = arith.constant 0 : index
      %73 = vector.load %arg2[%c0_54, %72, %c0_55, %c0_56] : memref<1x16x16x4xf32, #tpu.memory_space<vmem>>, vector<1x1x16x4xf32>
      %74 = vector.shape_cast %73 : vector<1x1x16x4xf32> to vector<1x16x4xf32>
      %c0_57 = arith.constant 0 : index
      %c0_58 = arith.constant 0 : index
      %75 = vector.load %arg4[%c0_57, %c0_58] : memref<1x4xf32, #tpu.memory_space<vmem>>, vector<1x4xf32>
      %76 = vector.shape_cast %75 : vector<1x4xf32> to vector<1x1x4xf32>
      %c0_59 = arith.constant 0 : index
      %c0_60 = arith.constant 0 : index
      %77 = vector.load %arg5[%c0_59, %c0_60] : memref<1x4xf32, #tpu.memory_space<vmem>>, vector<1x4xf32>
      %78 = vector.shape_cast %77 : vector<1x4xf32> to vector<1x1x4xf32>
      %79 = vector.broadcast %76 : vector<1x1x4xf32> to vector<1x16x4xf32>
      %80 = arith.mulf %74, %79 : vector<1x16x4xf32>
      %81 = vector.broadcast %78 : vector<1x1x4xf32> to vector<1x16x4xf32>
      %82 = arith.addf %80, %81 : vector<1x16x4xf32>
      %cst_61 = arith.constant 0.000000e+00 : f32
      %83 = vector.broadcast %cst_61 : f32 to vector<1x16x4xf32>
      %84 = arith.maximumf %82, %83 : vector<1x16x4xf32>
      %85 = arith.truncf %84 : vector<1x16x4xf32> to vector<1x16x4xbf16>
      %86 = vector.extract_strided_slice %85 {offsets = [0, 0, 0], sizes = [1, 15, 4], strides = [1, 1, 1]} : vector<1x16x4xbf16> to vector<1x15x4xbf16>
      %c0_62 = arith.constant 0 : index
      %c1_63 = arith.constant 1 : index
      %c0_64 = arith.constant 0 : index
      %87 = vector.load %arg9[%c0_62, %c1_63, %c0_64] : memref<18x16x12xbf16, #tpu.memory_space<vmem>>, vector<1x15x4xbf16>
      tpu.vector_store %arg9[%c0_62, %c1_63, %c0_64], %86 {strides = array<i32>} : memref<18x16x12xbf16, #tpu.memory_space<vmem>>, vector<1x15x4xbf16>,
      %c0_65 = arith.constant 0 : index
      %c0_66 = arith.constant 0 : index
      %c4_67 = arith.constant 4 : index
      %88 = vector.load %arg9[%c0_65, %c0_66, %c4_67] : memref<18x16x12xbf16, #tpu.memory_space<vmem>>, vector<1x16x4xbf16>
      tpu.vector_store %arg9[%c0_65, %c0_66, %c4_67], %85 {strides = array<i32>} : memref<18x16x12xbf16, #tpu.memory_space<vmem>>, vector<1x16x4xbf16>,
      %89 = vector.extract_strided_slice %85 {offsets = [0, 1, 0], sizes = [1, 15, 4], strides = [1, 1, 1]} : vector<1x16x4xbf16> to vector<1x15x4xbf16>
      %c0_68 = arith.constant 0 : index
      %c0_69 = arith.constant 0 : index
      %c8_70 = arith.constant 8 : index
      %90 = vector.load %arg9[%c0_68, %c0_69, %c8_70] : memref<18x16x12xbf16, #tpu.memory_space<vmem>>, vector<1x15x4xbf16>
      tpu.vector_store %arg9[%c0_68, %c0_69, %c8_70], %89 {strides = array<i32>} : memref<18x16x12xbf16, #tpu.memory_space<vmem>>, vector<1x15x4xbf16>,
    } else {
    }
    %c0_i32_22 = arith.constant 0 : i32
    %30 = arith.cmpi eq, %arg1, %c0_i32_22 : i32
    %31 = arith.extui %30 : i1 to i32
    %c0_i32_23 = arith.constant 0 : i32
    %32 = arith.cmpi ne, %31, %c0_i32_23 : i32
    scf.if %32 {
      %cst_54 = arith.constant 0.000000e+00 : bf16
      %71 = vector.broadcast %cst_54 : bf16 to vector<1x16x12xbf16>
      %c17 = arith.constant 17 : index
      %c0_55 = arith.constant 0 : index
      %c0_56 = arith.constant 0 : index
      %72 = vector.load %arg9[%c17, %c0_55, %c0_56] : memref<18x16x12xbf16, #tpu.memory_space<vmem>>, vector<1x16x12xbf16>
      tpu.vector_store %arg9[%c17, %c0_55, %c0_56], %71 {strides = array<i32>} : memref<18x16x12xbf16, #tpu.memory_space<vmem>>, vector<1x16x12xbf16>,
    } else {
    }
    %c0_i32_24 = arith.constant 0 : i32
    %33 = arith.cmpi slt, %arg1, %c0_i32_24 : i32
    %34 = arith.extui %33 : i1 to i32
    %c0_i32_25 = arith.constant 0 : i32
    %35 = arith.cmpi ne, %34, %c0_i32_25 : i32
    scf.if %35 {
      %c16_i32_54 = arith.constant 16 : i32
      %71 = arith.addi %0, %c16_i32_54 : i32
      %c0_55 = arith.constant 0 : index
      %72 = arith.index_cast %71 : i32 to index
      %c0_56 = arith.constant 0 : index
      %c0_57 = arith.constant 0 : index
      %73 = vector.load %arg2[%c0_55, %72, %c0_56, %c0_57] : memref<1x16x16x4xf32, #tpu.memory_space<vmem>>, vector<1x1x16x4xf32>
      %74 = vector.shape_cast %73 : vector<1x1x16x4xf32> to vector<1x16x4xf32>
      %c0_58 = arith.constant 0 : index
      %c0_59 = arith.constant 0 : index
      %75 = vector.load %arg4[%c0_58, %c0_59] : memref<1x4xf32, #tpu.memory_space<vmem>>, vector<1x4xf32>
      %76 = vector.shape_cast %75 : vector<1x4xf32> to vector<1x1x4xf32>
      %c0_60 = arith.constant 0 : index
      %c0_61 = arith.constant 0 : index
      %77 = vector.load %arg5[%c0_60, %c0_61] : memref<1x4xf32, #tpu.memory_space<vmem>>, vector<1x4xf32>
      %78 = vector.shape_cast %77 : vector<1x4xf32> to vector<1x1x4xf32>
      %79 = vector.broadcast %76 : vector<1x1x4xf32> to vector<1x16x4xf32>
      %80 = arith.mulf %74, %79 : vector<1x16x4xf32>
      %81 = vector.broadcast %78 : vector<1x1x4xf32> to vector<1x16x4xf32>
      %82 = arith.addf %80, %81 : vector<1x16x4xf32>
      %cst_62 = arith.constant 0.000000e+00 : f32
      %83 = vector.broadcast %cst_62 : f32 to vector<1x16x4xf32>
      %84 = arith.maximumf %82, %83 : vector<1x16x4xf32>
      %85 = arith.truncf %84 : vector<1x16x4xf32> to vector<1x16x4xbf16>
      %86 = vector.extract_strided_slice %85 {offsets = [0, 0, 0], sizes = [1, 15, 4], strides = [1, 1, 1]} : vector<1x16x4xbf16> to vector<1x15x4xbf16>
      %c17 = arith.constant 17 : index
      %c1_63 = arith.constant 1 : index
      %c0_64 = arith.constant 0 : index
      %87 = vector.load %arg9[%c17, %c1_63, %c0_64] : memref<18x16x12xbf16, #tpu.memory_space<vmem>>, vector<1x15x4xbf16>
      tpu.vector_store %arg9[%c17, %c1_63, %c0_64], %86 {strides = array<i32>} : memref<18x16x12xbf16, #tpu.memory_space<vmem>>, vector<1x15x4xbf16>,
      %c17_65 = arith.constant 17 : index
      %c0_66 = arith.constant 0 : index
      %c4_67 = arith.constant 4 : index
      %88 = vector.load %arg9[%c17_65, %c0_66, %c4_67] : memref<18x16x12xbf16, #tpu.memory_space<vmem>>, vector<1x16x4xbf16>
      tpu.vector_store %arg9[%c17_65, %c0_66, %c4_67], %85 {strides = array<i32>} : memref<18x16x12xbf16, #tpu.memory_space<vmem>>, vector<1x16x4xbf16>,
      %89 = vector.extract_strided_slice %85 {offsets = [0, 1, 0], sizes = [1, 15, 4], strides = [1, 1, 1]} : vector<1x16x4xbf16> to vector<1x15x4xbf16>
      %c17_68 = arith.constant 17 : index
      %c0_69 = arith.constant 0 : index
      %c8_70 = arith.constant 8 : index
      %90 = vector.load %arg9[%c17_68, %c0_69, %c8_70] : memref<18x16x12xbf16, #tpu.memory_space<vmem>>, vector<1x15x4xbf16>
      tpu.vector_store %arg9[%c17_68, %c0_69, %c8_70], %89 {strides = array<i32>} : memref<18x16x12xbf16, #tpu.memory_space<vmem>>, vector<1x15x4xbf16>,
    } else {
    }
    %c0_26 = arith.constant 0 : index
    %c0_27 = arith.constant 0 : index
    %c0_28 = arith.constant 0 : index
    %36 = vector.load %arg3[%c0_26, %c0_27, %c0_28] : memref<3x12x4xbf16, #tpu.memory_space<vmem>>, vector<3x12x4xbf16>
    %c0_29 = arith.constant 0 : index
    %c0_30 = arith.constant 0 : index
    %c0_31 = arith.constant 0 : index
    %37 = vector.load %arg9[%c0_29, %c0_30, %c0_31] : memref<18x16x12xbf16, #tpu.memory_space<vmem>>, vector<16x16x12xbf16>
    %38 = vector.shape_cast %37 : vector<16x16x12xbf16> to vector<256x12xbf16>
    %39 = vector.extract_strided_slice %36 {offsets = [0, 0, 0], sizes = [1, 12, 4], strides = [1, 1, 1]} : vector<3x12x4xbf16> to vector<1x12x4xbf16>
    %40 = vector.shape_cast %39 : vector<1x12x4xbf16> to vector<12x4xbf16>
    %cst_32 = arith.constant dense<0.000000e+00> : vector<256x4xf32>
    %41 = tpu.matmul %38, %40, %cst_32 {dimension_numbers = #tpu.dot_dimension_numbers<[1], [0], [0], [1], [0, 0, 1, 1], [], []>} : vector<256x12xbf16>, vector<12x4xbf16>, vector<256x4xf32> -> vector<256x4xf32>
    %c1_33 = arith.constant 1 : index
    %c0_34 = arith.constant 0 : index
    %c0_35 = arith.constant 0 : index
    %42 = vector.load %arg9[%c1_33, %c0_34, %c0_35] : memref<18x16x12xbf16, #tpu.memory_space<vmem>>, vector<16x16x12xbf16>
    %43 = vector.shape_cast %42 : vector<16x16x12xbf16> to vector<256x12xbf16>
    %44 = vector.extract_strided_slice %36 {offsets = [1, 0, 0], sizes = [1, 12, 4], strides = [1, 1, 1]} : vector<3x12x4xbf16> to vector<1x12x4xbf16>
    %45 = vector.shape_cast %44 : vector<1x12x4xbf16> to vector<12x4xbf16>
    %cst_36 = arith.constant dense<0.000000e+00> : vector<256x4xf32>
    %46 = tpu.matmul %43, %45, %cst_36 {dimension_numbers = #tpu.dot_dimension_numbers<[1], [0], [0], [1], [0, 0, 1, 1], [], []>} : vector<256x12xbf16>, vector<12x4xbf16>, vector<256x4xf32> -> vector<256x4xf32>
    %47 = arith.addf %41, %46 : vector<256x4xf32>
    %c2 = arith.constant 2 : index
    %c0_37 = arith.constant 0 : index
    %c0_38 = arith.constant 0 : index
    %48 = vector.load %arg9[%c2, %c0_37, %c0_38] : memref<18x16x12xbf16, #tpu.memory_space<vmem>>, vector<16x16x12xbf16>
    %49 = vector.shape_cast %48 : vector<16x16x12xbf16> to vector<256x12xbf16>
    %50 = vector.extract_strided_slice %36 {offsets = [2, 0, 0], sizes = [1, 12, 4], strides = [1, 1, 1]} : vector<3x12x4xbf16> to vector<1x12x4xbf16>
    %51 = vector.shape_cast %50 : vector<1x12x4xbf16> to vector<12x4xbf16>
    %cst_39 = arith.constant dense<0.000000e+00> : vector<256x4xf32>
    %52 = tpu.matmul %49, %51, %cst_39 {dimension_numbers = #tpu.dot_dimension_numbers<[1], [0], [0], [1], [0, 0, 1, 1], [], []>} : vector<256x12xbf16>, vector<12x4xbf16>, vector<256x4xf32> -> vector<256x4xf32>
    %53 = arith.addf %47, %52 : vector<256x4xf32>
    %54 = vector.shape_cast %53 : vector<256x4xf32> to vector<16x16x4xf32>
    %c0_40 = arith.constant 0 : index
    %c0_41 = arith.constant 0 : index
    %c0_42 = arith.constant 0 : index
    %c0_43 = arith.constant 0 : index
    %55 = vector.load %arg6[%c0_40, %c0_41, %c0_42, %c0_43] : memref<1x16x16x4xf32, #tpu.memory_space<vmem>>, vector<1x16x16x4xf32>
    %56 = vector.shape_cast %55 : vector<1x16x16x4xf32> to vector<16x16x4xf32>
    %57 = vector.shape_cast %54 : vector<16x16x4xf32> to vector<1x16x16x4xf32>
    tpu.vector_store %arg6[%c0_40, %c0_41, %c0_42, %c0_43], %57 {strides = array<i32>} : memref<1x16x16x4xf32, #tpu.memory_space<vmem>>, vector<1x16x16x4xf32>,
    %cst_44 = arith.constant dense<0.000000e+00> : vector<4xf32>
    %58 = vector.multi_reduction <add>, %53, %cst_44 [0] : vector<256x4xf32> to vector<4xf32>
    %59 = vector.shape_cast %58 : vector<4xf32> to vector<1x4xf32>
    %60 = vector.shape_cast %59 : vector<1x4xf32> to vector<1x1x4xf32>
    %c0_45 = arith.constant 0 : index
    %c0_46 = arith.constant 0 : index
    %c0_47 = arith.constant 0 : index
    %c0_48 = arith.constant 0 : index
    %61 = vector.load %arg7[%c0_45, %c0_46, %c0_47, %c0_48] : memref<1x1x1x4xf32, #tpu.memory_space<vmem>>, vector<1x1x1x4xf32>
    %62 = vector.shape_cast %61 : vector<1x1x1x4xf32> to vector<1x1x4xf32>
    %63 = vector.shape_cast %60 : vector<1x1x4xf32> to vector<1x1x1x4xf32>
    tpu.vector_store %arg7[%c0_45, %c0_46, %c0_47, %c0_48], %63 {strides = array<i32>} : memref<1x1x1x4xf32, #tpu.memory_space<vmem>>, vector<1x1x1x4xf32>,
    %64 = arith.mulf %53, %53 : vector<256x4xf32>
    %cst_49 = arith.constant dense<0.000000e+00> : vector<4xf32>
    %65 = vector.multi_reduction <add>, %64, %cst_49 [0] : vector<256x4xf32> to vector<4xf32>
    %66 = vector.shape_cast %65 : vector<4xf32> to vector<1x4xf32>
    %67 = vector.shape_cast %66 : vector<1x4xf32> to vector<1x1x4xf32>
    %c0_50 = arith.constant 0 : index
    %c0_51 = arith.constant 0 : index
    %c0_52 = arith.constant 0 : index
    %c0_53 = arith.constant 0 : index
    %68 = vector.load %arg8[%c0_50, %c0_51, %c0_52, %c0_53] : memref<1x1x1x4xf32, #tpu.memory_space<vmem>>, vector<1x1x1x4xf32>
    %69 = vector.shape_cast %68 : vector<1x1x1x4xf32> to vector<1x1x4xf32>
    %70 = vector.shape_cast %67 : vector<1x1x4xf32> to vector<1x1x1x4xf32>
    tpu.vector_store %arg8[%c0_50, %c0_51, %c0_52, %c0_53], %70 {strides = array<i32>} : memref<1x1x1x4xf32, #tpu.memory_space<vmem>>, vector<1x1x1x4xf32>,
    return
  }
  func.func @transform_0(%arg0: i32, %arg1: i32) -> (i32, i32, i32, i32) {
    %c0_i32 = arith.constant 0 : i32
    %c0_i32_0 = arith.constant 0 : i32
    %c0_i32_1 = arith.constant 0 : i32
    %c0_i32_2 = arith.constant 0 : i32
    return %arg0, %c0_i32, %c0_i32_0, %c0_i32_1 : i32, i32, i32, i32
  }
  func.func @transform_1(%arg0: i32, %arg1: i32) -> (i32, i32, i32) {
    %c0_i32 = arith.constant 0 : i32
    %c0_i32_0 = arith.constant 0 : i32
    %c0_i32_1 = arith.constant 0 : i32
    %c0_i32_2 = arith.constant 0 : i32
    return %c0_i32, %c0_i32_0, %c0_i32_1 : i32, i32, i32
  }
  func.func @transform_2(%arg0: i32, %arg1: i32) -> (i32, i32) {
    %c0_i32 = arith.constant 0 : i32
    %c0_i32_0 = arith.constant 0 : i32
    %c0_i32_1 = arith.constant 0 : i32
    return %c0_i32, %c0_i32_0 : i32, i32
  }
  func.func @transform_3(%arg0: i32, %arg1: i32) -> (i32, i32) {
    %c0_i32 = arith.constant 0 : i32
    %c0_i32_0 = arith.constant 0 : i32
    %c0_i32_1 = arith.constant 0 : i32
    return %c0_i32, %c0_i32_0 : i32, i32
  }
  func.func @transform_4(%arg0: i32, %arg1: i32) -> (i32, i32, i32, i32) {
    %c0_i32 = arith.constant 0 : i32
    %c0_i32_0 = arith.constant 0 : i32
    %c0_i32_1 = arith.constant 0 : i32
    return %arg0, %arg1, %c0_i32, %c0_i32_0 : i32, i32, i32, i32
  }
  func.func @transform_5(%arg0: i32, %arg1: i32) -> (i32, i32, i32, i32) {
    %c0_i32 = arith.constant 0 : i32
    %c0_i32_0 = arith.constant 0 : i32
    %c0_i32_1 = arith.constant 0 : i32
    return %arg0, %arg1, %c0_i32, %c0_i32_0 : i32, i32, i32, i32
  }
  func.func @transform_6(%arg0: i32, %arg1: i32) -> (i32, i32, i32, i32) {
    %c0_i32 = arith.constant 0 : i32
    %c0_i32_0 = arith.constant 0 : i32
    %c0_i32_1 = arith.constant 0 : i32
    return %arg0, %arg1, %c0_i32, %c0_i32_0 : i32, i32, i32, i32
  }
}

</mosaic_0001>

<llo_original>
// kernel: residual_block_forward_nhwc.5
$region0: #{residual_block_forward_nhwc.5}
  #allocation0 [shape = 'u32[]', space=smem, size = 0x4, offset = 0x4, fixed_abs, tag = 'smem constant byte address 0x4 - core index']
  #allocation1 [shape = 'u32[72,128]{1,0:T(1,128)}', space=vmem, size = 0x9000, scoped, tag = 'internal scratch']
  %s0 = inlined_call_operand.vmem [shape: f32[2,16,16,4], index: 0, kind: input, shape index: {}]
  %s1 = inlined_call_operand.vmem [shape: f32[2,16,16,4], index: 1, kind: input, shape index: {}]
  %s2 = inlined_call_operand.vmem [shape: f32[1,4], index: 2, kind: input, shape index: {}]
  %s3 = inlined_call_operand.vmem [shape: f32[1,4], index: 3, kind: input, shape index: {}]
  %s4 = inlined_call_operand.vmem [shape: f32[2,16,16,4], index: 4, kind: output, shape index: {}]
  %s5 = sld [smem:[#allocation0]]
  $region49: #{residual_block_forward_nhwc.5} parent=0
    _
  %s7 = ssub.s32 1, %s5
  %s8 = scalar_select 0, %s7, %s5
  loop: start=0, step=1, limit=4
  $region2: #{residual_block_forward_nhwc.5} parent=0 // loop_pre_header
    _
  $region3: #{residual_block_forward_nhwc.5} parent=0 // loop_header
    %s10 = sphi 0, %s14
    %p11 = scmp.ge.s32.totalorder %s10, 4
    %s17 = sphi 0, %s29
    %s18 = sphi 0, %s25
    %s19 = sphi 0, %s17
    %s20 = sphi 0, %s18
    %s21 = sphi 0, %s19
    %s22 = sphi 0, %s20
    %s34 = sphi 0, %s36
    %s37 = sphi 0, %s34
    %s38 = sphi 0, %s37
    %s54 = sphi 0, %s38
    %s62 = sphi 0, %s64
    %s65 = sphi 0, %s62
    %s66 = sphi 0, %s65
    %s82 = sphi 0, %s66
    %s86 = sphi 0, %s86
    %s88 = sphi 0, %s86
    %s89 = sphi 0, %s88
    %s103 = sphi 0, %s89
    %s107 = sphi 0, %s107
    %s109 = sphi 0, %s107
    %s110 = sphi 0, %s109
    %s124 = sphi 0, %s110
    %s132 = sphi 0, %s134
    %s135 = sphi 0, %s132
    %s136 = sphi 0, %s135
    %s152 = sphi 0, %s136
  $region4: #{residual_block_forward_nhwc.5} parent=0 // loop_header_branch
    %13 = sbr.rel (%p11) target = $region8
  $region5: #{residual_block_forward_nhwc.5} parent=0 // loop_body
    %s15 = ssub.s32 %s10, 1
    %s16 = ssub.s32 %s10, 2
    %s23 = sadd.s32 1, %s18
    %p24 = scmp.ge.s32.totalorder %s23, 1
    %s25 = scalar_select %p24, 0, %s23
    %s26 = sadd.s32 1, %s17
    %s27 = scalar_select %p24, %s26, %s17
    %p28 = scmp.ge.s32.totalorder %s27, 2
    %s29 = scalar_select %p28, 0, %s27
    %s30 = ssub.s32 %s17, %s29
    %s31 = ssub.s32 %s18, %s25
    %s32 = sor.u32 %s30, %s31
    %p33 = scmp.eq.s32.totalorder %s32, 0
    %s35 = sadd.s32 %s34, 1
    %s36 = scalar_select %p33, %s34, %s35
    %p39 = pneg %p33
    %p40 = scmp.eq.s32.totalorder %s10, 1
    %p41 = por %p39, %p40
    %p42 = scmp.ne.s32.totalorder %s34, %s37
    %p43 = scmp.eq.s32.totalorder %s10, 0
    %p44 = por %p42, %p43
    %p45 = scmp.ne.s32.totalorder %s34, %s37
    %p46 = scmp.eq.s32.totalorder %s15, 1
    %p47 = por %p45, %p46
    %p48 = scmp.ne.s32.totalorder %s37, %s38
    %p49 = scmp.eq.s32.totalorder %s15, 0
    %p50 = por %p48, %p49
    %p51 = scmp.ne.s32.totalorder %s37, %s38
    %p52 = scmp.eq.s32.totalorder %s16, 1
    %p53 = por %p51, %p52
    %p55 = scmp.ne.s32.totalorder %s38, %s54
    %p56 = scmp.eq.s32.totalorder %s16, 0
    %p57 = por %p55, %p56
    %s58 = ssub.s32 %s17, %s29
    %s59 = ssub.s32 %s18, %s25
    %s60 = sor.u32 %s58, %s59
    %p61 = scmp.eq.s32.totalorder %s60, 0
    %s63 = sadd.s32 %s62, 1
    %s64 = scalar_select %p61, %s62, %s63
    %p67 = pneg %p61
    %p68 = scmp.eq.s32.totalorder %s10, 1
    %p69 = por %p67, %p68
    %p70 = scmp.ne.s32.totalorder %s62, %s65
    %p71 = scmp.eq.s32.totalorder %s10, 0
    %p72 = por %p70, %p71
    %p73 = scmp.ne.s32.totalorder %s62, %s65
    %p74 = scmp.eq.s32.totalorder %s15, 1
    %p75 = por %p73, %p74
    %p76 = scmp.ne.s32.totalorder %s65, %s66
    %p77 = scmp.eq.s32.totalorder %s15, 0
    %p78 = por %p76, %p77
    %p79 = scmp.ne.s32.totalorder %s65, %s66
    %p80 = scmp.eq.s32.totalorder %s16, 1
    %p81 = por %p79, %p80
    %p83 = scmp.ne.s32.totalorder %s66, %s82
    %p84 = scmp.eq.s32.totalorder %s16, 0
    %p85 = por %p83, %p84
    %s87 = sadd.s32 %s86, 1
    %p90 = scmp.eq.s32.totalorder %s10, 1
    %p91 = scmp.ne.s32.totalorder %s86, %s88
    %p92 = scmp.eq.s32.totalorder %s10, 0
    %p93 = por %p91, %p92
    %p94 = scmp.ne.s32.totalorder %s86, %s88
    %p95 = scmp.eq.s32.totalorder %s15, 1
    %p96 = por %p94, %p95
    %p97 = scmp.ne.s32.totalorder %s88, %s89
    %p98 = scmp.eq.s32.totalorder %s15, 0
    %p99 = por %p97, %p98
    %p100 = scmp.ne.s32.totalorder %s88, %s89
    %p101 = scmp.eq.s32.totalorder %s16, 1
    %p102 = por %p100, %p101
    %p104 = scmp.ne.s32.totalorder %s89, %s103
    %p105 = scmp.eq.s32.totalorder %s16, 0
    %p106 = por %p104, %p105
    %s108 = sadd.s32 %s107, 1
    %p111 = scmp.eq.s32.totalorder %s10, 1
    %p112 = scmp.ne.s32.totalorder %s107, %s109
    %p113 = scmp.eq.s32.totalorder %s10, 0
    %p114 = por %p112, %p113
    %p115 = scmp.ne.s32.totalorder %s107, %s109
    %p116 = scmp.eq.s32.totalorder %s15, 1
    %p117 = por %p115, %p116
    %p118 = scmp.ne.s32.totalorder %s109, %s110
    %p119 = scmp.eq.s32.totalorder %s15, 0
    %p120 = por %p118, %p119
    %p121 = scmp.ne.s32.totalorder %s109, %s110
    %p122 = scmp.eq.s32.totalorder %s16, 1
    %p123 = por %p121, %p122
    %p125 = scmp.ne.s32.totalorder %s110, %s124
    %p126 = scmp.eq.s32.totalorder %s16, 0
    %p127 = por %p125, %p126
    %s128 = ssub.s32 %s17, %s29
    %s129 = ssub.s32 %s18, %s25
    %s130 = sor.u32 %s128, %s129
    %p131 = scmp.eq.s32.totalorder %s130, 0
    %s133 = sadd.s32 %s132, 1
    %s134 = scalar_select %p131, %s132, %s133
    %p137 = pneg %p131
    %p138 = scmp.eq.s32.totalorder %s10, 1
    %p139 = por %p137, %p138
    %p140 = scmp.ne.s32.totalorder %s132, %s135
    %p141 = scmp.eq.s32.totalorder %s10, 0
    %p142 = por %p140, %p141
    %p143 = scmp.ne.s32.totalorder %s132, %s135
    %p144 = scmp.eq.s32.totalorder %s15, 1
    %p145 = por %p143, %p144
    %p146 = scmp.ne.s32.totalorder %s135, %s136
    %p147 = scmp.eq.s32.totalorder %s15, 0
    %p148 = por %p146, %p147
    %p149 = scmp.ne.s32.totalorder %s135, %s136
    %p150 = scmp.eq.s32.totalorder %s16, 1
    %p151 = por %p149, %p150
    %p153 = scmp.ne.s32.totalorder %s136, %s152
    %p154 = scmp.eq.s32.totalorder %s16, 0
    %p155 = por %p153, %p154
    %p156 = scmp.le.s32.totalorder 1, %s10
    %p157 = scmp.lt.s32.totalorder %s10, 3
    %p158 = pnand %p156, %p157
    %p159 = pneg %p158
    // Predicated region
    $region9: #{residual_block_forward_nhwc.5} parent=5 // pred_check
      _
    $region10: #{residual_block_forward_nhwc.5} parent=5 // pred_check_branch
      %161 = sbr.rel (%p158) target = $region12
    $region11: #{residual_block_forward_nhwc.5} parent=5 // pred_region
      %s162 = ssub.s32 %s10, 1
      // Predicated region
      $region13: #{residual_block_forward_nhwc.5} parent=11 // pred_check
        %p163 = pneg %p99
      $region14: #{residual_block_forward_nhwc.5} parent=11 // pred_check_branch
        %165 = sbr.rel (%p163) target = $region16
      $region15: #{residual_block_forward_nhwc.5} parent=11 // pred_region
        _
      $region16: #{residual_block_forward_nhwc.5} parent=11 // pred_fallthru
        _
      // Predicated region
      $region17: #{residual_block_forward_nhwc.5} parent=11 // pred_check
        %p166 = pneg %p120
      $region18: #{residual_block_forward_nhwc.5} parent=11 // pred_check_branch
        %168 = sbr.rel (%p166) target = $region20
      $region19: #{residual_block_forward_nhwc.5} parent=11 // pred_region
        _
      $region20: #{residual_block_forward_nhwc.5} parent=11 // pred_fallthru
        _
    $region12: #{residual_block_forward_nhwc.5} parent=5 // pred_fallthru
      _
    %p169 = scmp.lt.s32.totalorder %s10, 2
    // Predicated region
    $region21: #{residual_block_forward_nhwc.5} parent=5 // pred_check
      %p170 = pneg %p169
    $region22: #{residual_block_forward_nhwc.5} parent=5 // pred_check_branch
      %172 = sbr.rel (%p170) target = $region24
    $region23: #{residual_block_forward_nhwc.5} parent=5 // pred_region
      // Predicated region
      $region25: #{residual_block_forward_nhwc.5} parent=23 // pred_check
        %p173 = pneg %p44
      $region26: #{residual_block_forward_nhwc.5} parent=23 // pred_check_branch
        %175 = sbr.rel (%p173) target = $region28
      $region27: #{residual_block_forward_nhwc.5} parent=23 // pred_region
        %s176 = smul.u32 16, %s18
        %p177 = scmp.lt.s32.totalorder %s17, 1
        %s178 = scalar_select %p177, %s17, 1
        %p179 = scmp.lt.s32.totalorder %s176, 15
        %s180 = scalar_select %p179, %s176, 15
        %s181 = smul.addr %s180, 2
        %s182 = smul.addr %s178, 32
        %s183 = sadd.s32 %s181, %s182
        %s184 = smul.addr %s183, 8
        %s185 = scalar_lea.vmem %s0, %s184
        %s186 = smul.u32 16, %s18
      $region28: #{residual_block_forward_nhwc.5} parent=23 // pred_fallthru
        _
      // Predicated region
      $region29: #{residual_block_forward_nhwc.5} parent=23 // pred_check
        %p187 = pneg %p72
      $region30: #{residual_block_forward_nhwc.5} parent=23 // pred_check_branch
        %189 = sbr.rel (%p187) target = $region32
      $region31: #{residual_block_forward_nhwc.5} parent=23 // pred_region
        %s190 = smul.u32 16, %s18
        %p191 = scmp.lt.s32.totalorder %s17, 1
        %s192 = scalar_select %p191, %s17, 1
        %p193 = scmp.lt.s32.totalorder %s190, 15
        %s194 = scalar_select %p193, %s190, 15
        %s195 = smul.addr %s194, 2
        %s196 = smul.addr %s192, 32
        %s197 = sadd.s32 %s195, %s196
        %s198 = smul.addr %s197, 8
        %s199 = scalar_lea.vmem %s1, %s198
        %s200 = smul.u32 16, %s18
      $region32: #{residual_block_forward_nhwc.5} parent=23 // pred_fallthru
        _
    $region24: #{residual_block_forward_nhwc.5} parent=5 // pred_fallthru
      _
    %p201 = scmp.le.s32.totalorder 1, %s10
    %p202 = scmp.lt.s32.totalorder %s10, 3
    %p203 = pnand %p201, %p202
    %p204 = pneg %p203
    // Predicated region
    $region33: #{residual_block_forward_nhwc.5} parent=5 // pred_check
      _
    $region34: #{residual_block_forward_nhwc.5} parent=5 // pred_check_branch
      %206 = sbr.rel (%p203) target = $region36
    $region35: #{residual_block_forward_nhwc.5} parent=5 // pred_region
      %s207 = ssub.s32 %s10, 1
      %s208 = smul.u32 16, %s20
      %p209 = scmp.lt.s32.totalorder %s19, 1
      %s210 = scalar_select %p209, %s19, 1
      %p211 = scmp.lt.s32.totalorder %s208, 15
      %s212 = scalar_select %p211, %s208, 15
      %s213 = smul.addr %s212, 2
      %s214 = smul.addr %s210, 32
      %s215 = sadd.s32 %s213, %s214
      %s216 = smul.addr %s215, 8
      %s217 = scalar_lea.vmem %s0, %s216
      %p218 = pneg %p50
      %p219 = pneg %p47
      %s220 = smul.u32 16, %s20
      %p221 = scmp.lt.s32.totalorder %s19, 1
      %s222 = scalar_select %p221, %s19, 1
      %p223 = scmp.lt.s32.totalorder %s220, 15
      %s224 = scalar_select %p223, %s220, 15
      %s225 = smul.addr %s224, 2
      %s226 = smul.addr %s222, 32
      %s227 = sadd.s32 %s225, %s226
      %s228 = smul.addr %s227, 8
      %s229 = scalar_lea.vmem %s1, %s228
      %p230 = pneg %p78
      %p231 = pneg %p75
      %p232 = pneg %p99
      %p233 = pneg %p96
      %p234 = pneg %p120
      %p235 = pneg %p117
      %p236 = pneg %p148
      %p237 = pneg %p145
      %s238 = smul.u32 16, %s20
      %p239 = scmp.lt.s32.totalorder %s19, 1
      %s240 = scalar_select %p239, %s19, 1
      %p241 = scmp.lt.s32.totalorder %s238, 15
      %s242 = scalar_select %p241, %s238, 15
      %s243 = smul.addr %s242, 2
      %s244 = smul.addr %s240, 32
      %s245 = sadd.s32 %s243, %s244
      %s246 = smul.addr %s245, 8
      %s247 = scalar_lea.vmem %s4, %s246
      %s248 = smul.u32 16, %s20
      %p249 = scmp.lt.s32.totalorder %s19, 1
      %s250 = scalar_select %p249, %s19, 1
      %p251 = scmp.lt.s32.totalorder %s248, 15
      %s252 = scalar_select %p251, %s248, 15
      %s253 = smul.addr %s252, 2
      %s254 = smul.addr %s250, 32
      %s255 = sadd.s32 %s253, %s254
      %s256 = smul.addr %s255, 8
      %s257 = scalar_lea.vmem %s0, %s256
      %s258 = smul.u32 16, %s20
      %s259 = smul.u32 16, %s20
      %p260 = scmp.lt.s32.totalorder %s19, 1
      %s261 = scalar_select %p260, %s19, 1
      %p262 = scmp.lt.s32.totalorder %s259, 15
      %s263 = scalar_select %p262, %s259, 15
      %s264 = smul.addr %s263, 2
      %s265 = smul.addr %s261, 32
      %s266 = sadd.s32 %s264, %s265
      %s267 = smul.addr %s266, 8
      %s268 = scalar_lea.vmem %s1, %s267
      %s269 = smul.u32 16, %s20
      %s270 = smul.u32 16, %s20
      %p271 = scmp.lt.s32.totalorder %s19, 1
      %s272 = scalar_select %p271, %s19, 1
      %p273 = scmp.lt.s32.totalorder %s270, 15
      %s274 = scalar_select %p273, %s270, 15
      %s275 = smul.addr %s274, 2
      %s276 = smul.addr %s272, 32
      %s277 = sadd.s32 %s275, %s276
      %s278 = smul.addr %s277, 8
      %s279 = scalar_lea.vmem %s4, %s278
      %s280 = smul.u32 16, %s20
      %v281 = vld [vmem:[%s2] sm:$0x1]
      %v282 = vld [vmem:[%s3] sm:$0x1]
      %v283 = vld [vmem:[%s257] sm:$0xff]
      %v284 = vld [vmem:[%s257 + $0x8] sm:$0xff]
      %v285 = vld [vmem:[%s257 + $0x10] sm:$0xff]
      %v286 = vld [vmem:[%s257 + $0x18] sm:$0xff]
      %v287 = vld [vmem:[%s257 + $0x20] sm:$0xff]
      %v288 = vld [vmem:[%s257 + $0x28] sm:$0xff]
      %v289 = vld [vmem:[%s257 + $0x30] sm:$0xff]
      %v290 = vld [vmem:[%s257 + $0x38] sm:$0xff]
      %v291 = vld [vmem:[%s257 + $0x40] sm:$0xff]
      %v292 = vld [vmem:[%s257 + $0x48] sm:$0xff]
      %v293 = vld [vmem:[%s257 + $0x50] sm:$0xff]
      %v294 = vld [vmem:[%s257 + $0x58] sm:$0xff]
      %v295 = vld [vmem:[%s257 + $0x60] sm:$0xff]
      %v296 = vld [vmem:[%s257 + $0x68] sm:$0xff]
      %v297 = vld [vmem:[%s257 + $0x70] sm:$0xff]
      %v298 = vld [vmem:[%s257 + $0x78] sm:$0xff]
      %v299 = vld [vmem:[%s257 + $0x80] sm:$0xff]
      %v300 = vld [vmem:[%s257 + $0x88] sm:$0xff]
      %v301 = vld [vmem:[%s257 + $0x90] sm:$0xff]
      %v302 = vld [vmem:[%s257 + $0x98] sm:$0xff]
      %v303 = vld [vmem:[%s257 + $0xa0] sm:$0xff]
      %v304 = vld [vmem:[%s257 + $0xa8] sm:$0xff]
      %v305 = vld [vmem:[%s257 + $0xb0] sm:$0xff]
      %v306 = vld [vmem:[%s257 + $0xb8] sm:$0xff]
      %v307 = vld [vmem:[%s257 + $0xc0] sm:$0xff]
      %v308 = vld [vmem:[%s257 + $0xc8] sm:$0xff]
      %v309 = vld [vmem:[%s257 + $0xd0] sm:$0xff]
      %v310 = vld [vmem:[%s257 + $0xd8] sm:$0xff]
      %v311 = vld [vmem:[%s257 + $0xe0] sm:$0xff]
      %v312 = vld [vmem:[%s257 + $0xe8] sm:$0xff]
      %v313 = vld [vmem:[%s257 + $0xf0] sm:$0xff]
      %v314 = vld [vmem:[%s257 + $0xf8] sm:$0xff]
      %v316 = vperm.slane %v281, 0
      %v318 = vmul.f32 %v283, %v316
      %v319 = vmul.f32 %v284, %v316
      %v320 = vmul.f32 %v285, %v316
      %v321 = vmul.f32 %v286, %v316
      %v322 = vmul.f32 %v287, %v316
      %v323 = vmul.f32 %v288, %v316
      %v324 = vmul.f32 %v289, %v316
      %v325 = vmul.f32 %v290, %v316
      %v326 = vmul.f32 %v291, %v316
      %v327 = vmul.f32 %v292, %v316
      %v328 = vmul.f32 %v293, %v316
      %v329 = vmul.f32 %v294, %v316
      %v330 = vmul.f32 %v295, %v316
      %v331 = vmul.f32 %v296, %v316
      %v332 = vmul.f32 %v297, %v316
      %v333 = vmul.f32 %v298, %v316
      %v334 = vmul.f32 %v299, %v316
      %v335 = vmul.f32 %v300, %v316
      %v336 = vmul.f32 %v301, %v316
      %v337 = vmul.f32 %v302, %v316
      %v338 = vmul.f32 %v303, %v316
      %v339 = vmul.f32 %v304, %v316
      %v340 = vmul.f32 %v305, %v316
      %v341 = vmul.f32 %v306, %v316
      %v342 = vmul.f32 %v307, %v316
      %v343 = vmul.f32 %v308, %v316
      %v344 = vmul.f32 %v309, %v316
      %v345 = vmul.f32 %v310, %v316
      %v346 = vmul.f32 %v311, %v316
      %v347 = vmul.f32 %v312, %v316
      %v348 = vmul.f32 %v313, %v316
      %v349 = vmul.f32 %v314, %v316
      %v351 = vperm.slane %v282, 0
      %v353 = vadd.f32 %v318, %v351
      %v354 = vadd.f32 %v319, %v351
      %v355 = vadd.f32 %v320, %v351
      %v356 = vadd.f32 %v321, %v351
      %v357 = vadd.f32 %v322, %v351
      %v358 = vadd.f32 %v323, %v351
      %v359 = vadd.f32 %v324, %v351
      %v360 = vadd.f32 %v325, %v351
      %v361 = vadd.f32 %v326, %v351
      %v362 = vadd.f32 %v327, %v351
      %v363 = vadd.f32 %v328, %v351
      %v364 = vadd.f32 %v329, %v351
      %v365 = vadd.f32 %v330, %v351
      %v366 = vadd.f32 %v331, %v351
      %v367 = vadd.f32 %v332, %v351
      %v368 = vadd.f32 %v333, %v351
      %v369 = vadd.f32 %v334, %v351
      %v370 = vadd.f32 %v335, %v351
      %v371 = vadd.f32 %v336, %v351
      %v372 = vadd.f32 %v337, %v351
      %v373 = vadd.f32 %v338, %v351
      %v374 = vadd.f32 %v339, %v351
      %v375 = vadd.f32 %v340, %v351
      %v376 = vadd.f32 %v341, %v351
      %v377 = vadd.f32 %v342, %v351
      %v378 = vadd.f32 %v343, %v351
      %v379 = vadd.f32 %v344, %v351
      %v380 = vadd.f32 %v345, %v351
      %v381 = vadd.f32 %v346, %v351
      %v382 = vadd.f32 %v347, %v351
      %v383 = vadd.f32 %v348, %v351
      %v384 = vadd.f32 %v349, %v351
      %v385 = vld [vmem:[%s268] sm:$0xff]
      %v386 = vld [vmem:[%s268 + $0x8] sm:$0xff]
      %v387 = vld [vmem:[%s268 + $0x10] sm:$0xff]
      %v388 = vld [vmem:[%s268 + $0x18] sm:$0xff]
      %v389 = vld [vmem:[%s268 + $0x20] sm:$0xff]
      %v390 = vld [vmem:[%s268 + $0x28] sm:$0xff]
      %v391 = vld [vmem:[%s268 + $0x30] sm:$0xff]
      %v392 = vld [vmem:[%s268 + $0x38] sm:$0xff]
      %v393 = vld [vmem:[%s268 + $0x40] sm:$0xff]
      %v394 = vld [vmem:[%s268 + $0x48] sm:$0xff]
      %v395 = vld [vmem:[%s268 + $0x50] sm:$0xff]
      %v396 = vld [vmem:[%s268 + $0x58] sm:$0xff]
      %v397 = vld [vmem:[%s268 + $0x60] sm:$0xff]
      %v398 = vld [vmem:[%s268 + $0x68] sm:$0xff]
      %v399 = vld [vmem:[%s268 + $0x70] sm:$0xff]
      %v400 = vld [vmem:[%s268 + $0x78] sm:$0xff]
      %v401 = vld [vmem:[%s268 + $0x80] sm:$0xff]
      %v402 = vld [vmem:[%s268 + $0x88] sm:$0xff]
      %v403 = vld [vmem:[%s268 + $0x90] sm:$0xff]
      %v404 = vld [vmem:[%s268 + $0x98] sm:$0xff]
      %v405 = vld [vmem:[%s268 + $0xa0] sm:$0xff]
      %v406 = vld [vmem:[%s268 + $0xa8] sm:$0xff]
      %v407 = vld [vmem:[%s268 + $0xb0] sm:$0xff]
      %v408 = vld [vmem:[%s268 + $0xb8] sm:$0xff]
      %v409 = vld [vmem:[%s268 + $0xc0] sm:$0xff]
      %v410 = vld [vmem:[%s268 + $0xc8] sm:$0xff]
      %v411 = vld [vmem:[%s268 + $0xd0] sm:$0xff]
      %v412 = vld [vmem:[%s268 + $0xd8] sm:$0xff]
      %v413 = vld [vmem:[%s268 + $0xe0] sm:$0xff]
      %v414 = vld [vmem:[%s268 + $0xe8] sm:$0xff]
      %v415 = vld [vmem:[%s268 + $0xf0] sm:$0xff]
      %v416 = vld [vmem:[%s268 + $0xf8] sm:$0xff]
      %v417 = vadd.f32 %v353, %v385
      %v418 = vadd.f32 %v354, %v386
      %v419 = vadd.f32 %v355, %v387
      %v420 = vadd.f32 %v356, %v388
      %v421 = vadd.f32 %v357, %v389
      %v422 = vadd.f32 %v358, %v390
      %v423 = vadd.f32 %v359, %v391
      %v424 = vadd.f32 %v360, %v392
      %v425 = vadd.f32 %v361, %v393
      %v426 = vadd.f32 %v362, %v394
      %v427 = vadd.f32 %v363, %v395
      %v428 = vadd.f32 %v364, %v396
      %v429 = vadd.f32 %v365, %v397
      %v430 = vadd.f32 %v366, %v398
      %v431 = vadd.f32 %v367, %v399
      %v432 = vadd.f32 %v368, %v400
      %v433 = vadd.f32 %v369, %v401
      %v434 = vadd.f32 %v370, %v402
      %v435 = vadd.f32 %v371, %v403
      %v436 = vadd.f32 %v372, %v404
      %v437 = vadd.f32 %v373, %v405
      %v438 = vadd.f32 %v374, %v406
      %v439 = vadd.f32 %v375, %v407
      %v440 = vadd.f32 %v376, %v408
      %v441 = vadd.f32 %v377, %v409
      %v442 = vadd.f32 %v378, %v410
      %v443 = vadd.f32 %v379, %v411
      %v444 = vadd.f32 %v380, %v412
      %v445 = vadd.f32 %v381, %v413
      %v446 = vadd.f32 %v382, %v414
      %v447 = vadd.f32 %v383, %v415
      %v448 = vadd.f32 %v384, %v416
      %v449 = vmax.f32 %v417, 0.0
      %v450 = vmax.f32 %v418, 0.0
      %v451 = vmax.f32 %v419, 0.0
      %v452 = vmax.f32 %v420, 0.0
      %v453 = vmax.f32 %v421, 0.0
      %v454 = vmax.f32 %v422, 0.0
      %v455 = vmax.f32 %v423, 0.0
      %v456 = vmax.f32 %v424, 0.0
      %v457 = vmax.f32 %v425, 0.0
      %v458 = vmax.f32 %v426, 0.0
      %v459 = vmax.f32 %v427, 0.0
      %v460 = vmax.f32 %v428, 0.0
      %v461 = vmax.f32 %v429, 0.0
      %v462 = vmax.f32 %v430, 0.0
      %v463 = vmax.f32 %v431, 0.0
      %v464 = vmax.f32 %v432, 0.0
      %v465 = vmax.f32 %v433, 0.0
      %v466 = vmax.f32 %v434, 0.0
      %v467 = vmax.f32 %v435, 0.0
      %v468 = vmax.f32 %v436, 0.0
      %v469 = vmax.f32 %v437, 0.0
      %v470 = vmax.f32 %v438, 0.0
      %v471 = vmax.f32 %v439, 0.0
      %v472 = vmax.f32 %v440, 0.0
      %v473 = vmax.f32 %v441, 0.0
      %v474 = vmax.f32 %v442, 0.0
      %v475 = vmax.f32 %v443, 0.0
      %v476 = vmax.f32 %v444, 0.0
      %v477 = vmax.f32 %v445, 0.0
      %v478 = vmax.f32 %v446, 0.0
      %v479 = vmax.f32 %v447, 0.0
      %v480 = vmax.f32 %v448, 0.0
      %vm481 = vcmask 31744
      %482 = vst.msk [vmem:[%s279] sm:$0xff] %vm481, %v449
      %483 = vst.msk [vmem:[%s279 + $0x8] sm:$0xff] %vm481, %v450
      %484 = vst.msk [vmem:[%s279 + $0x10] sm:$0xff] %vm481, %v451
      %485 = vst.msk [vmem:[%s279 + $0x18] sm:$0xff] %vm481, %v452
      %486 = vst.msk [vmem:[%s279 + $0x20] sm:$0xff] %vm481, %v453
      %487 = vst.msk [vmem:[%s279 + $0x28] sm:$0xff] %vm481, %v454
      %488 = vst.msk [vmem:[%s279 + $0x30] sm:$0xff] %vm481, %v455
      %489 = vst.msk [vmem:[%s279 + $0x38] sm:$0xff] %vm481, %v456
      %490 = vst.msk [vmem:[%s279 + $0x40] sm:$0xff] %vm481, %v457
      %491 = vst.msk [vmem:[%s279 + $0x48] sm:$0xff] %vm481, %v458
      %492 = vst.msk [vmem:[%s279 + $0x50] sm:$0xff] %vm481, %v459
      %493 = vst.msk [vmem:[%s279 + $0x58] sm:$0xff] %vm481, %v460
      %494 = vst.msk [vmem:[%s279 + $0x60] sm:$0xff] %vm481, %v461
      %495 = vst.msk [vmem:[%s279 + $0x68] sm:$0xff] %vm481, %v462
      %496 = vst.msk [vmem:[%s279 + $0x70] sm:$0xff] %vm481, %v463
      %497 = vst.msk [vmem:[%s279 + $0x78] sm:$0xff] %vm481, %v464
      %498 = vst.msk [vmem:[%s279 + $0x80] sm:$0xff] %vm481, %v465
      %499 = vst.msk [vmem:[%s279 + $0x88] sm:$0xff] %vm481, %v466
      %500 = vst.msk [vmem:[%s279 + $0x90] sm:$0xff] %vm481, %v467
      %501 = vst.msk [vmem:[%s279 + $0x98] sm:$0xff] %vm481, %v468
      %502 = vst.msk [vmem:[%s279 + $0xa0] sm:$0xff] %vm481, %v469
      %503 = vst.msk [vmem:[%s279 + $0xa8] sm:$0xff] %vm481, %v470
      %504 = vst.msk [vmem:[%s279 + $0xb0] sm:$0xff] %vm481, %v471
      %505 = vst.msk [vmem:[%s279 + $0xb8] sm:$0xff] %vm481, %v472
      %506 = vst.msk [vmem:[%s279 + $0xc0] sm:$0xff] %vm481, %v473
      %507 = vst.msk [vmem:[%s279 + $0xc8] sm:$0xff] %vm481, %v474
      %508 = vst.msk [vmem:[%s279 + $0xd0] sm:$0xff] %vm481, %v475
      %509 = vst.msk [vmem:[%s279 + $0xd8] sm:$0xff] %vm481, %v476
      %510 = vst.msk [vmem:[%s279 + $0xe0] sm:$0xff] %vm481, %v477
      %511 = vst.msk [vmem:[%s279 + $0xe8] sm:$0xff] %vm481, %v478
      %512 = vst.msk [vmem:[%s279 + $0xf0] sm:$0xff] %vm481, %v479
      %513 = vst.msk [vmem:[%s279 + $0xf8] sm:$0xff] %vm481, %v480
      %s514 = smul.u32 16, %s20
      %p515 = scmp.lt.s32.totalorder %s19, 1
      %s516 = scalar_select %p515, %s19, 1
      %p517 = scmp.lt.s32.totalorder %s514, 15
      %s518 = scalar_select %p517, %s514, 15
      %s519 = smul.addr %s518, 2
      %s520 = smul.addr %s516, 32
      %s521 = sadd.s32 %s519, %s520
      %s522 = smul.addr %s521, 8
      %s523 = scalar_lea.vmem %s4, %s522
      // Predicated region
      $region37: #{residual_block_forward_nhwc.5} parent=35 // pred_check
        %p524 = pneg %p145
      $region38: #{residual_block_forward_nhwc.5} parent=35 // pred_check_branch
        %526 = sbr.rel (%p524) target = $region40
      $region39: #{residual_block_forward_nhwc.5} parent=35 // pred_region
        %s527 = smul.u32 16, %s20
      $region40: #{residual_block_forward_nhwc.5} parent=35 // pred_fallthru
        _
    $region36: #{residual_block_forward_nhwc.5} parent=5 // pred_fallthru
      _
    %p528 = scmp.le.s32.totalorder 2, %s10
    // Predicated region
    $region41: #{residual_block_forward_nhwc.5} parent=5 // pred_check
      %p529 = pneg %p528
    $region42: #{residual_block_forward_nhwc.5} parent=5 // pred_check_branch
      %531 = sbr.rel (%p529) target = $region44
    $region43: #{residual_block_forward_nhwc.5} parent=5 // pred_region
      %s532 = ssub.s32 %s10, 2
      // Predicated region
      $region45: #{residual_block_forward_nhwc.5} parent=43 // pred_check
        %p533 = pneg %p151
      $region46: #{residual_block_forward_nhwc.5} parent=43 // pred_check_branch
        %535 = sbr.rel (%p533) target = $region48
      $region47: #{residual_block_forward_nhwc.5} parent=43 // pred_region
        %s536 = smul.u32 16, %s22
        %p537 = scmp.lt.s32.totalorder %s21, 1
        %s538 = scalar_select %p537, %s21, 1
        %p539 = scmp.lt.s32.totalorder %s536, 15
        %s540 = scalar_select %p539, %s536, 15
        %s541 = smul.addr %s540, 2
        %s542 = smul.addr %s538, 32
        %s543 = sadd.s32 %s541, %s542
        %s544 = smul.addr %s543, 8
        %s545 = scalar_lea.vmem %s4, %s544
      $region48: #{residual_block_forward_nhwc.5} parent=43 // pred_fallthru
        _
    $region44: #{residual_block_forward_nhwc.5} parent=5 // pred_fallthru
      _
  $region6: #{residual_block_forward_nhwc.5} parent=0 // loop_footer
    %s14 = sadd.s32 1, %s10
  $region7: #{residual_block_forward_nhwc.5} parent=0 // loop_footer_branch
    %9 = sbr.rel target = $region3
  $region8: #{residual_block_forward_nhwc.5} parent=0 // loop_exit
    _

// kernel: residual_block_forward_nhwc.3
$region0: #{residual_block_forward_nhwc.3}
  #allocation0 [shape = 'u32[]', space=smem, size = 0x4, offset = 0x4, fixed_abs, tag = 'smem constant byte address 0x4 - core index']
  #allocation1 [shape = 'u32[72,128]{1,0:T(1,128)}', space=vmem, size = 0x9000, scoped, tag = 'internal scratch']
  #allocation2 [shape = 'bf16[18,16,12]{2,1,0:T(8,128)(2,1)}', space=vmem, size = 0x12000, scoped, tag = 'scratch operand']
  %s0 = inlined_call_operand.vmem [shape: f32[2,16,16,4], index: 0, kind: input, shape index: {}]
  %s1 = inlined_call_operand.vmem [shape: bf16[3,12,4], index: 1, kind: input, shape index: {}]
  %s2 = inlined_call_operand.vmem [shape: f32[2,16,16,4], index: 2, kind: output, shape index: {0}]
  %s3 = inlined_call_operand.vmem [shape: f32[2,1,1,4], index: 3, kind: output, shape index: {1}]
  %s4 = inlined_call_operand.vmem [shape: f32[2,1,1,4], index: 4, kind: output, shape index: {2}]
  %5 = xla_tuple %s2, %s3, %s4
  %s6 = sld [smem:[#allocation0]]
  $region73: #{residual_block_forward_nhwc.3} parent=0
    _
  %s8 = ssub.s32 1, %s6
  %s9 = scalar_select 0, %s8, %s6
  loop: start=0, step=1, limit=4
  $region2: #{residual_block_forward_nhwc.3} parent=0 // loop_pre_header
    _
  $region3: #{residual_block_forward_nhwc.3} parent=0 // loop_header
    %s11 = sphi 0, %s15
    %p12 = scmp.ge.s32.totalorder %s11, 4
    %s18 = sphi 0, %s30
    %s19 = sphi 0, %s26
    %s20 = sphi 0, %s18
    %s21 = sphi 0, %s19
    %s22 = sphi 0, %s20
    %s23 = sphi 0, %s21
    %s33 = sphi 0, %s35
    %s36 = sphi 0, %s33
    %s37 = sphi 0, %s36
    %s53 = sphi 0, %s37
    %s57 = sphi 0, %s57
    %s59 = sphi 0, %s57
    %s60 = sphi 0, %s59
    %s74 = sphi 0, %s60
    %s82 = sphi 0, %s84
    %s85 = sphi 0, %s82
    %s86 = sphi 0, %s85
    %s102 = sphi 0, %s86
    %s110 = sphi 0, %s112
    %s113 = sphi 0, %s110
    %s114 = sphi 0, %s113
    %s130 = sphi 0, %s114
    %s138 = sphi 0, %s140
    %s141 = sphi 0, %s138
    %s142 = sphi 0, %s141
    %s158 = sphi 0, %s142
  $region4: #{residual_block_forward_nhwc.3} parent=0 // loop_header_branch
    %14 = sbr.rel (%p12) target = $region8
  $region5: #{residual_block_forward_nhwc.3} parent=0 // loop_body
    %s16 = ssub.s32 %s11, 1
    %s17 = ssub.s32 %s11, 2
    %s24 = sadd.s32 1, %s19
    %p25 = scmp.ge.s32.totalorder %s24, 1
    %s26 = scalar_select %p25, 0, %s24
    %s27 = sadd.s32 1, %s18
    %s28 = scalar_select %p25, %s27, %s18
    %p29 = scmp.ge.s32.totalorder %s28, 2
    %s30 = scalar_select %p29, 0, %s28
    %s31 = ssub.s32 %s18, %s30
    %p32 = scmp.eq.s32.totalorder %s31, 0
    %s34 = sadd.s32 %s33, 1
    %s35 = scalar_select %p32, %s33, %s34
    %p38 = pneg %p32
    %p39 = scmp.eq.s32.totalorder %s11, 1
    %p40 = por %p38, %p39
    %p41 = scmp.ne.s32.totalorder %s33, %s36
    %p42 = scmp.eq.s32.totalorder %s11, 0
    %p43 = por %p41, %p42
    %p44 = scmp.ne.s32.totalorder %s33, %s36
    %p45 = scmp.eq.s32.totalorder %s16, 1
    %p46 = por %p44, %p45
    %p47 = scmp.ne.s32.totalorder %s36, %s37
    %p48 = scmp.eq.s32.totalorder %s16, 0
    %p49 = por %p47, %p48
    %p50 = scmp.ne.s32.totalorder %s36, %s37
    %p51 = scmp.eq.s32.totalorder %s17, 1
    %p52 = por %p50, %p51
    %p54 = scmp.ne.s32.totalorder %s37, %s53
    %p55 = scmp.eq.s32.totalorder %s17, 0
    %p56 = por %p54, %p55
    %s58 = sadd.s32 %s57, 1
    %p61 = scmp.eq.s32.totalorder %s11, 1
    %p62 = scmp.ne.s32.totalorder %s57, %s59
    %p63 = scmp.eq.s32.totalorder %s11, 0
    %p64 = por %p62, %p63
    %p65 = scmp.ne.s32.totalorder %s57, %s59
    %p66 = scmp.eq.s32.totalorder %s16, 1
    %p67 = por %p65, %p66
    %p68 = scmp.ne.s32.totalorder %s59, %s60
    %p69 = scmp.eq.s32.totalorder %s16, 0
    %p70 = por %p68, %p69
    %p71 = scmp.ne.s32.totalorder %s59, %s60
    %p72 = scmp.eq.s32.totalorder %s17, 1
    %p73 = por %p71, %p72
    %p75 = scmp.ne.s32.totalorder %s60, %s74
    %p76 = scmp.eq.s32.totalorder %s17, 0
    %p77 = por %p75, %p76
    %s78 = ssub.s32 %s18, %s30
    %s79 = ssub.s32 %s19, %s26
    %s80 = sor.u32 %s78, %s79
    %p81 = scmp.eq.s32.totalorder %s80, 0
    %s83 = sadd.s32 %s82, 1
    %s84 = scalar_select %p81, %s82, %s83
    %p87 = pneg %p81
    %p88 = scmp.eq.s32.totalorder %s11, 1
    %p89 = por %p87, %p88
    %p90 = scmp.ne.s32.totalorder %s82, %s85
    %p91 = scmp.eq.s32.totalorder %s11, 0
    %p92 = por %p90, %p91
    %p93 = scmp.ne.s32.totalorder %s82, %s85
    %p94 = scmp.eq.s32.totalorder %s16, 1
    %p95 = por %p93, %p94
    %p96 = scmp.ne.s32.totalorder %s85, %s86
    %p97 = scmp.eq.s32.totalorder %s16, 0
    %p98 = por %p96, %p97
    %p99 = scmp.ne.s32.totalorder %s85, %s86
    %p100 = scmp.eq.s32.totalorder %s17, 1
    %p101 = por %p99, %p100
    %p103 = scmp.ne.s32.totalorder %s86, %s102
    %p104 = scmp.eq.s32.totalorder %s17, 0
    %p105 = por %p103, %p104
    %s106 = ssub.s32 %s18, %s30
    %s107 = ssub.s32 %s19, %s26
    %s108 = sor.u32 %s106, %s107
    %p109 = scmp.eq.s32.totalorder %s108, 0
    %s111 = sadd.s32 %s110, 1
    %s112 = scalar_select %p109, %s110, %s111
    %p115 = pneg %p109
    %p116 = scmp.eq.s32.totalorder %s11, 1
    %p117 = por %p115, %p116
    %p118 = scmp.ne.s32.totalorder %s110, %s113
    %p119 = scmp.eq.s32.totalorder %s11, 0
    %p120 = por %p118, %p119
    %p121 = scmp.ne.s32.totalorder %s110, %s113
    %p122 = scmp.eq.s32.totalorder %s16, 1
    %p123 = por %p121, %p122
    %p124 = scmp.ne.s32.totalorder %s113, %s114
    %p125 = scmp.eq.s32.totalorder %s16, 0
    %p126 = por %p124, %p125
    %p127 = scmp.ne.s32.totalorder %s113, %s114
    %p128 = scmp.eq.s32.totalorder %s17, 1
    %p129 = por %p127, %p128
    %p131 = scmp.ne.s32.totalorder %s114, %s130
    %p132 = scmp.eq.s32.totalorder %s17, 0
    %p133 = por %p131, %p132
    %s134 = ssub.s32 %s18, %s30
    %s135 = ssub.s32 %s19, %s26
    %s136 = sor.u32 %s134, %s135
    %p137 = scmp.eq.s32.totalorder %s136, 0
    %s139 = sadd.s32 %s138, 1
    %s140 = scalar_select %p137, %s138, %s139
    %p143 = pneg %p137
    %p144 = scmp.eq.s32.totalorder %s11, 1
    %p145 = por %p143, %p144
    %p146 = scmp.ne.s32.totalorder %s138, %s141
    %p147 = scmp.eq.s32.totalorder %s11, 0
    %p148 = por %p146, %p147
    %p149 = scmp.ne.s32.totalorder %s138, %s141
    %p150 = scmp.eq.s32.totalorder %s16, 1
    %p151 = por %p149, %p150
    %p152 = scmp.ne.s32.totalorder %s141, %s142
    %p153 = scmp.eq.s32.totalorder %s16, 0
    %p154 = por %p152, %p153
    %p155 = scmp.ne.s32.totalorder %s141, %s142
    %p156 = scmp.eq.s32.totalorder %s17, 1
    %p157 = por %p155, %p156
    %p159 = scmp.ne.s32.totalorder %s142, %s158
    %p160 = scmp.eq.s32.totalorder %s17, 0
    %p161 = por %p159, %p160
    %p162 = scmp.le.s32.totalorder 1, %s11
    %p163 = scmp.lt.s32.totalorder %s11, 3
    %p164 = pnand %p162, %p163
    %p165 = pneg %p164
    // Predicated region
    $region9: #{residual_block_forward_nhwc.3} parent=5 // pred_check
      _
    $region10: #{residual_block_forward_nhwc.3} parent=5 // pred_check_branch
      %167 = sbr.rel (%p164) target = $region12
    $region11: #{residual_block_forward_nhwc.3} parent=5 // pred_region
      %s168 = ssub.s32 %s11, 1
      // Predicated region
      $region13: #{residual_block_forward_nhwc.3} parent=11 // pred_check
        %p169 = pneg %p70
      $region14: #{residual_block_forward_nhwc.3} parent=11 // pred_check_branch
        %171 = sbr.rel (%p169) target = $region16
      $region15: #{residual_block_forward_nhwc.3} parent=11 // pred_region
        _
      $region16: #{residual_block_forward_nhwc.3} parent=11 // pred_fallthru
        _
    $region12: #{residual_block_forward_nhwc.3} parent=5 // pred_fallthru
      _
    %p172 = scmp.lt.s32.totalorder %s11, 2
    // Predicated region
    $region17: #{residual_block_forward_nhwc.3} parent=5 // pred_check
      %p173 = pneg %p172
    $region18: #{residual_block_forward_nhwc.3} parent=5 // pred_check_branch
      %175 = sbr.rel (%p173) target = $region20
    $region19: #{residual_block_forward_nhwc.3} parent=5 // pred_region
      // Predicated region
      $region21: #{residual_block_forward_nhwc.3} parent=19 // pred_check
        %p176 = pneg %p43
      $region22: #{residual_block_forward_nhwc.3} parent=19 // pred_check_branch
        %178 = sbr.rel (%p176) target = $region24
      $region23: #{residual_block_forward_nhwc.3} parent=19 // pred_region
        %p179 = scmp.lt.s32.totalorder %s18, 1
        %s180 = scalar_select %p179, %s18, 1
        %s181 = smul.addr %s180, 32
        %s182 = smul.addr %s181, 8
        %s183 = scalar_lea.vmem %s0, %s182
      $region24: #{residual_block_forward_nhwc.3} parent=19 // pred_fallthru
        _
    $region20: #{residual_block_forward_nhwc.3} parent=5 // pred_fallthru
      _
    %p184 = scmp.le.s32.totalorder 1, %s11
    %p185 = scmp.lt.s32.totalorder %s11, 3
    %p186 = pnand %p184, %p185
    %p187 = pneg %p186
    // Predicated region
    $region25: #{residual_block_forward_nhwc.3} parent=5 // pred_check
      _
    $region26: #{residual_block_forward_nhwc.3} parent=5 // pred_check_branch
      %189 = sbr.rel (%p186) target = $region28
    $region27: #{residual_block_forward_nhwc.3} parent=5 // pred_region
      %s190 = ssub.s32 %s11, 1
      %p191 = scmp.lt.s32.totalorder %s20, 1
      %s192 = scalar_select %p191, %s20, 1
      %s193 = smul.addr %s192, 32
      %s194 = smul.addr %s193, 8
      %s195 = scalar_lea.vmem %s0, %s194
      %p196 = pneg %p49
      %p197 = pneg %p46
      %p198 = pneg %p70
      %p199 = pneg %p67
      %p200 = pneg %p98
      %p201 = pneg %p95
      %s202 = smul.u32 16, %s21
      %p203 = scmp.lt.s32.totalorder %s20, 1
      %s204 = scalar_select %p203, %s20, 1
      %p205 = scmp.lt.s32.totalorder %s202, 15
      %s206 = scalar_select %p205, %s202, 15
      %s207 = smul.addr %s206, 2
      %s208 = smul.addr %s204, 32
      %s209 = sadd.s32 %s207, %s208
      %s210 = smul.addr %s209, 8
      %s211 = scalar_lea.vmem %s2, %s210
      %p212 = pneg %p126
      %p213 = pneg %p123
      %p214 = scmp.lt.s32.totalorder %s20, 1
      %s215 = scalar_select %p214, %s20, 1
      %p216 = scmp.lt.s32.totalorder %s21, 0
      %s217 = scalar_select %p216, %s21, 0
      %s218 = sadd.s32 %s217, %s215
      %s219 = scalar_lea.vmem %s3, %s218
      %p220 = pneg %p154
      %p221 = pneg %p151
      %p222 = scmp.lt.s32.totalorder %s20, 1
      %s223 = scalar_select %p222, %s20, 1
      %p224 = scmp.lt.s32.totalorder %s21, 0
      %s225 = scalar_select %p224, %s21, 0
      %s226 = sadd.s32 %s225, %s223
      %s227 = scalar_lea.vmem %s4, %s226
      %p228 = scmp.lt.s32.totalorder %s20, 1
      %s229 = scalar_select %p228, %s20, 1
      %s230 = smul.addr %s229, 32
      %s231 = smul.addr %s230, 8
      %s232 = scalar_lea.vmem %s0, %s231
      %s233 = smul.u32 16, %s21
      %p234 = scmp.lt.s32.totalorder %s20, 1
      %s235 = scalar_select %p234, %s20, 1
      %p236 = scmp.lt.s32.totalorder %s233, 15
      %s237 = scalar_select %p236, %s233, 15
      %s238 = smul.addr %s237, 2
      %s239 = smul.addr %s235, 32
      %s240 = sadd.s32 %s238, %s239
      %s241 = smul.addr %s240, 8
      %s242 = scalar_lea.vmem %s2, %s241
      %s243 = smul.u32 16, %s21
      %p244 = scmp.lt.s32.totalorder %s20, 1
      %s245 = scalar_select %p244, %s20, 1
      %p246 = scmp.lt.s32.totalorder %s21, 0
      %s247 = scalar_select %p246, %s21, 0
      %s248 = sadd.s32 %s247, %s245
      %s249 = scalar_lea.vmem %s3, %s248
      %p250 = scmp.lt.s32.totalorder %s20, 1
      %s251 = scalar_select %p250, %s20, 1
      %p252 = scmp.lt.s32.totalorder %s21, 0
      %s253 = scalar_select %p252, %s21, 0
      %s254 = sadd.s32 %s253, %s251
      %s255 = scalar_lea.vmem %s4, %s254
      %s257 = smul.u32 %s21, 16
      %vm258 = vcmask 24576
      %vm259 = vsmask.f32 256
      %vm260 = vmand %vm258, %vm259
      %v261 = vld [vmem:[#allocation2] sm:$0x1]
      %v262 = vsel %vm260, 0, %v261
      %263 = vst [vmem:[#allocation2] sm:$0x1] %v262
      %v264 = vld [vmem:[#allocation2 + $0x8] sm:$0x1]
      %v265 = vsel %vm260, 0, %v264
      %266 = vst [vmem:[#allocation2 + $0x8] sm:$0x1] %v265
      %v267 = vld [vmem:[#allocation2 + $0x10] sm:$0x1]
      %v268 = vsel %vm260, 0, %v267
      %269 = vst [vmem:[#allocation2 + $0x10] sm:$0x1] %v268
      %v270 = vld [vmem:[#allocation2 + $0x18] sm:$0x1]
      %v271 = vsel %vm260, 0, %v270
      %272 = vst [vmem:[#allocation2 + $0x18] sm:$0x1] %v271
      %v273 = vld [vmem:[#allocation2 + $0x20] sm:$0x1]
      %v274 = vsel %vm260, 0, %v273
      %275 = vst [vmem:[#allocation2 + $0x20] sm:$0x1] %v274
      %v276 = vld [vmem:[#allocation2 + $0x28] sm:$0x1]
      %v277 = vsel %vm260, 0, %v276
      %278 = vst [vmem:[#allocation2 + $0x28] sm:$0x1] %v277
      %v279 = vld [vmem:[#allocation2 + $0x30] sm:$0x1]
      %v280 = vsel %vm260, 0, %v279
      %281 = vst [vmem:[#allocation2 + $0x30] sm:$0x1] %v280
      %v282 = vld [vmem:[#allocation2 + $0x38] sm:$0x1]
      %v283 = vsel %vm260, 0, %v282
      %284 = vst [vmem:[#allocation2 + $0x38] sm:$0x1] %v283
      %v285 = vld [vmem:[#allocation2 + $0x40] sm:$0x1]
      %v286 = vsel %vm260, 0, %v285
      %287 = vst [vmem:[#allocation2 + $0x40] sm:$0x1] %v286
      %v288 = vld [vmem:[#allocation2 + $0x48] sm:$0x1]
      %v289 = vsel %vm260, 0, %v288
      %290 = vst [vmem:[#allocation2 + $0x48] sm:$0x1] %v289
      %v291 = vld [vmem:[#allocation2 + $0x50] sm:$0x1]
      %v292 = vsel %vm260, 0, %v291
      %293 = vst [vmem:[#allocation2 + $0x50] sm:$0x1] %v292
      %v294 = vld [vmem:[#allocation2 + $0x58] sm:$0x1]
      %v295 = vsel %vm260, 0, %v294
      %296 = vst [vmem:[#allocation2 + $0x58] sm:$0x1] %v295
      %v297 = vld [vmem:[#allocation2 + $0x60] sm:$0x1]
      %v298 = vsel %vm260, 0, %v297
      %299 = vst [vmem:[#allocation2 + $0x60] sm:$0x1] %v298
      %v300 = vld [vmem:[#allocation2 + $0x68] sm:$0x1]
      %v301 = vsel %vm260, 0, %v300
      %302 = vst [vmem:[#allocation2 + $0x68] sm:$0x1] %v301
      %v303 = vld [vmem:[#allocation2 + $0x70] sm:$0x1]
      %v304 = vsel %vm260, 0, %v303
      %305 = vst [vmem:[#allocation2 + $0x70] sm:$0x1] %v304
      %v306 = vld [vmem:[#allocation2 + $0x78] sm:$0x1]
      %v307 = vsel %vm260, 0, %v306
      %308 = vst [vmem:[#allocation2 + $0x78] sm:$0x1] %v307
      %v309 = vld [vmem:[#allocation2 + $0x80] sm:$0x1]
      %v310 = vsel %vm260, 0, %v309
      %311 = vst [vmem:[#allocation2 + $0x80] sm:$0x1] %v310
      %v312 = vld [vmem:[#allocation2 + $0x88] sm:$0x1]
      %v313 = vsel %vm260, 0, %v312
      %314 = vst [vmem:[#allocation2 + $0x88] sm:$0x1] %v313
      %vm315 = vcmask 93251
      %vm316 = vsmask.f32 7950
      %vm317 = vmand %vm315, %vm316
      %v318 = vld [vmem:[#allocation2 + $0x4] sm:$0x8]
      %v319 = vsel %vm317, 0, %v318
      %320 = vst [vmem:[#allocation2 + $0x4] sm:$0x8] %v319
      %v321 = vld [vmem:[#allocation2 + $0xc] sm:$0x8]
      %v322 = vsel %vm317, 0, %v321
      %323 = vst [vmem:[#allocation2 + $0xc] sm:$0x8] %v322
      %v324 = vld [vmem:[#allocation2 + $0x14] sm:$0x8]
      %v325 = vsel %vm317, 0, %v324
      %326 = vst [vmem:[#allocation2 + $0x14] sm:$0x8] %v325
      %v327 = vld [vmem:[#allocation2 + $0x1c] sm:$0x8]
      %v328 = vsel %vm317, 0, %v327
      %329 = vst [vmem:[#allocation2 + $0x1c] sm:$0x8] %v328
      %v330 = vld [vmem:[#allocation2 + $0x24] sm:$0x8]
      %v331 = vsel %vm317, 0, %v330
      %332 = vst [vmem:[#allocation2 + $0x24] sm:$0x8] %v331
      %v333 = vld [vmem:[#allocation2 + $0x2c] sm:$0x8]
      %v334 = vsel %vm317, 0, %v333
      %335 = vst [vmem:[#allocation2 + $0x2c] sm:$0x8] %v334
      %v336 = vld [vmem:[#allocation2 + $0x34] sm:$0x8]
      %v337 = vsel %vm317, 0, %v336
      %338 = vst [vmem:[#allocation2 + $0x34] sm:$0x8] %v337
      %v339 = vld [vmem:[#allocation2 + $0x3c] sm:$0x8]
      %v340 = vsel %vm317, 0, %v339
      %341 = vst [vmem:[#allocation2 + $0x3c] sm:$0x8] %v340
      %v342 = vld [vmem:[#allocation2 + $0x44] sm:$0x8]
      %v343 = vsel %vm317, 0, %v342
      %344 = vst [vmem:[#allocation2 + $0x44] sm:$0x8] %v343
      %v345 = vld [vmem:[#allocation2 + $0x4c] sm:$0x8]
      %v346 = vsel %vm317, 0, %v345
      %347 = vst [vmem:[#allocation2 + $0x4c] sm:$0x8] %v346
      %v348 = vld [vmem:[#allocation2 + $0x54] sm:$0x8]
      %v349 = vsel %vm317, 0, %v348
      %350 = vst [vmem:[#allocation2 + $0x54] sm:$0x8] %v349
      %v351 = vld [vmem:[#allocation2 + $0x5c] sm:$0x8]
      %v352 = vsel %vm317, 0, %v351
      %353 = vst [vmem:[#allocation2 + $0x5c] sm:$0x8] %v352
      %v354 = vld [vmem:[#allocation2 + $0x64] sm:$0x8]
      %v355 = vsel %vm317, 0, %v354
      %356 = vst [vmem:[#allocation2 + $0x64] sm:$0x8] %v355
      %v357 = vld [vmem:[#allocation2 + $0x6c] sm:$0x8]
      %v358 = vsel %vm317, 0, %v357
      %359 = vst [vmem:[#allocation2 + $0x6c] sm:$0x8] %v358
      %v360 = vld [vmem:[#allocation2 + $0x74] sm:$0x8]
      %v361 = vsel %vm317, 0, %v360
      %362 = vst [vmem:[#allocation2 + $0x74] sm:$0x8] %v361
      %v363 = vld [vmem:[#allocation2 + $0x7c] sm:$0x8]
      %v364 = vsel %vm317, 0, %v363
      %365 = vst [vmem:[#allocation2 + $0x7c] sm:$0x8] %v364
      %v366 = vld [vmem:[#allocation2 + $0x84] sm:$0x8]
      %v367 = vsel %vm317, 0, %v366
      %368 = vst [vmem:[#allocation2 + $0x84] sm:$0x8] %v367
      %v369 = vld [vmem:[#allocation2 + $0x8c] sm:$0x8]
      %v370 = vsel %vm317, 0, %v369
      %371 = vst [vmem:[#allocation2 + $0x8c] sm:$0x8] %v370
      %s372 = smul.u32 %s257, 16
      %s373 = scalar_lea.vmem %s232, %s372
      %v374 = vld [vmem:[%s373] sm:$0xff]
      %v375 = vld [vmem:[%s373 + $0x8] sm:$0xff]
      %v376 = vld [vmem:[%s373 + $0x10] sm:$0xff]
      %v377 = vld [vmem:[%s373 + $0x18] sm:$0xff]
      %v378 = vld [vmem:[%s373 + $0x20] sm:$0xff]
      %v379 = vld [vmem:[%s373 + $0x28] sm:$0xff]
      %v380 = vld [vmem:[%s373 + $0x30] sm:$0xff]
      %v381 = vld [vmem:[%s373 + $0x38] sm:$0xff]
      %v382 = vld [vmem:[%s373 + $0x40] sm:$0xff]
      %v383 = vld [vmem:[%s373 + $0x48] sm:$0xff]
      %v384 = vld [vmem:[%s373 + $0x50] sm:$0xff]
      %v385 = vld [vmem:[%s373 + $0x58] sm:$0xff]
      %v386 = vld [vmem:[%s373 + $0x60] sm:$0xff]
      %v387 = vld [vmem:[%s373 + $0x68] sm:$0xff]
      %v388 = vld [vmem:[%s373 + $0x70] sm:$0xff]
      %v389 = vld [vmem:[%s373 + $0x78] sm:$0xff]
      %v390 = vld [vmem:[%s373 + $0x80] sm:$0xff]
      %v391 = vld [vmem:[%s373 + $0x88] sm:$0xff]
      %v392 = vld [vmem:[%s373 + $0x90] sm:$0xff]
      %v393 = vld [vmem:[%s373 + $0x98] sm:$0xff]
      %v394 = vld [vmem:[%s373 + $0xa0] sm:$0xff]
      %v395 = vld [vmem:[%s373 + $0xa8] sm:$0xff]
      %v396 = vld [vmem:[%s373 + $0xb0] sm:$0xff]
      %v397 = vld [vmem:[%s373 + $0xb8] sm:$0xff]
      %v398 = vld [vmem:[%s373 + $0xc0] sm:$0xff]
      %v399 = vld [vmem:[%s373 + $0xc8] sm:$0xff]
      %v400 = vld [vmem:[%s373 + $0xd0] sm:$0xff]
      %v401 = vld [vmem:[%s373 + $0xd8] sm:$0xff]
      %v402 = vld [vmem:[%s373 + $0xe0] sm:$0xff]
      %v403 = vld [vmem:[%s373 + $0xe8] sm:$0xff]
      %v404 = vld [vmem:[%s373 + $0xf0] sm:$0xff]
      %v405 = vld [vmem:[%s373 + $0xf8] sm:$0xff]
      %v406 = vpack.c.bf16 %v374, %v374
      %v407 = vpack.c.bf16 %v375, %v375
      %v408 = vpack.c.bf16 %v376, %v376
      %v409 = vpack.c.bf16 %v377, %v377
      %v410 = vpack.c.bf16 %v378, %v378
      %v411 = vpack.c.bf16 %v379, %v379
      %v412 = vpack.c.bf16 %v380, %v380
      %v413 = vpack.c.bf16 %v381, %v381
      %v414 = vpack.c.bf16 %v382, %v382
      %v415 = vpack.c.bf16 %v383, %v383
      %v416 = vpack.c.bf16 %v384, %v384
      %v417 = vpack.c.bf16 %v385, %v385
      %v418 = vpack.c.bf16 %v386, %v386
      %v419 = vpack.c.bf16 %v387, %v387
      %v420 = vpack.c.bf16 %v388, %v388
      %v421 = vpack.c.bf16 %v389, %v389
      %v422 = vpack.c.bf16 %v390, %v390
      %v423 = vpack.c.bf16 %v391, %v391
      %v424 = vpack.c.bf16 %v392, %v392
      %v425 = vpack.c.bf16 %v393, %v393
      %v426 = vpack.c.bf16 %v394, %v394
      %v427 = vpack.c.bf16 %v395, %v395
      %v428 = vpack.c.bf16 %v396, %v396
      %v429 = vpack.c.bf16 %v397, %v397
      %v430 = vpack.c.bf16 %v398, %v398
      %v431 = vpack.c.bf16 %v399, %v399
      %v432 = vpack.c.bf16 %v400, %v400
      %v433 = vpack.c.bf16 %v401, %v401
      %v434 = vpack.c.bf16 %v402, %v402
      %v435 = vpack.c.bf16 %v403, %v403
      %v436 = vpack.c.bf16 %v404, %v404
      %v437 = vpack.c.bf16 %v405, %v405
      %vm438 = vsmask.f32 4368
      %vm439 = vmor %vm259, %vm438
      %v441 = vshrl.u32 %v406, 16
      %v443 = vrot.slane %v441, 7
      %v444 = vshll.u32 %v406, 16
      %v446 = vor.u32 %v443, %v444
      %v447 = vrot.slane %v443, 4
      %v449 = vshrl.u32 %v407, 16
      %v451 = vrot.slane %v449, 7
      %v452 = vshll.u32 %v407, 16
      %v454 = vor.u32 %v451, %v452
      %v455 = vsel %vm439, %v447, %v454
      %v457 = vshrl.u32 %v408, 16
      %v459 = vrot.slane %v457, 7
      %v460 = vshll.u32 %v408, 16
      %v462 = vor.u32 %v459, %v460
      %v463 = vrot.slane %v459, 4
      %v465 = vshrl.u32 %v409, 16
      %v467 = vrot.slane %v465, 7
      %v468 = vshll.u32 %v409, 16
      %v470 = vor.u32 %v467, %v468
      %v471 = vsel %vm439, %v463, %v470
      %v473 = vshrl.u32 %v410, 16
      %v475 = vrot.slane %v473, 7
      %v476 = vshll.u32 %v410, 16
      %v478 = vor.u32 %v475, %v476
      %v479 = vrot.slane %v475, 4
      %v481 = vshrl.u32 %v411, 16
      %v483 = vrot.slane %v481, 7
      %v484 = vshll.u32 %v411, 16
      %v486 = vor.u32 %v483, %v484
      %v487 = vsel %vm439, %v479, %v486
      %v489 = vshrl.u32 %v412, 16
      %v491 = vrot.slane %v489, 7
      %v492 = vshll.u32 %v412, 16
      %v494 = vor.u32 %v491, %v492
      %v495 = vrot.slane %v491, 4
      %v497 = vshrl.u32 %v413, 16
      %v499 = vrot.slane %v497, 7
      %v500 = vshll.u32 %v413, 16
      %v502 = vor.u32 %v499, %v500
      %v503 = vsel %vm439, %v495, %v502
      %v505 = vshrl.u32 %v414, 16
      %v507 = vrot.slane %v505, 7
      %v508 = vshll.u32 %v414, 16
      %v510 = vor.u32 %v507, %v508
      %v511 = vrot.slane %v507, 4
      %v513 = vshrl.u32 %v415, 16
      %v515 = vrot.slane %v513, 7
      %v516 = vshll.u32 %v415, 16
      %v518 = vor.u32 %v515, %v516
      %v519 = vsel %vm439, %v511, %v518
      %v521 = vshrl.u32 %v416, 16
      %v523 = vrot.slane %v521, 7
      %v524 = vshll.u32 %v416, 16
      %v526 = vor.u32 %v523, %v524
      %v527 = vrot.slane %v523, 4
      %v529 = vshrl.u32 %v417, 16
      %v531 = vrot.slane %v529, 7
      %v532 = vshll.u32 %v417, 16
      %v534 = vor.u32 %v531, %v532
      %v535 = vsel %vm439, %v527, %v534
      %v537 = vshrl.u32 %v418, 16
      %v539 = vrot.slane %v537, 7
      %v540 = vshll.u32 %v418, 16
      %v542 = vor.u32 %v539, %v540
      %v543 = vrot.slane %v539, 4
      %v545 = vshrl.u32 %v419, 16
      %v547 = vrot.slane %v545, 7
      %v548 = vshll.u32 %v419, 16
      %v550 = vor.u32 %v547, %v548
      %v551 = vsel %vm439, %v543, %v550
      %v553 = vshrl.u32 %v420, 16
      %v555 = vrot.slane %v553, 7
      %v556 = vshll.u32 %v420, 16
      %v558 = vor.u32 %v555, %v556
      %v559 = vrot.slane %v555, 4
      %v561 = vshrl.u32 %v421, 16
      %v563 = vrot.slane %v561, 7
      %v564 = vshll.u32 %v421, 16
      %v566 = vor.u32 %v563, %v564
      %v567 = vsel %vm439, %v559, %v566
      %v569 = vshrl.u32 %v422, 16
      %v571 = vrot.slane %v569, 7
      %v572 = vshll.u32 %v422, 16
      %v574 = vor.u32 %v571, %v572
      %v575 = vrot.slane %v571, 4
      %v577 = vshrl.u32 %v423, 16
      %v579 = vrot.slane %v577, 7
      %v580 = vshll.u32 %v423, 16
      %v582 = vor.u32 %v579, %v580
      %v583 = vsel %vm439, %v575, %v582
      %v585 = vshrl.u32 %v424, 16
      %v587 = vrot.slane %v585, 7
      %v588 = vshll.u32 %v424, 16
      %v590 = vor.u32 %v587, %v588
      %v591 = vrot.slane %v587, 4
      %v593 = vshrl.u32 %v425, 16
      %v595 = vrot.slane %v593, 7
      %v596 = vshll.u32 %v425, 16
      %v598 = vor.u32 %v595, %v596
      %v599 = vsel %vm439, %v591, %v598
      %v601 = vshrl.u32 %v426, 16
      %v603 = vrot.slane %v601, 7
      %v604 = vshll.u32 %v426, 16
      %v606 = vor.u32 %v603, %v604
      %v607 = vrot.slane %v603, 4
      %v609 = vshrl.u32 %v427, 16
      %v611 = vrot.slane %v609, 7
      %v612 = vshll.u32 %v427, 16
      %v614 = vor.u32 %v611, %v612
      %v615 = vsel %vm439, %v607, %v614
      %v617 = vshrl.u32 %v428, 16
      %v619 = vrot.slane %v617, 7
      %v620 = vshll.u32 %v428, 16
      %v622 = vor.u32 %v619, %v620
      %v623 = vrot.slane %v619, 4
      %v625 = vshrl.u32 %v429, 16
      %v627 = vrot.slane %v625, 7
      %v628 = vshll.u32 %v429, 16
      %v630 = vor.u32 %v627, %v628
      %v631 = vsel %vm439, %v623, %v630
      %v633 = vshrl.u32 %v430, 16
      %v635 = vrot.slane %v633, 7
      %v636 = vshll.u32 %v430, 16
      %v638 = vor.u32 %v635, %v636
      %v639 = vrot.slane %v635, 4
      %v641 = vshrl.u32 %v431, 16
      %v643 = vrot.slane %v641, 7
      %v644 = vshll.u32 %v431, 16
      %v646 = vor.u32 %v643, %v644
      %v647 = vsel %vm439, %v639, %v646
      %v649 = vshrl.u32 %v432, 16
      %v651 = vrot.slane %v649, 7
      %v652 = vshll.u32 %v432, 16
      %v654 = vor.u32 %v651, %v652
      %v655 = vrot.slane %v651, 4
      %v657 = vshrl.u32 %v433, 16
      %v659 = vrot.slane %v657, 7
      %v660 = vshll.u32 %v433, 16
      %v662 = vor.u32 %v659, %v660
      %v663 = vsel %vm439, %v655, %v662
      %v665 = vshrl.u32 %v434, 16
      %v667 = vrot.slane %v665, 7
      %v668 = vshll.u32 %v434, 16
      %v670 = vor.u32 %v667, %v668
      %v671 = vrot.slane %v667, 4
      %v673 = vshrl.u32 %v435, 16
      %v675 = vrot.slane %v673, 7
      %v676 = vshll.u32 %v435, 16
      %v678 = vor.u32 %v675, %v676
      %v679 = vsel %vm439, %v671, %v678
      %v681 = vshrl.u32 %v436, 16
      %v683 = vrot.slane %v681, 7
      %v684 = vshll.u32 %v436, 16
      %v686 = vor.u32 %v683, %v684
      %v687 = vrot.slane %v683, 4
      %v689 = vshrl.u32 %v437, 16
      %v691 = vrot.slane %v689, 7
      %v692 = vshll.u32 %v437, 16
      %v694 = vor.u32 %v691, %v692
      %v695 = vsel %vm439, %v687, %v694
      %s728 = scalar_lea.vmem [#allocation2], 8
      %vm729 = vcmask 27648
      %vm730 = vsmask.f32 7938
      %vm731 = vmand %vm729, %vm730
      %v732 = vld [vmem:[%s728] sm:$0xf]
      %v733 = vsel %vm731, %v446, %v732
      %734 = vst [vmem:[%s728] sm:$0xf] %v733
      %vm735 = vcmask 27648
      %736 = vst.msk [vmem:[%s728 + $0x4] sm:$0xf] %vm735, %v455
      %v737 = vld [vmem:[%s728 + $0x8] sm:$0xf]
      %v738 = vsel %vm731, %v462, %v737
      %739 = vst [vmem:[%s728 + $0x8] sm:$0xf] %v738
      %740 = vst.msk [vmem:[%s728 + $0xc] sm:$0xf] %vm735, %v471
      %v741 = vld [vmem:[%s728 + $0x10] sm:$0xf]
      %v742 = vsel %vm731, %v478, %v741
      %743 = vst [vmem:[%s728 + $0x10] sm:$0xf] %v742
      %744 = vst.msk [vmem:[%s728 + $0x14] sm:$0xf] %vm735, %v487
      %v745 = vld [vmem:[%s728 + $0x18] sm:$0xf]
      %v746 = vsel %vm731, %v494, %v745
      %747 = vst [vmem:[%s728 + $0x18] sm:$0xf] %v746
      %748 = vst.msk [vmem:[%s728 + $0x1c] sm:$0xf] %vm735, %v503
      %v749 = vld [vmem:[%s728 + $0x20] sm:$0xf]
      %v750 = vsel %vm731, %v510, %v749
      %751 = vst [vmem:[%s728 + $0x20] sm:$0xf] %v750
      %752 = vst.msk [vmem:[%s728 + $0x24] sm:$0xf] %vm735, %v519
      %v753 = vld [vmem:[%s728 + $0x28] sm:$0xf]
      %v754 = vsel %vm731, %v526, %v753
      %755 = vst [vmem:[%s728 + $0x28] sm:$0xf] %v754
      %756 = vst.msk [vmem:[%s728 + $0x2c] sm:$0xf] %vm735, %v535
      %v757 = vld [vmem:[%s728 + $0x30] sm:$0xf]
      %v758 = vsel %vm731, %v542, %v757
      %759 = vst [vmem:[%s728 + $0x30] sm:$0xf] %v758
      %760 = vst.msk [vmem:[%s728 + $0x34] sm:$0xf] %vm735, %v551
      %v761 = vld [vmem:[%s728 + $0x38] sm:$0xf]
      %v762 = vsel %vm731, %v558, %v761
      %763 = vst [vmem:[%s728 + $0x38] sm:$0xf] %v762
      %764 = vst.msk [vmem:[%s728 + $0x3c] sm:$0xf] %vm735, %v567
      %v765 = vld [vmem:[%s728 + $0x40] sm:$0xf]
      %v766 = vsel %vm731, %v574, %v765
      %767 = vst [vmem:[%s728 + $0x40] sm:$0xf] %v766
      %768 = vst.msk [vmem:[%s728 + $0x44] sm:$0xf] %vm735, %v583
      %v769 = vld [vmem:[%s728 + $0x48] sm:$0xf]
      %v770 = vsel %vm731, %v590, %v769
      %771 = vst [vmem:[%s728 + $0x48] sm:$0xf] %v770
      %772 = vst.msk [vmem:[%s728 + $0x4c] sm:$0xf] %vm735, %v599
      %v773 = vld [vmem:[%s728 + $0x50] sm:$0xf]
      %v774 = vsel %vm731, %v606, %v773
      %775 = vst [vmem:[%s728 + $0x50] sm:$0xf] %v774
      %776 = vst.msk [vmem:[%s728 + $0x54] sm:$0xf] %vm735, %v615
      %v777 = vld [vmem:[%s728 + $0x58] sm:$0xf]
      %v778 = vsel %vm731, %v622, %v777
      %779 = vst [vmem:[%s728 + $0x58] sm:$0xf] %v778
      %780 = vst.msk [vmem:[%s728 + $0x5c] sm:$0xf] %vm735, %v631
      %v781 = vld [vmem:[%s728 + $0x60] sm:$0xf]
      %v782 = vsel %vm731, %v638, %v781
      %783 = vst [vmem:[%s728 + $0x60] sm:$0xf] %v782
      %784 = vst.msk [vmem:[%s728 + $0x64] sm:$0xf] %vm735, %v647
      %v785 = vld [vmem:[%s728 + $0x68] sm:$0xf]
      %v786 = vsel %vm731, %v654, %v785
      %787 = vst [vmem:[%s728 + $0x68] sm:$0xf] %v786
      %788 = vst.msk [vmem:[%s728 + $0x6c] sm:$0xf] %vm735, %v663
      %v789 = vld [vmem:[%s728 + $0x70] sm:$0xf]
      %v790 = vsel %vm731, %v670, %v789
      %791 = vst [vmem:[%s728 + $0x70] sm:$0xf] %v790
      %792 = vst.msk [vmem:[%s728 + $0x74] sm:$0xf] %vm735, %v679
      %v793 = vld [vmem:[%s728 + $0x78] sm:$0xf]
      %v794 = vsel %vm731, %v686, %v793
      %795 = vst [vmem:[%s728 + $0x78] sm:$0xf] %v794
      %796 = vst.msk [vmem:[%s728 + $0x7c] sm:$0xf] %vm735, %v695
      %829 = vrot.lane.b32.xlu0 %v406, 4
      %v830 = vpop.permute.xlu0 %829
      %831 = vrot.lane.b32.xlu0 %v407, 4
      %v832 = vpop.permute.xlu0 %831
      %833 = vrot.lane.b32.xlu0 %v408, 4
      %v834 = vpop.permute.xlu0 %833
      %835 = vrot.lane.b32.xlu0 %v409, 4
      %v836 = vpop.permute.xlu0 %835
      %837 = vrot.lane.b32.xlu0 %v410, 4
      %v838 = vpop.permute.xlu0 %837
      %839 = vrot.lane.b32.xlu0 %v411, 4
      %v840 = vpop.permute.xlu0 %839
      %841 = vrot.lane.b32.xlu0 %v412, 4
      %v842 = vpop.permute.xlu0 %841
      %843 = vrot.lane.b32.xlu0 %v413, 4
      %v844 = vpop.permute.xlu0 %843
      %845 = vrot.lane.b32.xlu0 %v414, 4
      %v846 = vpop.permute.xlu0 %845
      %847 = vrot.lane.b32.xlu0 %v415, 4
      %v848 = vpop.permute.xlu0 %847
      %849 = vrot.lane.b32.xlu0 %v416, 4
      %v850 = vpop.permute.xlu0 %849
      %851 = vrot.lane.b32.xlu0 %v417, 4
      %v852 = vpop.permute.xlu0 %851
      %853 = vrot.lane.b32.xlu0 %v418, 4
      %v854 = vpop.permute.xlu0 %853
      %855 = vrot.lane.b32.xlu0 %v419, 4
      %v856 = vpop.permute.xlu0 %855
      %857 = vrot.lane.b32.xlu0 %v420, 4
      %v858 = vpop.permute.xlu0 %857
      %859 = vrot.lane.b32.xlu0 %v421, 4
      %v860 = vpop.permute.xlu0 %859
      %861 = vrot.lane.b32.xlu0 %v422, 4
      %v862 = vpop.permute.xlu0 %861
      %863 = vrot.lane.b32.xlu0 %v423, 4
      %v864 = vpop.permute.xlu0 %863
      %865 = vrot.lane.b32.xlu0 %v424, 4
      %v866 = vpop.permute.xlu0 %865
      %867 = vrot.lane.b32.xlu0 %v425, 4
      %v868 = vpop.permute.xlu0 %867
      %869 = vrot.lane.b32.xlu0 %v426, 4
      %v870 = vpop.permute.xlu0 %869
      %871 = vrot.lane.b32.xlu0 %v427, 4
      %v872 = vpop.permute.xlu0 %871
      %873 = vrot.lane.b32.xlu0 %v428, 4
      %v874 = vpop.permute.xlu0 %873
      %875 = vrot.lane.b32.xlu0 %v429, 4
      %v876 = vpop.permute.xlu0 %875
      %877 = vrot.lane.b32.xlu0 %v430, 4
      %v878 = vpop.permute.xlu0 %877
      %879 = vrot.lane.b32.xlu0 %v431, 4
      %v880 = vpop.permute.xlu0 %879
      %881 = vrot.lane.b32.xlu0 %v432, 4
      %v882 = vpop.permute.xlu0 %881
      %883 = vrot.lane.b32.xlu0 %v433, 4
      %v884 = vpop.permute.xlu0 %883
      %885 = vrot.lane.b32.xlu0 %v434, 4
      %v886 = vpop.permute.xlu0 %885
      %887 = vrot.lane.b32.xlu0 %v435, 4
      %v888 = vpop.permute.xlu0 %887
      %889 = vrot.lane.b32.xlu0 %v436, 4
      %v890 = vpop.permute.xlu0 %889
      %891 = vrot.lane.b32.xlu0 %v437, 4
      %v892 = vpop.permute.xlu0 %891
      %vm925 = vcmask 60448
      %926 = vst.msk [vmem:[%s728] sm:$0xf] %vm925, %v830
      %927 = vst.msk [vmem:[%s728 + $0x4] sm:$0xf] %vm925, %v832
      %928 = vst.msk [vmem:[%s728 + $0x8] sm:$0xf] %vm925, %v834
      %929 = vst.msk [vmem:[%s728 + $0xc] sm:$0xf] %vm925, %v836
      %930 = vst.msk [vmem:[%s728 + $0x10] sm:$0xf] %vm925, %v838
      %931 = vst.msk [vmem:[%s728 + $0x14] sm:$0xf] %vm925, %v840
      %932 = vst.msk [vmem:[%s728 + $0x18] sm:$0xf] %vm925, %v842
      %933 = vst.msk [vmem:[%s728 + $0x1c] sm:$0xf] %vm925, %v844
      %934 = vst.msk [vmem:[%s728 + $0x20] sm:$0xf] %vm925, %v846
      %935 = vst.msk [vmem:[%s728 + $0x24] sm:$0xf] %vm925, %v848
      %936 = vst.msk [vmem:[%s728 + $0x28] sm:$0xf] %vm925, %v850
      %937 = vst.msk [vmem:[%s728 + $0x2c] sm:$0xf] %vm925, %v852
      %938 = vst.msk [vmem:[%s728 + $0x30] sm:$0xf] %vm925, %v854
      %939 = vst.msk [vmem:[%s728 + $0x34] sm:$0xf] %vm925, %v856
      %940 = vst.msk [vmem:[%s728 + $0x38] sm:$0xf] %vm925, %v858
      %941 = vst.msk [vmem:[%s728 + $0x3c] sm:$0xf] %vm925, %v860
      %942 = vst.msk [vmem:[%s728 + $0x40] sm:$0xf] %vm925, %v862
      %943 = vst.msk [vmem:[%s728 + $0x44] sm:$0xf] %vm925, %v864
      %944 = vst.msk [vmem:[%s728 + $0x48] sm:$0xf] %vm925, %v866
      %945 = vst.msk [vmem:[%s728 + $0x4c] sm:$0xf] %vm925, %v868
      %946 = vst.msk [vmem:[%s728 + $0x50] sm:$0xf] %vm925, %v870
      %947 = vst.msk [vmem:[%s728 + $0x54] sm:$0xf] %vm925, %v872
      %948 = vst.msk [vmem:[%s728 + $0x58] sm:$0xf] %vm925, %v874
      %949 = vst.msk [vmem:[%s728 + $0x5c] sm:$0xf] %vm925, %v876
      %950 = vst.msk [vmem:[%s728 + $0x60] sm:$0xf] %vm925, %v878
      %951 = vst.msk [vmem:[%s728 + $0x64] sm:$0xf] %vm925, %v880
      %952 = vst.msk [vmem:[%s728 + $0x68] sm:$0xf] %vm925, %v882
      %953 = vst.msk [vmem:[%s728 + $0x6c] sm:$0xf] %vm925, %v884
      %954 = vst.msk [vmem:[%s728 + $0x70] sm:$0xf] %vm925, %v886
      %955 = vst.msk [vmem:[%s728 + $0x74] sm:$0xf] %vm925, %v888
      %956 = vst.msk [vmem:[%s728 + $0x78] sm:$0xf] %vm925, %v890
      %957 = vst.msk [vmem:[%s728 + $0x7c] sm:$0xf] %vm925, %v892
      %vm958 = vsmask.f32 3328
      %vm959 = vsmask.f32 7440
      %vm960 = vmor %vm958, %vm959
      %v961 = vrot.slane %v441, 4
      %v962 = vrot.slane %v444, 5
      %v963 = vor.u32 %v961, %v962
      %v964 = vrot.slane %v963, 4
      %v965 = vrot.slane %v452, 5
      %v966 = vsel %vm960, %v964, %v965
      %v967 = vrot.slane %v449, 4
      %v968 = vor.u32 %v967, %v965
      %v969 = vrot.slane %v968, 4
      %v970 = vrot.slane %v457, 4
      %v971 = vrot.slane %v460, 5
      %v972 = vor.u32 %v970, %v971
      %v973 = vrot.slane %v972, 4
      %v974 = vrot.slane %v468, 5
      %v975 = vsel %vm960, %v973, %v974
      %v976 = vrot.slane %v465, 4
      %v977 = vor.u32 %v976, %v974
      %v978 = vrot.slane %v977, 4
      %v979 = vrot.slane %v473, 4
      %v980 = vrot.slane %v476, 5
      %v981 = vor.u32 %v979, %v980
      %v982 = vrot.slane %v981, 4
      %v983 = vrot.slane %v484, 5
      %v984 = vsel %vm960, %v982, %v983
      %v985 = vrot.slane %v481, 4
      %v986 = vor.u32 %v985, %v983
      %v987 = vrot.slane %v986, 4
      %v988 = vrot.slane %v489, 4
      %v989 = vrot.slane %v492, 5
      %v990 = vor.u32 %v988, %v989
      %v991 = vrot.slane %v990, 4
      %v992 = vrot.slane %v500, 5
      %v993 = vsel %vm960, %v991, %v992
      %v994 = vrot.slane %v497, 4
      %v995 = vor.u32 %v994, %v992
      %v996 = vrot.slane %v995, 4
      %v997 = vrot.slane %v505, 4
      %v998 = vrot.slane %v508, 5
      %v999 = vor.u32 %v997, %v998
      %v1000 = vrot.slane %v999, 4
      %v1001 = vrot.slane %v516, 5
      %v1002 = vsel %vm960, %v1000, %v1001
      %v1003 = vrot.slane %v513, 4
      %v1004 = vor.u32 %v1003, %v1001
      %v1005 = vrot.slane %v1004, 4
      %v1006 = vrot.slane %v521, 4
      %v1007 = vrot.slane %v524, 5
      %v1008 = vor.u32 %v1006, %v1007
      %v1009 = vrot.slane %v1008, 4
      %v1010 = vrot.slane %v532, 5
      %v1011 = vsel %vm960, %v1009, %v1010
      %v1012 = vrot.slane %v529, 4
      %v1013 = vor.u32 %v1012, %v1010
      %v1014 = vrot.slane %v1013, 4
      %v1015 = vrot.slane %v537, 4
      %v1016 = vrot.slane %v540, 5
      %v1017 = vor.u32 %v1015, %v1016
      %v1018 = vrot.slane %v1017, 4
      %v1019 = vrot.slane %v548, 5
      %v1020 = vsel %vm960, %v1018, %v1019
      %v1021 = vrot.slane %v545, 4
      %v1022 = vor.u32 %v1021, %v1019
      %v1023 = vrot.slane %v1022, 4
      %v1024 = vrot.slane %v553, 4
      %v1025 = vrot.slane %v556, 5
      %v1026 = vor.u32 %v1024, %v1025
      %v1027 = vrot.slane %v1026, 4
      %v1028 = vrot.slane %v564, 5
      %v1029 = vsel %vm960, %v1027, %v1028
      %v1030 = vrot.slane %v561, 4
      %v1031 = vor.u32 %v1030, %v1028
      %v1032 = vrot.slane %v1031, 4
      %v1033 = vrot.slane %v569, 4
      %v1034 = vrot.slane %v572, 5
      %v1035 = vor.u32 %v1033, %v1034
      %v1036 = vrot.slane %v1035, 4
      %v1037 = vrot.slane %v580, 5
      %v1038 = vsel %vm960, %v1036, %v1037
      %v1039 = vrot.slane %v577, 4
      %v1040 = vor.u32 %v1039, %v1037
      %v1041 = vrot.slane %v1040, 4
      %v1042 = vrot.slane %v585, 4
      %v1043 = vrot.slane %v588, 5
      %v1044 = vor.u32 %v1042, %v1043
      %v1045 = vrot.slane %v1044, 4
      %v1046 = vrot.slane %v596, 5
      %v1047 = vsel %vm960, %v1045, %v1046
      %v1048 = vrot.slane %v593, 4
      %v1049 = vor.u32 %v1048, %v1046
      %v1050 = vrot.slane %v1049, 4
      %v1051 = vrot.slane %v601, 4
      %v1052 = vrot.slane %v604, 5
      %v1053 = vor.u32 %v1051, %v1052
      %v1054 = vrot.slane %v1053, 4
      %v1055 = vrot.slane %v612, 5
      %v1056 = vsel %vm960, %v1054, %v1055
      %v1057 = vrot.slane %v609, 4
      %v1058 = vor.u32 %v1057, %v1055
      %v1059 = vrot.slane %v1058, 4
      %v1060 = vrot.slane %v617, 4
      %v1061 = vrot.slane %v620, 5
      %v1062 = vor.u32 %v1060, %v1061
      %v1063 = vrot.slane %v1062, 4
      %v1064 = vrot.slane %v628, 5
      %v1065 = vsel %vm960, %v1063, %v1064
      %v1066 = vrot.slane %v625, 4
      %v1067 = vor.u32 %v1066, %v1064
      %v1068 = vrot.slane %v1067, 4
      %v1069 = vrot.slane %v633, 4
      %v1070 = vrot.slane %v636, 5
      %v1071 = vor.u32 %v1069, %v1070
      %v1072 = vrot.slane %v1071, 4
      %v1073 = vrot.slane %v644, 5
      %v1074 = vsel %vm960, %v1072, %v1073
      %v1075 = vrot.slane %v641, 4
      %v1076 = vor.u32 %v1075, %v1073
      %v1077 = vrot.slane %v1076, 4
      %v1078 = vrot.slane %v649, 4
      %v1079 = vrot.slane %v652, 5
      %v1080 = vor.u32 %v1078, %v1079
      %v1081 = vrot.slane %v1080, 4
      %v1082 = vrot.slane %v660, 5
      %v1083 = vsel %vm960, %v1081, %v1082
      %v1084 = vrot.slane %v657, 4
      %v1085 = vor.u32 %v1084, %v1082
      %v1086 = vrot.slane %v1085, 4
      %v1087 = vrot.slane %v665, 4
      %v1088 = vrot.slane %v668, 5
      %v1089 = vor.u32 %v1087, %v1088
      %v1090 = vrot.slane %v1089, 4
      %v1091 = vrot.slane %v676, 5
      %v1092 = vsel %vm960, %v1090, %v1091
      %v1093 = vrot.slane %v673, 4
      %v1094 = vor.u32 %v1093, %v1091
      %v1095 = vrot.slane %v1094, 4
      %v1096 = vrot.slane %v681, 4
      %v1097 = vrot.slane %v684, 5
      %v1098 = vor.u32 %v1096, %v1097
      %v1099 = vrot.slane %v1098, 4
      %v1100 = vrot.slane %v692, 5
      %v1101 = vsel %vm960, %v1099, %v1100
      %v1102 = vrot.slane %v689, 4
      %v1103 = vor.u32 %v1102, %v1100
      %v1104 = vrot.slane %v1103, 4
      %1105 = vrot.lane.b32.xlu0 %v966, 8
      %v1106 = vpop.permute.xlu0 %1105
      %1107 = vrot.lane.b32.xlu0 %v969, 8
      %v1108 = vpop.permute.xlu0 %1107
      %1109 = vrot.lane.b32.xlu0 %v975, 8
      %v1110 = vpop.permute.xlu0 %1109
      %1111 = vrot.lane.b32.xlu0 %v978, 8
      %v1112 = vpop.permute.xlu0 %1111
      %1113 = vrot.lane.b32.xlu0 %v984, 8
      %v1114 = vpop.permute.xlu0 %1113
      %1115 = vrot.lane.b32.xlu0 %v987, 8
      %v1116 = vpop.permute.xlu0 %1115
      %1117 = vrot.lane.b32.xlu0 %v993, 8
      %v1118 = vpop.permute.xlu0 %1117
      %1119 = vrot.lane.b32.xlu0 %v996, 8
      %v1120 = vpop.permute.xlu0 %1119
      %1121 = vrot.lane.b32.xlu0 %v1002, 8
      %v1122 = vpop.permute.xlu0 %1121
      %1123 = vrot.lane.b32.xlu0 %v1005, 8
      %v1124 = vpop.permute.xlu0 %1123
      %1125 = vrot.lane.b32.xlu0 %v1011, 8
      %v1126 = vpop.permute.xlu0 %1125
      %1127 = vrot.lane.b32.xlu0 %v1014, 8
      %v1128 = vpop.permute.xlu0 %1127
      %1129 = vrot.lane.b32.xlu0 %v1020, 8
      %v1130 = vpop.permute.xlu0 %1129
      %1131 = vrot.lane.b32.xlu0 %v1023, 8
      %v1132 = vpop.permute.xlu0 %1131
      %1133 = vrot.lane.b32.xlu0 %v1029, 8
      %v1134 = vpop.permute.xlu0 %1133
      %1135 = vrot.lane.b32.xlu0 %v1032, 8
      %v1136 = vpop.permute.xlu0 %1135
      %1137 = vrot.lane.b32.xlu0 %v1038, 8
      %v1138 = vpop.permute.xlu0 %1137
      %1139 = vrot.lane.b32.xlu0 %v1041, 8
      %v1140 = vpop.permute.xlu0 %1139
      %1141 = vrot.lane.b32.xlu0 %v1047, 8
      %v1142 = vpop.permute.xlu0 %1141
      %1143 = vrot.lane.b32.xlu0 %v1050, 8
      %v1144 = vpop.permute.xlu0 %1143
      %1145 = vrot.lane.b32.xlu0 %v1056, 8
      %v1146 = vpop.permute.xlu0 %1145
      %1147 = vrot.lane.b32.xlu0 %v1059, 8
      %v1148 = vpop.permute.xlu0 %1147
      %1149 = vrot.lane.b32.xlu0 %v1065, 8
      %v1150 = vpop.permute.xlu0 %1149
      %1151 = vrot.lane.b32.xlu0 %v1068, 8
      %v1152 = vpop.permute.xlu0 %1151
      %1153 = vrot.lane.b32.xlu0 %v1074, 8
      %v1154 = vpop.permute.xlu0 %1153
      %1155 = vrot.lane.b32.xlu0 %v1077, 8
      %v1156 = vpop.permute.xlu0 %1155
      %1157 = vrot.lane.b32.xlu0 %v1083, 8
      %v1158 = vpop.permute.xlu0 %1157
      %1159 = vrot.lane.b32.xlu0 %v1086, 8
      %v1160 = vpop.permute.xlu0 %1159
      %1161 = vrot.lane.b32.xlu0 %v1092, 8
      %v1162 = vpop.permute.xlu0 %1161
      %1163 = vrot.lane.b32.xlu0 %v1095, 8
      %v1164 = vpop.permute.xlu0 %1163
      %1165 = vrot.lane.b32.xlu0 %v1101, 8
      %v1166 = vpop.permute.xlu0 %1165
      %1167 = vrot.lane.b32.xlu0 %v1104, 8
      %v1168 = vpop.permute.xlu0 %1167
      %vm1201 = vcmask 93248
      %1202 = vst.msk [vmem:[%s728] sm:$0xf] %vm1201, %v1106
      %vm1203 = vcmask 93248
      %vm1204 = vmand %vm1203, %vm958
      %v1205 = vld [vmem:[%s728 + $0x4] sm:$0xf]
      %v1206 = vsel %vm1204, %v1108, %v1205
      %1207 = vst [vmem:[%s728 + $0x4] sm:$0xf] %v1206
      %1208 = vst.msk [vmem:[%s728 + $0x8] sm:$0xf] %vm1201, %v1110
      %v1209 = vld [vmem:[%s728 + $0xc] sm:$0xf]
      %v1210 = vsel %vm1204, %v1112, %v1209
      %1211 = vst [vmem:[%s728 + $0xc] sm:$0xf] %v1210
      %1212 = vst.msk [vmem:[%s728 + $0x10] sm:$0xf] %vm1201, %v1114
      %v1213 = vld [vmem:[%s728 + $0x14] sm:$0xf]
      %v1214 = vsel %vm1204, %v1116, %v1213
      %1215 = vst [vmem:[%s728 + $0x14] sm:$0xf] %v1214
      %1216 = vst.msk [vmem:[%s728 + $0x18] sm:$0xf] %vm1201, %v1118
      %v1217 = vld [vmem:[%s728 + $0x1c] sm:$0xf]
      %v1218 = vsel %vm1204, %v1120, %v1217
      %1219 = vst [vmem:[%s728 + $0x1c] sm:$0xf] %v1218
      %1220 = vst.msk [vmem:[%s728 + $0x20] sm:$0xf] %vm1201, %v1122
      %v1221 = vld [vmem:[%s728 + $0x24] sm:$0xf]
      %v1222 = vsel %vm1204, %v1124, %v1221
      %1223 = vst [vmem:[%s728 + $0x24] sm:$0xf] %v1222
      %1224 = vst.msk [vmem:[%s728 + $0x28] sm:$0xf] %vm1201, %v1126
      %v1225 = vld [vmem:[%s728 + $0x2c] sm:$0xf]
      %v1226 = vsel %vm1204, %v1128, %v1225
      %1227 = vst [vmem:[%s728 + $0x2c] sm:$0xf] %v1226
      %1228 = vst.msk [vmem:[%s728 + $0x30] sm:$0xf] %vm1201, %v1130
      %v1229 = vld [vmem:[%s728 + $0x34] sm:$0xf]
      %v1230 = vsel %vm1204, %v1132, %v1229
      %1231 = vst [vmem:[%s728 + $0x34] sm:$0xf] %v1230
      %1232 = vst.msk [vmem:[%s728 + $0x38] sm:$0xf] %vm1201, %v1134
      %v1233 = vld [vmem:[%s728 + $0x3c] sm:$0xf]
      %v1234 = vsel %vm1204, %v1136, %v1233
      %1235 = vst [vmem:[%s728 + $0x3c] sm:$0xf] %v1234
      %1236 = vst.msk [vmem:[%s728 + $0x40] sm:$0xf] %vm1201, %v1138
      %v1237 = vld [vmem:[%s728 + $0x44] sm:$0xf]
      %v1238 = vsel %vm1204, %v1140, %v1237
      %1239 = vst [vmem:[%s728 + $0x44] sm:$0xf] %v1238
      %1240 = vst.msk [vmem:[%s728 + $0x48] sm:$0xf] %vm1201, %v1142
      %v1241 = vld [vmem:[%s728 + $0x4c] sm:$0xf]
      %v1242 = vsel %vm1204, %v1144, %v1241
      %1243 = vst [vmem:[%s728 + $0x4c] sm:$0xf] %v1242
      %1244 = vst.msk [vmem:[%s728 + $0x50] sm:$0xf] %vm1201, %v1146
      %v1245 = vld [vmem:[%s728 + $0x54] sm:$0xf]
      %v1246 = vsel %vm1204, %v1148, %v1245
      %1247 = vst [vmem:[%s728 + $0x54] sm:$0xf] %v1246
      %1248 = vst.msk [vmem:[%s728 + $0x58] sm:$0xf] %vm1201, %v1150
      %v1249 = vld [vmem:[%s728 + $0x5c] sm:$0xf]
      %v1250 = vsel %vm1204, %v1152, %v1249
      %1251 = vst [vmem:[%s728 + $0x5c] sm:$0xf] %v1250
      %1252 = vst.msk [vmem:[%s728 + $0x60] sm:$0xf] %vm1201, %v1154
      %v1253 = vld [vmem:[%s728 + $0x64] sm:$0xf]
      %v1254 = vsel %vm1204, %v1156, %v1253
      %1255 = vst [vmem:[%s728 + $0x64] sm:$0xf] %v1254
      %1256 = vst.msk [vmem:[%s728 + $0x68] sm:$0xf] %vm1201, %v1158
      %v1257 = vld [vmem:[%s728 + $0x6c] sm:$0xf]
      %v1258 = vsel %vm1204, %v1160, %v1257
      %1259 = vst [vmem:[%s728 + $0x6c] sm:$0xf] %v1258
      %1260 = vst.msk [vmem:[%s728 + $0x70] sm:$0xf] %vm1201, %v1162
      %v1261 = vld [vmem:[%s728 + $0x74] sm:$0xf]
      %v1262 = vsel %vm1204, %v1164, %v1261
      %1263 = vst [vmem:[%s728 + $0x74] sm:$0xf] %v1262
      %1264 = vst.msk [vmem:[%s728 + $0x78] sm:$0xf] %vm1201, %v1166
      %v1265 = vld [vmem:[%s728 + $0x7c] sm:$0xf]
      %v1266 = vsel %vm1204, %v1168, %v1265
      %1267 = vst [vmem:[%s728 + $0x7c] sm:$0xf] %v1266
      %p1268 = scmp.eq.s32.totalorder %s21, 0
      // Predicated region
      $region29: #{residual_block_forward_nhwc.3} parent=27 // pred_check
        %p1269 = pneg %p1268
      $region30: #{residual_block_forward_nhwc.3} parent=27 // pred_check_branch
        %1271 = sbr.rel (%p1269) target = $region32
      $region31: #{residual_block_forward_nhwc.3} parent=27 // pred_region
        %vm1272 = vcmask 93184
        %1273 = vst.msk [vmem:[#allocation2] sm:$0xf] %vm1272, 0
        %1274 = vst.msk [vmem:[#allocation2 + $0x4] sm:$0xf] %vm1272, 0
      $region32: #{residual_block_forward_nhwc.3} parent=27 // pred_fallthru
        _
      %p1275 = scmp.gt.s32.totalorder %s21, 0
      // Predicated region
      $region33: #{residual_block_forward_nhwc.3} parent=27 // pred_check
        %p1276 = pneg %p1275
      $region34: #{residual_block_forward_nhwc.3} parent=27 // pred_check_branch
        %1278 = sbr.rel (%p1276) target = $region36
      $region35: #{residual_block_forward_nhwc.3} parent=27 // pred_region
        %s1279 = ssub.s32 %s257, 1
        %s1280 = smul.u32 %s1279, 16
        %s1281 = scalar_lea.vmem %s232, %s1280
        %v1282 = vld [vmem:[%s1281] sm:$0xff]
        %v1283 = vld [vmem:[%s1281 + $0x8] sm:$0xff]
        %v1284 = vpack.c.bf16 %v1282, %v1282
        %v1285 = vpack.c.bf16 %v1283, %v1283
        %v1287 = vshrl.u32 %v1284, 16
        %v1289 = vrot.slane %v1287, 7
        %v1290 = vshll.u32 %v1284, 16
        %v1292 = vor.u32 %v1289, %v1290
        %v1293 = vrot.slane %v1289, 4
        %v1295 = vshrl.u32 %v1285, 16
        %v1297 = vrot.slane %v1295, 7
        %v1298 = vshll.u32 %v1285, 16
        %v1300 = vor.u32 %v1297, %v1298
        %v1301 = vsel %vm439, %v1293, %v1300
        %v1304 = vld [vmem:[#allocation2] sm:$0xf]
        %v1305 = vsel %vm731, %v1292, %v1304
        %1306 = vst [vmem:[#allocation2] sm:$0xf] %v1305
        %1307 = vst.msk [vmem:[#allocation2 + $0x4] sm:$0xf] %vm735, %v1301
        %1310 = vrot.lane.b32.xlu0 %v1284, 4
        %v1311 = vpop.permute.xlu0 %1310
        %1312 = vrot.lane.b32.xlu0 %v1285, 4
        %v1313 = vpop.permute.xlu0 %1312
        %1316 = vst.msk [vmem:[#allocation2] sm:$0xf] %vm925, %v1311
        %1317 = vst.msk [vmem:[#allocation2 + $0x4] sm:$0xf] %vm925, %v1313
        %v1318 = vrot.slane %v1287, 4
        %v1319 = vrot.slane %v1290, 5
        %v1320 = vor.u32 %v1318, %v1319
        %v1321 = vrot.slane %v1320, 4
        %v1322 = vrot.slane %v1298, 5
        %v1323 = vsel %vm960, %v1321, %v1322
        %v1324 = vrot.slane %v1295, 4
        %v1325 = vor.u32 %v1324, %v1322
        %v1326 = vrot.slane %v1325, 4
        %1327 = vrot.lane.b32.xlu0 %v1323, 8
        %v1328 = vpop.permute.xlu0 %1327
        %1329 = vrot.lane.b32.xlu0 %v1326, 8
        %v1330 = vpop.permute.xlu0 %1329
        %1333 = vst.msk [vmem:[#allocation2] sm:$0xf] %vm1201, %v1328
        %v1334 = vld [vmem:[#allocation2 + $0x4] sm:$0xf]
        %v1335 = vsel %vm1204, %v1330, %v1334
        %1336 = vst [vmem:[#allocation2 + $0x4] sm:$0xf] %v1335
      $region36: #{residual_block_forward_nhwc.3} parent=27 // pred_fallthru
        _
      // Predicated region
      $region37: #{residual_block_forward_nhwc.3} parent=27 // pred_check
        %p1337 = pneg %p1268
      $region38: #{residual_block_forward_nhwc.3} parent=27 // pred_check_branch
        %1339 = sbr.rel (%p1337) target = $region40
      $region39: #{residual_block_forward_nhwc.3} parent=27 // pred_region
        %s1340 = scalar_lea.vmem [#allocation2], 136
        %vm1341 = vcmask 93184
        %1342 = vst.msk [vmem:[%s1340] sm:$0xf] %vm1341, 0
        %1343 = vst.msk [vmem:[%s1340 + $0x4] sm:$0xf] %vm1341, 0
      $region40: #{residual_block_forward_nhwc.3} parent=27 // pred_fallthru
        _
      %p1344 = scmp.lt.s32.totalorder %s21, 0
      // Predicated region
      $region41: #{residual_block_forward_nhwc.3} parent=27 // pred_check
        %p1345 = pneg %p1344
      $region42: #{residual_block_forward_nhwc.3} parent=27 // pred_check_branch
        %1347 = sbr.rel (%p1345) target = $region44
      $region43: #{residual_block_forward_nhwc.3} parent=27 // pred_region
        %s1348 = sadd.s32 %s257, 16
        %s1349 = smul.u32 %s1348, 16
        %s1350 = scalar_lea.vmem %s232, %s1349
        %v1351 = vld [vmem:[%s1350] sm:$0xff]
        %v1352 = vld [vmem:[%s1350 + $0x8] sm:$0xff]
        %v1353 = vpack.c.bf16 %v1351, %v1351
        %v1354 = vpack.c.bf16 %v1352, %v1352
        %v1356 = vshrl.u32 %v1353, 16
        %v1358 = vrot.slane %v1356, 7
        %v1359 = vshll.u32 %v1353, 16
        %v1361 = vor.u32 %v1358, %v1359
        %v1362 = vrot.slane %v1358, 4
        %v1364 = vshrl.u32 %v1354, 16
        %v1366 = vrot.slane %v1364, 7
        %v1367 = vshll.u32 %v1354, 16
        %v1369 = vor.u32 %v1366, %v1367
        %v1370 = vsel %vm439, %v1362, %v1369
        %s1373 = scalar_lea.vmem [#allocation2], 136
        %v1374 = vld [vmem:[%s1373] sm:$0xf]
        %v1375 = vsel %vm731, %v1361, %v1374
        %1376 = vst [vmem:[%s1373] sm:$0xf] %v1375
        %1377 = vst.msk [vmem:[%s1373 + $0x4] sm:$0xf] %vm735, %v1370
        %1380 = vrot.lane.b32.xlu0 %v1353, 4
        %v1381 = vpop.permute.xlu0 %1380
        %1382 = vrot.lane.b32.xlu0 %v1354, 4
        %v1383 = vpop.permute.xlu0 %1382
        %1386 = vst.msk [vmem:[%s1373] sm:$0xf] %vm925, %v1381
        %1387 = vst.msk [vmem:[%s1373 + $0x4] sm:$0xf] %vm925, %v1383
        %v1388 = vrot.slane %v1356, 4
        %v1389 = vrot.slane %v1359, 5
        %v1390 = vor.u32 %v1388, %v1389
        %v1391 = vrot.slane %v1390, 4
        %v1392 = vrot.slane %v1367, 5
        %v1393 = vsel %vm960, %v1391, %v1392
        %v1394 = vrot.slane %v1364, 4
        %v1395 = vor.u32 %v1394, %v1392
        %v1396 = vrot.slane %v1395, 4
        %1397 = vrot.lane.b32.xlu0 %v1393, 8
        %v1398 = vpop.permute.xlu0 %1397
        %1399 = vrot.lane.b32.xlu0 %v1396, 8
        %v1400 = vpop.permute.xlu0 %1399
        %1403 = vst.msk [vmem:[%s1373] sm:$0xf] %vm1201, %v1398
        %v1404 = vld [vmem:[%s1373 + $0x4] sm:$0xf]
        %v1405 = vsel %vm1204, %v1400, %v1404
        %1406 = vst [vmem:[%s1373 + $0x4] sm:$0xf] %v1405
      $region44: #{residual_block_forward_nhwc.3} parent=27 // pred_fallthru
        _
      %v1407 = vld [vmem:[%s1] sm:$0xf]
      %v1408 = vld [vmem:[%s1 + $0x4] sm:$0x3]
      %v1409 = vld [vmem:[%s1 + $0x8] sm:$0xf]
      %v1410 = vld [vmem:[%s1 + $0xc] sm:$0x3]
      %v1411 = vld [vmem:[%s1 + $0x10] sm:$0xf]
      %v1412 = vld [vmem:[%s1 + $0x14] sm:$0x3]
      %v1413 = vld [vmem:[#allocation2] sm:$0xf]
      %v1414 = vld [vmem:[#allocation2 + $0x4] sm:$0xf]
      %v1415 = vld [vmem:[#allocation2 + $0x8] sm:$0xf]
      %v1416 = vld [vmem:[#allocation2 + $0xc] sm:$0xf]
      %v1417 = vld [vmem:[#allocation2 + $0x10] sm:$0xf]
      %v1418 = vld [vmem:[#allocation2 + $0x14] sm:$0xf]
      %v1419 = vld [vmem:[#allocation2 + $0x18] sm:$0xf]
      %v1420 = vld [vmem:[#allocation2 + $0x1c] sm:$0xf]
      %v1421 = vld [vmem:[#allocation2 + $0x20] sm:$0xf]
      %v1422 = vld [vmem:[#allocation2 + $0x24] sm:$0xf]
      %v1423 = vld [vmem:[#allocation2 + $0x28] sm:$0xf]
      %v1424 = vld [vmem:[#allocation2 + $0x2c] sm:$0xf]
      %v1425 = vld [vmem:[#allocation2 + $0x30] sm:$0xf]
      %v1426 = vld [vmem:[#allocation2 + $0x34] sm:$0xf]
      %v1427 = vld [vmem:[#allocation2 + $0x38] sm:$0xf]
      %v1428 = vld [vmem:[#allocation2 + $0x3c] sm:$0xf]
      %v1429 = vld [vmem:[#allocation2 + $0x40] sm:$0xf]
      %v1430 = vld [vmem:[#allocation2 + $0x44] sm:$0xf]
      %v1431 = vld [vmem:[#allocation2 + $0x48] sm:$0xf]
      %v1432 = vld [vmem:[#allocation2 + $0x4c] sm:$0xf]
      %v1433 = vld [vmem:[#allocation2 + $0x50] sm:$0xf]
      %v1434 = vld [vmem:[#allocation2 + $0x54] sm:$0xf]
      %v1435 = vld [vmem:[#allocation2 + $0x58] sm:$0xf]
      %v1436 = vld [vmem:[#allocation2 + $0x5c] sm:$0xf]
      %v1437 = vld [vmem:[#allocation2 + $0x60] sm:$0xf]
      %v1438 = vld [vmem:[#allocation2 + $0x64] sm:$0xf]
      %v1439 = vld [vmem:[#allocation2 + $0x68] sm:$0xf]
      %v1440 = vld [vmem:[#allocation2 + $0x6c] sm:$0xf]
      %v1441 = vld [vmem:[#allocation2 + $0x70] sm:$0xf]
      %v1442 = vld [vmem:[#allocation2 + $0x74] sm:$0xf]
      %v1443 = vld [vmem:[#allocation2 + $0x78] sm:$0xf]
      %v1444 = vld [vmem:[#allocation2 + $0x7c] sm:$0xf]
      %v1445 = vld [vmem:[%s728] sm:$0xf]
      %v1446 = vld [vmem:[%s728 + $0x4] sm:$0xf]
      %v1447 = vld [vmem:[%s728 + $0x8] sm:$0xf]
      %v1448 = vld [vmem:[%s728 + $0xc] sm:$0xf]
      %v1449 = vld [vmem:[%s728 + $0x10] sm:$0xf]
      %v1450 = vld [vmem:[%s728 + $0x14] sm:$0xf]
      %v1451 = vld [vmem:[%s728 + $0x18] sm:$0xf]
      %v1452 = vld [vmem:[%s728 + $0x1c] sm:$0xf]
      %v1453 = vld [vmem:[%s728 + $0x20] sm:$0xf]
      %v1454 = vld [vmem:[%s728 + $0x24] sm:$0xf]
      %v1455 = vld [vmem:[%s728 + $0x28] sm:$0xf]
      %v1456 = vld [vmem:[%s728 + $0x2c] sm:$0xf]
      %v1457 = vld [vmem:[%s728 + $0x30] sm:$0xf]
      %v1458 = vld [vmem:[%s728 + $0x34] sm:$0xf]
      %v1459 = vld [vmem:[%s728 + $0x38] sm:$0xf]
      %v1460 = vld [vmem:[%s728 + $0x3c] sm:$0xf]
      %v1461 = vld [vmem:[%s728 + $0x40] sm:$0xf]
      %v1462 = vld [vmem:[%s728 + $0x44] sm:$0xf]
      %v1463 = vld [vmem:[%s728 + $0x48] sm:$0xf]
      %v1464 = vld [vmem:[%s728 + $0x4c] sm:$0xf]
      %v1465 = vld [vmem:[%s728 + $0x50] sm:$0xf]
      %v1466 = vld [vmem:[%s728 + $0x54] sm:$0xf]
      %v1467 = vld [vmem:[%s728 + $0x58] sm:$0xf]
      %v1468 = vld [vmem:[%s728 + $0x5c] sm:$0xf]
      %v1469 = vld [vmem:[%s728 + $0x60] sm:$0xf]
      %v1470 = vld [vmem:[%s728 + $0x64] sm:$0xf]
      %v1471 = vld [vmem:[%s728 + $0x68] sm:$0xf]
      %v1472 = vld [vmem:[%s728 + $0x6c] sm:$0xf]
      %v1473 = vld [vmem:[%s728 + $0x70] sm:$0xf]
      %v1474 = vld [vmem:[%s728 + $0x74] sm:$0xf]
      %v1475 = vld [vmem:[%s728 + $0x78] sm:$0xf]
      %v1476 = vld [vmem:[%s728 + $0x7c] sm:$0xf]
      %v1509 = vunpack.c.l.b16 %v1445
      %v1510 = vunpack.c.l.b16 %v1446
      %v1511 = vunpack.c.l.b16 %v1447
      %v1512 = vunpack.c.l.b16 %v1448
      %v1513 = vunpack.c.l.b16 %v1449
      %v1514 = vunpack.c.l.b16 %v1450
      %v1515 = vunpack.c.l.b16 %v1451
      %v1516 = vunpack.c.l.b16 %v1452
      %v1517 = vunpack.c.l.b16 %v1453
      %v1518 = vunpack.c.l.b16 %v1454
      %v1519 = vunpack.c.l.b16 %v1455
      %v1520 = vunpack.c.l.b16 %v1456
      %v1521 = vunpack.c.l.b16 %v1457
      %v1522 = vunpack.c.l.b16 %v1458
      %v1523 = vunpack.c.l.b16 %v1459
      %v1524 = vunpack.c.l.b16 %v1460
      %v1525 = vunpack.c.l.b16 %v1461
      %v1526 = vunpack.c.l.b16 %v1462
      %v1527 = vunpack.c.l.b16 %v1463
      %v1528 = vunpack.c.l.b16 %v1464
      %v1529 = vunpack.c.l.b16 %v1465
      %v1530 = vunpack.c.l.b16 %v1466
      %v1531 = vunpack.c.l.b16 %v1467
      %v1532 = vunpack.c.l.b16 %v1468
      %v1533 = vunpack.c.l.b16 %v1469
      %v1534 = vunpack.c.l.b16 %v1470
      %v1535 = vunpack.c.l.b16 %v1471
      %v1536 = vunpack.c.l.b16 %v1472
      %v1537 = vunpack.c.l.b16 %v1473
      %v1538 = vunpack.c.l.b16 %v1474
      %v1539 = vunpack.c.l.b16 %v1475
      %v1540 = vunpack.c.l.b16 %v1476
      %v1541 = vpack.c.b16 %v1510, %v1509
      %v1542 = vpack.c.b16 %v1512, %v1511
      %v1543 = vpack.c.b16 %v1514, %v1513
      %v1544 = vpack.c.b16 %v1516, %v1515
      %v1545 = vpack.c.b16 %v1518, %v1517
      %v1546 = vpack.c.b16 %v1520, %v1519
      %v1547 = vpack.c.b16 %v1522, %v1521
      %v1548 = vpack.c.b16 %v1524, %v1523
      %v1549 = vpack.c.b16 %v1526, %v1525
      %v1550 = vpack.c.b16 %v1528, %v1527
      %v1551 = vpack.c.b16 %v1530, %v1529
      %v1552 = vpack.c.b16 %v1532, %v1531
      %v1553 = vpack.c.b16 %v1534, %v1533
      %v1554 = vpack.c.b16 %v1536, %v1535
      %v1555 = vpack.c.b16 %v1538, %v1537
      %v1556 = vpack.c.b16 %v1540, %v1539
      %v1559 = vunpack.c.l.b16 %v1409
      %v1560 = vunpack.c.l.b16 %v1410
      %v1561 = vpack.c.b16 %v1560, %v1559
      %vm1562 = vcmask 97280
      %v1564 = vsel %vm1562, %v1541, 0
      %v1567 = vsel %vm1562, %v1542, 0
      %v1570 = vsel %vm1562, %v1543, 0
      %v1573 = vsel %vm1562, %v1544, 0
      %v1576 = vsel %vm1562, %v1545, 0
      %v1579 = vsel %vm1562, %v1546, 0
      %v1582 = vsel %vm1562, %v1547, 0
      %v1585 = vsel %vm1562, %v1548, 0
      %v1588 = vsel %vm1562, %v1549, 0
      %v1591 = vsel %vm1562, %v1550, 0
      %v1594 = vsel %vm1562, %v1551, 0
      %v1597 = vsel %vm1562, %v1552, 0
      %v1600 = vsel %vm1562, %v1553, 0
      %v1603 = vsel %vm1562, %v1554, 0
      %v1606 = vsel %vm1562, %v1555, 0
      %v1609 = vsel %vm1562, %v1556, 0
      %vm1611 = vcmask 1045504
      %v1613 = vsel %vm1611, %v1561, 0
      %1615 = vmatpush.bf16.msra.mxu0 0
      %1616 = vmatpush.bf16.msra.mxu0 0
      %1617 = vmatpush.bf16.msra.mxu0 0
      %1618 = vmatpush.bf16.msra.mxu0 0
      %1619 = vmatpush.bf16.msra.mxu0 0
      %1620 = vmatpush.bf16.msra.mxu0 0
      %1621 = vmatpush.bf16.msra.mxu0 0
      %1622 = vmatpush.bf16.msra.mxu0 %v1613
      %1623 = vmatmul.bf16.gmra.mxu0 %v1564
      %v1624 = vpop.f32.mrf.mxu0
      %v1625 = vadd.f32 0.0, %v1624
      %v1626 = vpop.f32.mrf.mxu0
      %v1627 = vadd.f32 0.0, %v1626
      %1628 = vmatmul.bf16.gmra.mxu0 %v1567
      %v1629 = vpop.f32.mrf.mxu0
      %v1630 = vadd.f32 0.0, %v1629
      %v1631 = vpop.f32.mrf.mxu0
      %v1632 = vadd.f32 0.0, %v1631
      %1633 = vmatmul.bf16.gmra.mxu0 %v1570
      %v1634 = vpop.f32.mrf.mxu0
      %v1635 = vadd.f32 0.0, %v1634
      %v1636 = vpop.f32.mrf.mxu0
      %v1637 = vadd.f32 0.0, %v1636
      %1638 = vmatmul.bf16.gmra.mxu0 %v1573
      %v1639 = vpop.f32.mrf.mxu0
      %v1640 = vadd.f32 0.0, %v1639
      %v1641 = vpop.f32.mrf.mxu0
      %v1642 = vadd.f32 0.0, %v1641
      %1643 = vmatmul.bf16.gmra.mxu0 %v1576
      %v1644 = vpop.f32.mrf.mxu0
      %v1645 = vadd.f32 0.0, %v1644
      %v1646 = vpop.f32.mrf.mxu0
      %v1647 = vadd.f32 0.0, %v1646
      %1648 = vmatmul.bf16.gmra.mxu0 %v1579
      %v1649 = vpop.f32.mrf.mxu0
      %v1650 = vadd.f32 0.0, %v1649
      %v1651 = vpop.f32.mrf.mxu0
      %v1652 = vadd.f32 0.0, %v1651
      %1653 = vmatmul.bf16.gmra.mxu0 %v1582
      %v1654 = vpop.f32.mrf.mxu0
      %v1655 = vadd.f32 0.0, %v1654
      %v1656 = vpop.f32.mrf.mxu0
      %v1657 = vadd.f32 0.0, %v1656
      %1658 = vmatmul.bf16.gmra.mxu0 %v1585
      %v1659 = vpop.f32.mrf.mxu0
      %v1660 = vadd.f32 0.0, %v1659
      %v1661 = vpop.f32.mrf.mxu0
      %v1662 = vadd.f32 0.0, %v1661
      %1663 = vmatmul.bf16.gmra.mxu0 %v1588
      %v1664 = vpop.f32.mrf.mxu0
      %v1665 = vadd.f32 0.0, %v1664
      %v1666 = vpop.f32.mrf.mxu0
      %v1667 = vadd.f32 0.0, %v1666
      %1668 = vmatmul.bf16.gmra.mxu0 %v1591
      %v1669 = vpop.f32.mrf.mxu0
      %v1670 = vadd.f32 0.0, %v1669
      %v1671 = vpop.f32.mrf.mxu0
      %v1672 = vadd.f32 0.0, %v1671
      %1673 = vmatmul.bf16.gmra.mxu0 %v1594
      %v1674 = vpop.f32.mrf.mxu0
      %v1675 = vadd.f32 0.0, %v1674
      %v1676 = vpop.f32.mrf.mxu0
      %v1677 = vadd.f32 0.0, %v1676
      %1678 = vmatmul.bf16.gmra.mxu0 %v1597
      %v1679 = vpop.f32.mrf.mxu0
      %v1680 = vadd.f32 0.0, %v1679
      %v1681 = vpop.f32.mrf.mxu0
      %v1682 = vadd.f32 0.0, %v1681
      %1683 = vmatmul.bf16.gmra.mxu0 %v1600
      %v1684 = vpop.f32.mrf.mxu0
      %v1685 = vadd.f32 0.0, %v1684
      %v1686 = vpop.f32.mrf.mxu0
      %v1687 = vadd.f32 0.0, %v1686
      %1688 = vmatmul.bf16.gmra.mxu0 %v1603
      %v1689 = vpop.f32.mrf.mxu0
      %v1690 = vadd.f32 0.0, %v1689
      %v1691 = vpop.f32.mrf.mxu0
      %v1692 = vadd.f32 0.0, %v1691
      %1693 = vmatmul.bf16.gmra.mxu0 %v1606
      %v1694 = vpop.f32.mrf.mxu0
      %v1695 = vadd.f32 0.0, %v1694
      %v1696 = vpop.f32.mrf.mxu0
      %v1697 = vadd.f32 0.0, %v1696
      %1698 = vmatmul.bf16.gmra.mxu0 %v1609
      %v1699 = vpop.f32.mrf.mxu0
      %v1700 = vadd.f32 0.0, %v1699
      %v1701 = vpop.f32.mrf.mxu0
      %v1702 = vadd.f32 0.0, %v1701
      %1703 = vdwg.mxu0
      %v1736 = vunpack.c.l.b16 %v1413
      %v1737 = vunpack.c.l.b16 %v1414
      %v1738 = vunpack.c.l.b16 %v1415
      %v1739 = vunpack.c.l.b16 %v1416
      %v1740 = vunpack.c.l.b16 %v1417
      %v1741 = vunpack.c.l.b16 %v1418
      %v1742 = vunpack.c.l.b16 %v1419
      %v1743 = vunpack.c.l.b16 %v1420
      %v1744 = vunpack.c.l.b16 %v1421
      %v1745 = vunpack.c.l.b16 %v1422
      %v1746 = vunpack.c.l.b16 %v1423
      %v1747 = vunpack.c.l.b16 %v1424
      %v1748 = vunpack.c.l.b16 %v1425
      %v1749 = vunpack.c.l.b16 %v1426
      %v1750 = vunpack.c.l.b16 %v1427
      %v1751 = vunpack.c.l.b16 %v1428
      %v1752 = vunpack.c.l.b16 %v1429
      %v1753 = vunpack.c.l.b16 %v1430
      %v1754 = vunpack.c.l.b16 %v1431
      %v1755 = vunpack.c.l.b16 %v1432
      %v1756 = vunpack.c.l.b16 %v1433
      %v1757 = vunpack.c.l.b16 %v1434
      %v1758 = vunpack.c.l.b16 %v1435
      %v1759 = vunpack.c.l.b16 %v1436
      %v1760 = vunpack.c.l.b16 %v1437
      %v1761 = vunpack.c.l.b16 %v1438
      %v1762 = vunpack.c.l.b16 %v1439
      %v1763 = vunpack.c.l.b16 %v1440
      %v1764 = vunpack.c.l.b16 %v1441
      %v1765 = vunpack.c.l.b16 %v1442
      %v1766 = vunpack.c.l.b16 %v1443
      %v1767 = vunpack.c.l.b16 %v1444
      %v1768 = vpack.c.b16 %v1737, %v1736
      %v1769 = vpack.c.b16 %v1739, %v1738
      %v1770 = vpack.c.b16 %v1741, %v1740
      %v1771 = vpack.c.b16 %v1743, %v1742
      %v1772 = vpack.c.b16 %v1745, %v1744
      %v1773 = vpack.c.b16 %v1747, %v1746
      %v1774 = vpack.c.b16 %v1749, %v1748
      %v1775 = vpack.c.b16 %v1751, %v1750
      %v1776 = vpack.c.b16 %v1753, %v1752
      %v1777 = vpack.c.b16 %v1755, %v1754
      %v1778 = vpack.c.b16 %v1757, %v1756
      %v1779 = vpack.c.b16 %v1759, %v1758
      %v1780 = vpack.c.b16 %v1761, %v1760
      %v1781 = vpack.c.b16 %v1763, %v1762
      %v1782 = vpack.c.b16 %v1765, %v1764
      %v1783 = vpack.c.b16 %v1767, %v1766
      %v1786 = vunpack.c.l.b16 %v1407
      %v1787 = vunpack.c.l.b16 %v1408
      %v1788 = vpack.c.b16 %v1787, %v1786
      %v1790 = vsel %vm1562, %v1768, 0
      %v1793 = vsel %vm1562, %v1769, 0
      %v1796 = vsel %vm1562, %v1770, 0
      %v1799 = vsel %vm1562, %v1771, 0
      %v1802 = vsel %vm1562, %v1772, 0
      %v1805 = vsel %vm1562, %v1773, 0
      %v1808 = vsel %vm1562, %v1774, 0
      %v1811 = vsel %vm1562, %v1775, 0
      %v1814 = vsel %vm1562, %v1776, 0
      %v1817 = vsel %vm1562, %v1777, 0
      %v1820 = vsel %vm1562, %v1778, 0
      %v1823 = vsel %vm1562, %v1779, 0
      %v1826 = vsel %vm1562, %v1780, 0
      %v1829 = vsel %vm1562, %v1781, 0
      %v1832 = vsel %vm1562, %v1782, 0
      %v1835 = vsel %vm1562, %v1783, 0
      %v1838 = vsel %vm1611, %v1788, 0
      %1840 = vmatpush.bf16.msra.mxu0 0
      %1841 = vmatpush.bf16.msra.mxu0 0
      %1842 = vmatpush.bf16.msra.mxu0 0
      %1843 = vmatpush.bf16.msra.mxu0 0
      %1844 = vmatpush.bf16.msra.mxu0 0
      %1845 = vmatpush.bf16.msra.mxu0 0
      %1846 = vmatpush.bf16.msra.mxu0 0
      %1847 = vmatpush.bf16.msra.mxu0 %v1838
      %1848 = vmatmul.bf16.gmra.mxu0 %v1790
      %v1849 = vpop.f32.mrf.mxu0
      %v1850 = vadd.f32 %v1625, %v1849
      %v1851 = vpop.f32.mrf.mxu0
      %v1852 = vadd.f32 %v1627, %v1851
      %1853 = vmatmul.bf16.gmra.mxu0 %v1793
      %v1854 = vpop.f32.mrf.mxu0
      %v1855 = vadd.f32 %v1630, %v1854
      %v1856 = vpop.f32.mrf.mxu0
      %v1857 = vadd.f32 %v1632, %v1856
      %1858 = vmatmul.bf16.gmra.mxu0 %v1796
      %v1859 = vpop.f32.mrf.mxu0
      %v1860 = vadd.f32 %v1635, %v1859
      %v1861 = vpop.f32.mrf.mxu0
      %v1862 = vadd.f32 %v1637, %v1861
      %1863 = vmatmul.bf16.gmra.mxu0 %v1799
      %v1864 = vpop.f32.mrf.mxu0
      %v1865 = vadd.f32 %v1640, %v1864
      %v1866 = vpop.f32.mrf.mxu0
      %v1867 = vadd.f32 %v1642, %v1866
      %1868 = vmatmul.bf16.gmra.mxu0 %v1802
      %v1869 = vpop.f32.mrf.mxu0
      %v1870 = vadd.f32 %v1645, %v1869
      %v1871 = vpop.f32.mrf.mxu0
      %v1872 = vadd.f32 %v1647, %v1871
      %1873 = vmatmul.bf16.gmra.mxu0 %v1805
      %v1874 = vpop.f32.mrf.mxu0
      %v1875 = vadd.f32 %v1650, %v1874
      %v1876 = vpop.f32.mrf.mxu0
      %v1877 = vadd.f32 %v1652, %v1876
      %1878 = vmatmul.bf16.gmra.mxu0 %v1808
      %v1879 = vpop.f32.mrf.mxu0
      %v1880 = vadd.f32 %v1655, %v1879
      %v1881 = vpop.f32.mrf.mxu0
      %v1882 = vadd.f32 %v1657, %v1881
      %1883 = vmatmul.bf16.gmra.mxu0 %v1811
      %v1884 = vpop.f32.mrf.mxu0
      %v1885 = vadd.f32 %v1660, %v1884
      %v1886 = vpop.f32.mrf.mxu0
      %v1887 = vadd.f32 %v1662, %v1886
      %1888 = vmatmul.bf16.gmra.mxu0 %v1814
      %v1889 = vpop.f32.mrf.mxu0
      %v1890 = vadd.f32 %v1665, %v1889
      %v1891 = vpop.f32.mrf.mxu0
      %v1892 = vadd.f32 %v1667, %v1891
      %1893 = vmatmul.bf16.gmra.mxu0 %v1817
      %v1894 = vpop.f32.mrf.mxu0
      %v1895 = vadd.f32 %v1670, %v1894
      %v1896 = vpop.f32.mrf.mxu0
      %v1897 = vadd.f32 %v1672, %v1896
      %1898 = vmatmul.bf16.gmra.mxu0 %v1820
      %v1899 = vpop.f32.mrf.mxu0
      %v1900 = vadd.f32 %v1675, %v1899
      %v1901 = vpop.f32.mrf.mxu0
      %v1902 = vadd.f32 %v1677, %v1901
      %1903 = vmatmul.bf16.gmra.mxu0 %v1823
      %v1904 = vpop.f32.mrf.mxu0
      %v1905 = vadd.f32 %v1680, %v1904
      %v1906 = vpop.f32.mrf.mxu0
      %v1907 = vadd.f32 %v1682, %v1906
      %1908 = vmatmul.bf16.gmra.mxu0 %v1826
      %v1909 = vpop.f32.mrf.mxu0
      %v1910 = vadd.f32 %v1685, %v1909
      %v1911 = vpop.f32.mrf.mxu0
      %v1912 = vadd.f32 %v1687, %v1911
      %1913 = vmatmul.bf16.gmra.mxu0 %v1829
      %v1914 = vpop.f32.mrf.mxu0
      %v1915 = vadd.f32 %v1690, %v1914
      %v1916 = vpop.f32.mrf.mxu0
      %v1917 = vadd.f32 %v1692, %v1916
      %1918 = vmatmul.bf16.gmra.mxu0 %v1832
      %v1919 = vpop.f32.mrf.mxu0
      %v1920 = vadd.f32 %v1695, %v1919
      %v1921 = vpop.f32.mrf.mxu0
      %v1922 = vadd.f32 %v1697, %v1921
      %1923 = vmatmul.bf16.gmra.mxu0 %v1835
      %v1924 = vpop.f32.mrf.mxu0
      %v1925 = vadd.f32 %v1700, %v1924
      %v1926 = vpop.f32.mrf.mxu0
      %v1927 = vadd.f32 %v1702, %v1926
      %1928 = vdwg.mxu0
      %s1929 = scalar_lea.vmem [#allocation2], 16
      %v1930 = vld [vmem:[%s1929] sm:$0xf]
      %v1931 = vld [vmem:[%s1929 + $0x4] sm:$0xf]
      %v1932 = vld [vmem:[%s1929 + $0x8] sm:$0xf]
      %v1933 = vld [vmem:[%s1929 + $0xc] sm:$0xf]
      %v1934 = vld [vmem:[%s1929 + $0x10] sm:$0xf]
      %v1935 = vld [vmem:[%s1929 + $0x14] sm:$0xf]
      %v1936 = vld [vmem:[%s1929 + $0x18] sm:$0xf]
      %v1937 = vld [vmem:[%s1929 + $0x1c] sm:$0xf]
      %v1938 = vld [vmem:[%s1929 + $0x20] sm:$0xf]
      %v1939 = vld [vmem:[%s1929 + $0x24] sm:$0xf]
      %v1940 = vld [vmem:[%s1929 + $0x28] sm:$0xf]
      %v1941 = vld [vmem:[%s1929 + $0x2c] sm:$0xf]
      %v1942 = vld [vmem:[%s1929 + $0x30] sm:$0xf]
      %v1943 = vld [vmem:[%s1929 + $0x34] sm:$0xf]
      %v1944 = vld [vmem:[%s1929 + $0x38] sm:$0xf]
      %v1945 = vld [vmem:[%s1929 + $0x3c] sm:$0xf]
      %v1946 = vld [vmem:[%s1929 + $0x40] sm:$0xf]
      %v1947 = vld [vmem:[%s1929 + $0x44] sm:$0xf]
      %v1948 = vld [vmem:[%s1929 + $0x48] sm:$0xf]
      %v1949 = vld [vmem:[%s1929 + $0x4c] sm:$0xf]
      %v1950 = vld [vmem:[%s1929 + $0x50] sm:$0xf]
      %v1951 = vld [vmem:[%s1929 + $0x54] sm:$0xf]
      %v1952 = vld [vmem:[%s1929 + $0x58] sm:$0xf]
      %v1953 = vld [vmem:[%s1929 + $0x5c] sm:$0xf]
      %v1954 = vld [vmem:[%s1929 + $0x60] sm:$0xf]
      %v1955 = vld [vmem:[%s1929 + $0x64] sm:$0xf]
      %v1956 = vld [vmem:[%s1929 + $0x68] sm:$0xf]
      %v1957 = vld [vmem:[%s1929 + $0x6c] sm:$0xf]
      %v1958 = vld [vmem:[%s1929 + $0x70] sm:$0xf]
      %v1959 = vld [vmem:[%s1929 + $0x74] sm:$0xf]
      %v1960 = vld [vmem:[%s1929 + $0x78] sm:$0xf]
      %v1961 = vld [vmem:[%s1929 + $0x7c] sm:$0xf]
      %v1994 = vunpack.c.l.b16 %v1930
      %v1995 = vunpack.c.l.b16 %v1931
      %v1996 = vunpack.c.l.b16 %v1932
      %v1997 = vunpack.c.l.b16 %v1933
      %v1998 = vunpack.c.l.b16 %v1934
      %v1999 = vunpack.c.l.b16 %v1935
      %v2000 = vunpack.c.l.b16 %v1936
      %v2001 = vunpack.c.l.b16 %v1937
      %v2002 = vunpack.c.l.b16 %v1938
      %v2003 = vunpack.c.l.b16 %v1939
      %v2004 = vunpack.c.l.b16 %v1940
      %v2005 = vunpack.c.l.b16 %v1941
      %v2006 = vunpack.c.l.b16 %v1942
      %v2007 = vunpack.c.l.b16 %v1943
      %v2008 = vunpack.c.l.b16 %v1944
      %v2009 = vunpack.c.l.b16 %v1945
      %v2010 = vunpack.c.l.b16 %v1946
      %v2011 = vunpack.c.l.b16 %v1947
      %v2012 = vunpack.c.l.b16 %v1948
      %v2013 = vunpack.c.l.b16 %v1949
      %v2014 = vunpack.c.l.b16 %v1950
      %v2015 = vunpack.c.l.b16 %v1951
      %v2016 = vunpack.c.l.b16 %v1952
      %v2017 = vunpack.c.l.b16 %v1953
      %v2018 = vunpack.c.l.b16 %v1954
      %v2019 = vunpack.c.l.b16 %v1955
      %v2020 = vunpack.c.l.b16 %v1956
      %v2021 = vunpack.c.l.b16 %v1957
      %v2022 = vunpack.c.l.b16 %v1958
      %v2023 = vunpack.c.l.b16 %v1959
      %v2024 = vunpack.c.l.b16 %v1960
      %v2025 = vunpack.c.l.b16 %v1961
      %v2026 = vpack.c.b16 %v1995, %v1994
      %v2027 = vpack.c.b16 %v1997, %v1996
      %v2028 = vpack.c.b16 %v1999, %v1998
      %v2029 = vpack.c.b16 %v2001, %v2000
      %v2030 = vpack.c.b16 %v2003, %v2002
      %v2031 = vpack.c.b16 %v2005, %v2004
      %v2032 = vpack.c.b16 %v2007, %v2006
      %v2033 = vpack.c.b16 %v2009, %v2008
      %v2034 = vpack.c.b16 %v2011, %v2010
      %v2035 = vpack.c.b16 %v2013, %v2012
      %v2036 = vpack.c.b16 %v2015, %v2014
      %v2037 = vpack.c.b16 %v2017, %v2016
      %v2038 = vpack.c.b16 %v2019, %v2018
      %v2039 = vpack.c.b16 %v2021, %v2020
      %v2040 = vpack.c.b16 %v2023, %v2022
      %v2041 = vpack.c.b16 %v2025, %v2024
      %v2044 = vunpack.c.l.b16 %v1411
      %v2045 = vunpack.c.l.b16 %v1412
      %v2046 = vpack.c.b16 %v2045, %v2044
      %v2048 = vsel %vm1562, %v2026, 0
      %v2051 = vsel %vm1562, %v2027, 0
      %v2054 = vsel %vm1562, %v2028, 0
      %v2057 = vsel %vm1562, %v2029, 0
      %v2060 = vsel %vm1562, %v2030, 0
      %v2063 = vsel %vm1562, %v2031, 0
      %v2066 = vsel %vm1562, %v2032, 0
      %v2069 = vsel %vm1562, %v2033, 0
      %v2072 = vsel %vm1562, %v2034, 0
      %v2075 = vsel %vm1562, %v2035, 0
      %v2078 = vsel %vm1562, %v2036, 0
      %v2081 = vsel %vm1562, %v2037, 0
      %v2084 = vsel %vm1562, %v2038, 0
      %v2087 = vsel %vm1562, %v2039, 0
      %v2090 = vsel %vm1562, %v2040, 0
      %v2093 = vsel %vm1562, %v2041, 0
      %v2096 = vsel %vm1611, %v2046, 0
      %2098 = vmatpush.bf16.msra.mxu0 0
      %2099 = vmatpush.bf16.msra.mxu0 0
      %2100 = vmatpush.bf16.msra.mxu0 0
      %2101 = vmatpush.bf16.msra.mxu0 0
      %2102 = vmatpush.bf16.msra.mxu0 0
      %2103 = vmatpush.bf16.msra.mxu0 0
      %2104 = vmatpush.bf16.msra.mxu0 0
      %2105 = vmatpush.bf16.msra.mxu0 %v2096
      %2106 = vmatmul.bf16.gmra.mxu0 %v2048
      %v2107 = vpop.f32.mrf.mxu0
      %v2108 = vadd.f32 0.0, %v2107
      %v2109 = vpop.f32.mrf.mxu0
      %v2110 = vadd.f32 0.0, %v2109
      %2111 = vmatmul.bf16.gmra.mxu0 %v2051
      %v2112 = vpop.f32.mrf.mxu0
      %v2113 = vadd.f32 0.0, %v2112
      %v2114 = vpop.f32.mrf.mxu0
      %v2115 = vadd.f32 0.0, %v2114
      %2116 = vmatmul.bf16.gmra.mxu0 %v2054
      %v2117 = vpop.f32.mrf.mxu0
      %v2118 = vadd.f32 0.0, %v2117
      %v2119 = vpop.f32.mrf.mxu0
      %v2120 = vadd.f32 0.0, %v2119
      %2121 = vmatmul.bf16.gmra.mxu0 %v2057
      %v2122 = vpop.f32.mrf.mxu0
      %v2123 = vadd.f32 0.0, %v2122
      %v2124 = vpop.f32.mrf.mxu0
      %v2125 = vadd.f32 0.0, %v2124
      %2126 = vmatmul.bf16.gmra.mxu0 %v2060
      %v2127 = vpop.f32.mrf.mxu0
      %v2128 = vadd.f32 0.0, %v2127
      %v2129 = vpop.f32.mrf.mxu0
      %v2130 = vadd.f32 0.0, %v2129
      %2131 = vmatmul.bf16.gmra.mxu0 %v2063
      %v2132 = vpop.f32.mrf.mxu0
      %v2133 = vadd.f32 0.0, %v2132
      %v2134 = vpop.f32.mrf.mxu0
      %v2135 = vadd.f32 0.0, %v2134
      %2136 = vmatmul.bf16.gmra.mxu0 %v2066
      %v2137 = vpop.f32.mrf.mxu0
      %v2138 = vadd.f32 0.0, %v2137
      %v2139 = vpop.f32.mrf.mxu0
      %v2140 = vadd.f32 0.0, %v2139
      %2141 = vmatmul.bf16.gmra.mxu0 %v2069
      %v2142 = vpop.f32.mrf.mxu0
      %v2143 = vadd.f32 0.0, %v2142
      %v2144 = vpop.f32.mrf.mxu0
      %v2145 = vadd.f32 0.0, %v2144
      %2146 = vmatmul.bf16.gmra.mxu0 %v2072
      %v2147 = vpop.f32.mrf.mxu0
      %v2148 = vadd.f32 0.0, %v2147
      %v2149 = vpop.f32.mrf.mxu0
      %v2150 = vadd.f32 0.0, %v2149
      %2151 = vmatmul.bf16.gmra.mxu0 %v2075
      %v2152 = vpop.f32.mrf.mxu0
      %v2153 = vadd.f32 0.0, %v2152
      %v2154 = vpop.f32.mrf.mxu0
      %v2155 = vadd.f32 0.0, %v2154
      %2156 = vmatmul.bf16.gmra.mxu0 %v2078
      %v2157 = vpop.f32.mrf.mxu0
      %v2158 = vadd.f32 0.0, %v2157
      %v2159 = vpop.f32.mrf.mxu0
      %v2160 = vadd.f32 0.0, %v2159
      %2161 = vmatmul.bf16.gmra.mxu0 %v2081
      %v2162 = vpop.f32.mrf.mxu0
      %v2163 = vadd.f32 0.0, %v2162
      %v2164 = vpop.f32.mrf.mxu0
      %v2165 = vadd.f32 0.0, %v2164
      %2166 = vmatmul.bf16.gmra.mxu0 %v2084
      %v2167 = vpop.f32.mrf.mxu0
      %v2168 = vadd.f32 0.0, %v2167
      %v2169 = vpop.f32.mrf.mxu0
      %v2170 = vadd.f32 0.0, %v2169
      %2171 = vmatmul.bf16.gmra.mxu0 %v2087
      %v2172 = vpop.f32.mrf.mxu0
      %v2173 = vadd.f32 0.0, %v2172
      %v2174 = vpop.f32.mrf.mxu0
      %v2175 = vadd.f32 0.0, %v2174
      %2176 = vmatmul.bf16.gmra.mxu0 %v2090
      %v2177 = vpop.f32.mrf.mxu0
      %v2178 = vadd.f32 0.0, %v2177
      %v2179 = vpop.f32.mrf.mxu0
      %v2180 = vadd.f32 0.0, %v2179
      %2181 = vmatmul.bf16.gmra.mxu0 %v2093
      %v2182 = vpop.f32.mrf.mxu0
      %v2183 = vadd.f32 0.0, %v2182
      %v2184 = vpop.f32.mrf.mxu0
      %v2185 = vadd.f32 0.0, %v2184
      %2186 = vdwg.mxu0
      %v2187 = vadd.f32 %v1850, %v2108
      %v2188 = vadd.f32 %v1852, %v2110
      %v2189 = vadd.f32 %v1855, %v2113
      %v2190 = vadd.f32 %v1857, %v2115
      %v2191 = vadd.f32 %v1860, %v2118
      %v2192 = vadd.f32 %v1862, %v2120
      %v2193 = vadd.f32 %v1865, %v2123
      %v2194 = vadd.f32 %v1867, %v2125
      %v2195 = vadd.f32 %v1870, %v2128
      %v2196 = vadd.f32 %v1872, %v2130
      %v2197 = vadd.f32 %v1875, %v2133
      %v2198 = vadd.f32 %v1877, %v2135
      %v2199 = vadd.f32 %v1880, %v2138
      %v2200 = vadd.f32 %v1882, %v2140
      %v2201 = vadd.f32 %v1885, %v2143
      %v2202 = vadd.f32 %v1887, %v2145
      %v2203 = vadd.f32 %v1890, %v2148
      %v2204 = vadd.f32 %v1892, %v2150
      %v2205 = vadd.f32 %v1895, %v2153
      %v2206 = vadd.f32 %v1897, %v2155
      %v2207 = vadd.f32 %v1900, %v2158
      %v2208 = vadd.f32 %v1902, %v2160
      %v2209 = vadd.f32 %v1905, %v2163
      %v2210 = vadd.f32 %v1907, %v2165
      %v2211 = vadd.f32 %v1910, %v2168
      %v2212 = vadd.f32 %v1912, %v2170
      %v2213 = vadd.f32 %v1915, %v2173
      %v2214 = vadd.f32 %v1917, %v2175
      %v2215 = vadd.f32 %v1920, %v2178
      %v2216 = vadd.f32 %v1922, %v2180
      %v2217 = vadd.f32 %v1925, %v2183
      %v2218 = vadd.f32 %v1927, %v2185
      %vm2219 = vcmask 31744
      %2220 = vst.msk [vmem:[%s242] sm:$0xff] %vm2219, %v2187
      %2221 = vst.msk [vmem:[%s242 + $0x8] sm:$0xff] %vm2219, %v2188
      %2222 = vst.msk [vmem:[%s242 + $0x10] sm:$0xff] %vm2219, %v2189
      %2223 = vst.msk [vmem:[%s242 + $0x18] sm:$0xff] %vm2219, %v2190
      %2224 = vst.msk [vmem:[%s242 + $0x20] sm:$0xff] %vm2219, %v2191
      %2225 = vst.msk [vmem:[%s242 + $0x28] sm:$0xff] %vm2219, %v2192
      %2226 = vst.msk [vmem:[%s242 + $0x30] sm:$0xff] %vm2219, %v2193
      %2227 = vst.msk [vmem:[%s242 + $0x38] sm:$0xff] %vm2219, %v2194
      %2228 = vst.msk [vmem:[%s242 + $0x40] sm:$0xff] %vm2219, %v2195
      %2229 = vst.msk [vmem:[%s242 + $0x48] sm:$0xff] %vm2219, %v2196
      %2230 = vst.msk [vmem:[%s242 + $0x50] sm:$0xff] %vm2219, %v2197
      %2231 = vst.msk [vmem:[%s242 + $0x58] sm:$0xff] %vm2219, %v2198
      %2232 = vst.msk [vmem:[%s242 + $0x60] sm:$0xff] %vm2219, %v2199
      %2233 = vst.msk [vmem:[%s242 + $0x68] sm:$0xff] %vm2219, %v2200
      %2234 = vst.msk [vmem:[%s242 + $0x70] sm:$0xff] %vm2219, %v2201
      %2235 = vst.msk [vmem:[%s242 + $0x78] sm:$0xff] %vm2219, %v2202
      %2236 = vst.msk [vmem:[%s242 + $0x80] sm:$0xff] %vm2219, %v2203
      %2237 = vst.msk [vmem:[%s242 + $0x88] sm:$0xff] %vm2219, %v2204
      %2238 = vst.msk [vmem:[%s242 + $0x90] sm:$0xff] %vm2219, %v2205
      %2239 = vst.msk [vmem:[%s242 + $0x98] sm:$0xff] %vm2219, %v2206
      %2240 = vst.msk [vmem:[%s242 + $0xa0] sm:$0xff] %vm2219, %v2207
      %2241 = vst.msk [vmem:[%s242 + $0xa8] sm:$0xff] %vm2219, %v2208
      %2242 = vst.msk [vmem:[%s242 + $0xb0] sm:$0xff] %vm2219, %v2209
      %2243 = vst.msk [vmem:[%s242 + $0xb8] sm:$0xff] %vm2219, %v2210
      %2244 = vst.msk [vmem:[%s242 + $0xc0] sm:$0xff] %vm2219, %v2211
      %2245 = vst.msk [vmem:[%s242 + $0xc8] sm:$0xff] %vm2219, %v2212
      %2246 = vst.msk [vmem:[%s242 + $0xd0] sm:$0xff] %vm2219, %v2213
      %2247 = vst.msk [vmem:[%s242 + $0xd8] sm:$0xff] %vm2219, %v2214
      %2248 = vst.msk [vmem:[%s242 + $0xe0] sm:$0xff] %vm2219, %v2215
      %2249 = vst.msk [vmem:[%s242 + $0xe8] sm:$0xff] %vm2219, %v2216
      %2250 = vst.msk [vmem:[%s242 + $0xf0] sm:$0xff] %vm2219, %v2217
      %2251 = vst.msk [vmem:[%s242 + $0xf8] sm:$0xff] %vm2219, %v2218
      %v2252 = vsel %vm2219, %v2187, 0.0
      %v2253 = vsel %vm2219, %v2188, 0.0
      %v2254 = vadd.f32 %v2252, %v2253
      %v2255 = vsel %vm2219, %v2189, 0.0
      %v2256 = vadd.f32 %v2254, %v2255
      %v2257 = vsel %vm2219, %v2190, 0.0
      %v2258 = vadd.f32 %v2256, %v2257
      %v2259 = vsel %vm2219, %v2191, 0.0
      %v2260 = vadd.f32 %v2258, %v2259
      %v2261 = vsel %vm2219, %v2192, 0.0
      %v2262 = vadd.f32 %v2260, %v2261
      %v2263 = vsel %vm2219, %v2193, 0.0
      %v2264 = vadd.f32 %v2262, %v2263
      %v2265 = vsel %vm2219, %v2194, 0.0
      %v2266 = vadd.f32 %v2264, %v2265
      %v2267 = vsel %vm2219, %v2195, 0.0
      %v2268 = vadd.f32 %v2266, %v2267
      %v2269 = vsel %vm2219, %v2196, 0.0
      %v2270 = vadd.f32 %v2268, %v2269
      %v2271 = vsel %vm2219, %v2197, 0.0
      %v2272 = vadd.f32 %v2270, %v2271
      %v2273 = vsel %vm2219, %v2198, 0.0
      %v2274 = vadd.f32 %v2272, %v2273
      %v2275 = vsel %vm2219, %v2199, 0.0
      %v2276 = vadd.f32 %v2274, %v2275
      %v2277 = vsel %vm2219, %v2200, 0.0
      %v2278 = vadd.f32 %v2276, %v2277
      %v2279 = vsel %vm2219, %v2201, 0.0
      %v2280 = vadd.f32 %v2278, %v2279
      %v2281 = vsel %vm2219, %v2202, 0.0
      %v2282 = vadd.f32 %v2280, %v2281
      %v2283 = vsel %vm2219, %v2203, 0.0
      %v2284 = vadd.f32 %v2282, %v2283
      %v2285 = vsel %vm2219, %v2204, 0.0
      %v2286 = vadd.f32 %v2284, %v2285
      %v2287 = vsel %vm2219, %v2205, 0.0
      %v2288 = vadd.f32 %v2286, %v2287
      %v2289 = vsel %vm2219, %v2206, 0.0
      %v2290 = vadd.f32 %v2288, %v2289
      %v2291 = vsel %vm2219, %v2207, 0.0
      %v2292 = vadd.f32 %v2290, %v2291
      %v2293 = vsel %vm2219, %v2208, 0.0
      %v2294 = vadd.f32 %v2292, %v2293
      %v2295 = vsel %vm2219, %v2209, 0.0
      %v2296 = vadd.f32 %v2294, %v2295
      %v2297 = vsel %vm2219, %v2210, 0.0
      %v2298 = vadd.f32 %v2296, %v2297
      %v2299 = vsel %vm2219, %v2211, 0.0
      %v2300 = vadd.f32 %v2298, %v2299
      %v2301 = vsel %vm2219, %v2212, 0.0
      %v2302 = vadd.f32 %v2300, %v2301
      %v2303 = vsel %vm2219, %v2213, 0.0
      %v2304 = vadd.f32 %v2302, %v2303
      %v2305 = vsel %vm2219, %v2214, 0.0
      %v2306 = vadd.f32 %v2304, %v2305
      %v2307 = vsel %vm2219, %v2215, 0.0
      %v2308 = vadd.f32 %v2306, %v2307
      %v2309 = vsel %vm2219, %v2216, 0.0
      %v2310 = vadd.f32 %v2308, %v2309
      %v2311 = vsel %vm2219, %v2217, 0.0
      %v2312 = vadd.f32 %v2310, %v2311
      %v2313 = vsel %vm2219, %v2218, 0.0
      %v2314 = vadd.f32 %v2312, %v2313
      %v2315 = vrot.slane %v2314, 4
      %v2316 = vadd.f32 %v2314, %v2315
      %v2317 = vrot.slane %v2316, 2
      %v2318 = vadd.f32 %v2316, %v2317
      %v2319 = vrot.slane %v2318, 1
      %v2320 = vadd.f32 %v2318, %v2319
      %vm2321 = vcmask 24576
      %2322 = vst.msk [vmem:[%s249] sm:$0x1] %vm2321, %v2320
      %v2323 = vmul.f32 %v2187, %v2187
      %v2324 = vmul.f32 %v2188, %v2188
      %v2325 = vmul.f32 %v2189, %v2189
      %v2326 = vmul.f32 %v2190, %v2190
      %v2327 = vmul.f32 %v2191, %v2191
      %v2328 = vmul.f32 %v2192, %v2192
      %v2329 = vmul.f32 %v2193, %v2193
      %v2330 = vmul.f32 %v2194, %v2194
      %v2331 = vmul.f32 %v2195, %v2195
      %v2332 = vmul.f32 %v2196, %v2196
      %v2333 = vmul.f32 %v2197, %v2197
      %v2334 = vmul.f32 %v2198, %v2198
      %v2335 = vmul.f32 %v2199, %v2199
      %v2336 = vmul.f32 %v2200, %v2200
      %v2337 = vmul.f32 %v2201, %v2201
      %v2338 = vmul.f32 %v2202, %v2202
      %v2339 = vmul.f32 %v2203, %v2203
      %v2340 = vmul.f32 %v2204, %v2204
      %v2341 = vmul.f32 %v2205, %v2205
      %v2342 = vmul.f32 %v2206, %v2206
      %v2343 = vmul.f32 %v2207, %v2207
      %v2344 = vmul.f32 %v2208, %v2208
      %v2345 = vmul.f32 %v2209, %v2209
      %v2346 = vmul.f32 %v2210, %v2210
      %v2347 = vmul.f32 %v2211, %v2211
      %v2348 = vmul.f32 %v2212, %v2212
      %v2349 = vmul.f32 %v2213, %v2213
      %v2350 = vmul.f32 %v2214, %v2214
      %v2351 = vmul.f32 %v2215, %v2215
      %v2352 = vmul.f32 %v2216, %v2216
      %v2353 = vmul.f32 %v2217, %v2217
      %v2354 = vmul.f32 %v2218, %v2218
      %v2355 = vsel %vm2219, %v2323, 0.0
      %v2356 = vsel %vm2219, %v2324, 0.0
      %v2357 = vadd.f32 %v2355, %v2356
      %v2358 = vsel %vm2219, %v2325, 0.0
      %v2359 = vadd.f32 %v2357, %v2358
      %v2360 = vsel %vm2219, %v2326, 0.0
      %v2361 = vadd.f32 %v2359, %v2360
      %v2362 = vsel %vm2219, %v2327, 0.0
      %v2363 = vadd.f32 %v2361, %v2362
      %v2364 = vsel %vm2219, %v2328, 0.0
      %v2365 = vadd.f32 %v2363, %v2364
      %v2366 = vsel %vm2219, %v2329, 0.0
      %v2367 = vadd.f32 %v2365, %v2366
      %v2368 = vsel %vm2219, %v2330, 0.0
      %v2369 = vadd.f32 %v2367, %v2368
      %v2370 = vsel %vm2219, %v2331, 0.0
      %v2371 = vadd.f32 %v2369, %v2370
      %v2372 = vsel %vm2219, %v2332, 0.0
      %v2373 = vadd.f32 %v2371, %v2372
      %v2374 = vsel %vm2219, %v2333, 0.0
      %v2375 = vadd.f32 %v2373, %v2374
      %v2376 = vsel %vm2219, %v2334, 0.0
      %v2377 = vadd.f32 %v2375, %v2376
      %v2378 = vsel %vm2219, %v2335, 0.0
      %v2379 = vadd.f32 %v2377, %v2378
      %v2380 = vsel %vm2219, %v2336, 0.0
      %v2381 = vadd.f32 %v2379, %v2380
      %v2382 = vsel %vm2219, %v2337, 0.0
      %v2383 = vadd.f32 %v2381, %v2382
      %v2384 = vsel %vm2219, %v2338, 0.0
      %v2385 = vadd.f32 %v2383, %v2384
      %v2386 = vsel %vm2219, %v2339, 0.0
      %v2387 = vadd.f32 %v2385, %v2386
      %v2388 = vsel %vm2219, %v2340, 0.0
      %v2389 = vadd.f32 %v2387, %v2388
      %v2390 = vsel %vm2219, %v2341, 0.0
      %v2391 = vadd.f32 %v2389, %v2390
      %v2392 = vsel %vm2219, %v2342, 0.0
      %v2393 = vadd.f32 %v2391, %v2392
      %v2394 = vsel %vm2219, %v2343, 0.0
      %v2395 = vadd.f32 %v2393, %v2394
      %v2396 = vsel %vm2219, %v2344, 0.0
      %v2397 = vadd.f32 %v2395, %v2396
      %v2398 = vsel %vm2219, %v2345, 0.0
      %v2399 = vadd.f32 %v2397, %v2398
      %v2400 = vsel %vm2219, %v2346, 0.0
      %v2401 = vadd.f32 %v2399, %v2400
      %v2402 = vsel %vm2219, %v2347, 0.0
      %v2403 = vadd.f32 %v2401, %v2402
      %v2404 = vsel %vm2219, %v2348, 0.0
      %v2405 = vadd.f32 %v2403, %v2404
      %v2406 = vsel %vm2219, %v2349, 0.0
      %v2407 = vadd.f32 %v2405, %v2406
      %v2408 = vsel %vm2219, %v2350, 0.0
      %v2409 = vadd.f32 %v2407, %v2408
      %v2410 = vsel %vm2219, %v2351, 0.0
      %v2411 = vadd.f32 %v2409, %v2410
      %v2412 = vsel %vm2219, %v2352, 0.0
      %v2413 = vadd.f32 %v2411, %v2412
      %v2414 = vsel %vm2219, %v2353, 0.0
      %v2415 = vadd.f32 %v2413, %v2414
      %v2416 = vsel %vm2219, %v2354, 0.0
      %v2417 = vadd.f32 %v2415, %v2416
      %v2418 = vrot.slane %v2417, 4
      %v2419 = vadd.f32 %v2417, %v2418
      %v2420 = vrot.slane %v2419, 2
      %v2421 = vadd.f32 %v2419, %v2420
      %v2422 = vrot.slane %v2421, 1
      %v2423 = vadd.f32 %v2421, %v2422
      %2424 = vst.msk [vmem:[%s255] sm:$0x1] %vm2321, %v2423
      %s2425 = smul.u32 16, %s21
      %p2426 = scmp.lt.s32.totalorder %s20, 1
      %s2427 = scalar_select %p2426, %s20, 1
      %p2428 = scmp.lt.s32.totalorder %s2425, 15
      %s2429 = scalar_select %p2428, %s2425, 15
      %s2430 = smul.addr %s2429, 2
      %s2431 = smul.addr %s2427, 32
      %s2432 = sadd.s32 %s2430, %s2431
      %s2433 = smul.addr %s2432, 8
      %s2434 = scalar_lea.vmem %s2, %s2433
      %p2435 = scmp.lt.s32.totalorder %s20, 1
      %s2436 = scalar_select %p2435, %s20, 1
      %p2437 = scmp.lt.s32.totalorder %s21, 0
      %s2438 = scalar_select %p2437, %s21, 0
      %s2439 = sadd.s32 %s2438, %s2436
      %s2440 = scalar_lea.vmem %s3, %s2439
      %p2441 = scmp.lt.s32.totalorder %s20, 1
      %s2442 = scalar_select %p2441, %s20, 1
      %p2443 = scmp.lt.s32.totalorder %s21, 0
      %s2444 = scalar_select %p2443, %s21, 0
      %s2445 = sadd.s32 %s2444, %s2442
      %s2446 = scalar_lea.vmem %s4, %s2445
      // Predicated region
      $region45: #{residual_block_forward_nhwc.3} parent=27 // pred_check
        %p2447 = pneg %p95
      $region46: #{residual_block_forward_nhwc.3} parent=27 // pred_check_branch
        %2449 = sbr.rel (%p2447) target = $region48
      $region47: #{residual_block_forward_nhwc.3} parent=27 // pred_region
        %s2450 = smul.u32 16, %s21
      $region48: #{residual_block_forward_nhwc.3} parent=27 // pred_fallthru
        _
      // Predicated region
      $region49: #{residual_block_forward_nhwc.3} parent=27 // pred_check
        %p2451 = pneg %p123
      $region50: #{residual_block_forward_nhwc.3} parent=27 // pred_check_branch
        %2453 = sbr.rel (%p2451) target = $region52
      $region51: #{residual_block_forward_nhwc.3} parent=27 // pred_region
        _
      $region52: #{residual_block_forward_nhwc.3} parent=27 // pred_fallthru
        _
      // Predicated region
      $region53: #{residual_block_forward_nhwc.3} parent=27 // pred_check
        %p2454 = pneg %p151
      $region54: #{residual_block_forward_nhwc.3} parent=27 // pred_check_branch
        %2456 = sbr.rel (%p2454) target = $region56
      $region55: #{residual_block_forward_nhwc.3} parent=27 // pred_region
        _
      $region56: #{residual_block_forward_nhwc.3} parent=27 // pred_fallthru
        _
    $region28: #{residual_block_forward_nhwc.3} parent=5 // pred_fallthru
      _
    %p2457 = scmp.le.s32.totalorder 2, %s11
    // Predicated region
    $region57: #{residual_block_forward_nhwc.3} parent=5 // pred_check
      %p2458 = pneg %p2457
    $region58: #{residual_block_forward_nhwc.3} parent=5 // pred_check_branch
      %2460 = sbr.rel (%p2458) target = $region60
    $region59: #{residual_block_forward_nhwc.3} parent=5 // pred_region
      %s2461 = ssub.s32 %s11, 2
      // Predicated region
      $region61: #{residual_block_forward_nhwc.3} parent=59 // pred_check
        %p2462 = pneg %p101
      $region62: #{residual_block_forward_nhwc.3} parent=59 // pred_check_branch
        %2464 = sbr.rel (%p2462) target = $region64
      $region63: #{residual_block_forward_nhwc.3} parent=59 // pred_region
        %s2465 = smul.u32 16, %s23
        %p2466 = scmp.lt.s32.totalorder %s22, 1
        %s2467 = scalar_select %p2466, %s22, 1
        %p2468 = scmp.lt.s32.totalorder %s2465, 15
        %s2469 = scalar_select %p2468, %s2465, 15
        %s2470 = smul.addr %s2469, 2
        %s2471 = smul.addr %s2467, 32
        %s2472 = sadd.s32 %s2470, %s2471
        %s2473 = smul.addr %s2472, 8
        %s2474 = scalar_lea.vmem %s2, %s2473
      $region64: #{residual_block_forward_nhwc.3} parent=59 // pred_fallthru
        _
      // Predicated region
      $region65: #{residual_block_forward_nhwc.3} parent=59 // pred_check
        %p2475 = pneg %p129
      $region66: #{residual_block_forward_nhwc.3} parent=59 // pred_check_branch
        %2477 = sbr.rel (%p2475) target = $region68
      $region67: #{residual_block_forward_nhwc.3} parent=59 // pred_region
        %p2478 = scmp.lt.s32.totalorder %s22, 1
        %s2479 = scalar_select %p2478, %s22, 1
        %p2480 = scmp.lt.s32.totalorder %s23, 0
        %s2481 = scalar_select %p2480, %s23, 0
        %s2482 = sadd.s32 %s2481, %s2479
        %s2483 = scalar_lea.vmem %s3, %s2482
      $region68: #{residual_block_forward_nhwc.3} parent=59 // pred_fallthru
        _
      // Predicated region
      $region69: #{residual_block_forward_nhwc.3} parent=59 // pred_check
        %p2484 = pneg %p157
      $region70: #{residual_block_forward_nhwc.3} parent=59 // pred_check_branch
        %2486 = sbr.rel (%p2484) target = $region72
      $region71: #{residual_block_forward_nhwc.3} parent=59 // pred_region
        %p2487 = scmp.lt.s32.totalorder %s22, 1
        %s2488 = scalar_select %p2487, %s22, 1
        %p2489 = scmp.lt.s32.totalorder %s23, 0
        %s2490 = scalar_select %p2489, %s23, 0
        %s2491 = sadd.s32 %s2490, %s2488
        %s2492 = scalar_lea.vmem %s4, %s2491
      $region72: #{residual_block_forward_nhwc.3} parent=59 // pred_fallthru
        _
    $region60: #{residual_block_forward_nhwc.3} parent=5 // pred_fallthru
      _
  $region6: #{residual_block_forward_nhwc.3} parent=0 // loop_footer
    %s15 = sadd.s32 1, %s11
  $region7: #{residual_block_forward_nhwc.3} parent=0 // loop_footer_branch
    %10 = sbr.rel target = $region3
  $region8: #{residual_block_forward_nhwc.3} parent=0 // loop_exit
    _

// kernel: residual_block_forward_nhwc.4
$region0: #{residual_block_forward_nhwc.4}
  #allocation0 [shape = 'u32[]', space=smem, size = 0x4, offset = 0x4, fixed_abs, tag = 'smem constant byte address 0x4 - core index']
  #allocation1 [shape = 'u32[72,128]{1,0:T(1,128)}', space=vmem, size = 0x9000, scoped, tag = 'internal scratch']
  #allocation2 [shape = 'bf16[18,16,12]{2,1,0:T(8,128)(2,1)}', space=vmem, size = 0x12000, scoped, tag = 'scratch operand']
  %s0 = inlined_call_operand.vmem [shape: f32[2,16,16,4], index: 0, kind: input, shape index: {}]
  %s1 = inlined_call_operand.vmem [shape: bf16[3,12,4], index: 1, kind: input, shape index: {}]
  %s2 = inlined_call_operand.vmem [shape: f32[1,4], index: 2, kind: input, shape index: {}]
  %s3 = inlined_call_operand.vmem [shape: f32[1,4], index: 3, kind: input, shape index: {}]
  %s4 = inlined_call_operand.vmem [shape: f32[2,16,16,4], index: 4, kind: output, shape index: {0}]
  %s5 = inlined_call_operand.vmem [shape: f32[2,1,1,4], index: 5, kind: output, shape index: {1}]
  %s6 = inlined_call_operand.vmem [shape: f32[2,1,1,4], index: 6, kind: output, shape index: {2}]
  %7 = xla_tuple %s4, %s5, %s6
  %s8 = sld [smem:[#allocation0]]
  $region81: #{residual_block_forward_nhwc.4} parent=0
    _
  %s10 = ssub.s32 1, %s8
  %s11 = scalar_select 0, %s10, %s8
  loop: start=0, step=1, limit=4
  $region2: #{residual_block_forward_nhwc.4} parent=0 // loop_pre_header
    _
  $region3: #{residual_block_forward_nhwc.4} parent=0 // loop_header
    %s13 = sphi 0, %s17
    %p14 = scmp.ge.s32.totalorder %s13, 4
    %s20 = sphi 0, %s32
    %s21 = sphi 0, %s28
    %s22 = sphi 0, %s20
    %s23 = sphi 0, %s21
    %s24 = sphi 0, %s22
    %s25 = sphi 0, %s23
    %s35 = sphi 0, %s37
    %s38 = sphi 0, %s35
    %s39 = sphi 0, %s38
    %s55 = sphi 0, %s39
    %s59 = sphi 0, %s59
    %s61 = sphi 0, %s59
    %s62 = sphi 0, %s61
    %s76 = sphi 0, %s62
    %s80 = sphi 0, %s80
    %s82 = sphi 0, %s80
    %s83 = sphi 0, %s82
    %s97 = sphi 0, %s83
    %s101 = sphi 0, %s101
    %s103 = sphi 0, %s101
    %s104 = sphi 0, %s103
    %s118 = sphi 0, %s104
    %s126 = sphi 0, %s128
    %s129 = sphi 0, %s126
    %s130 = sphi 0, %s129
    %s146 = sphi 0, %s130
    %s154 = sphi 0, %s156
    %s157 = sphi 0, %s154
    %s158 = sphi 0, %s157
    %s174 = sphi 0, %s158
    %s182 = sphi 0, %s184
    %s185 = sphi 0, %s182
    %s186 = sphi 0, %s185
    %s202 = sphi 0, %s186
  $region4: #{residual_block_forward_nhwc.4} parent=0 // loop_header_branch
    %16 = sbr.rel (%p14) target = $region8
  $region5: #{residual_block_forward_nhwc.4} parent=0 // loop_body
    %s18 = ssub.s32 %s13, 1
    %s19 = ssub.s32 %s13, 2
    %s26 = sadd.s32 1, %s21
    %p27 = scmp.ge.s32.totalorder %s26, 1
    %s28 = scalar_select %p27, 0, %s26
    %s29 = sadd.s32 1, %s20
    %s30 = scalar_select %p27, %s29, %s20
    %p31 = scmp.ge.s32.totalorder %s30, 2
    %s32 = scalar_select %p31, 0, %s30
    %s33 = ssub.s32 %s20, %s32
    %p34 = scmp.eq.s32.totalorder %s33, 0
    %s36 = sadd.s32 %s35, 1
    %s37 = scalar_select %p34, %s35, %s36
    %p40 = pneg %p34
    %p41 = scmp.eq.s32.totalorder %s13, 1
    %p42 = por %p40, %p41
    %p43 = scmp.ne.s32.totalorder %s35, %s38
    %p44 = scmp.eq.s32.totalorder %s13, 0
    %p45 = por %p43, %p44
    %p46 = scmp.ne.s32.totalorder %s35, %s38
    %p47 = scmp.eq.s32.totalorder %s18, 1
    %p48 = por %p46, %p47
    %p49 = scmp.ne.s32.totalorder %s38, %s39
    %p50 = scmp.eq.s32.totalorder %s18, 0
    %p51 = por %p49, %p50
    %p52 = scmp.ne.s32.totalorder %s38, %s39
    %p53 = scmp.eq.s32.totalorder %s19, 1
    %p54 = por %p52, %p53
    %p56 = scmp.ne.s32.totalorder %s39, %s55
    %p57 = scmp.eq.s32.totalorder %s19, 0
    %p58 = por %p56, %p57
    %s60 = sadd.s32 %s59, 1
    %p63 = scmp.eq.s32.totalorder %s13, 1
    %p64 = scmp.ne.s32.totalorder %s59, %s61
    %p65 = scmp.eq.s32.totalorder %s13, 0
    %p66 = por %p64, %p65
    %p67 = scmp.ne.s32.totalorder %s59, %s61
    %p68 = scmp.eq.s32.totalorder %s18, 1
    %p69 = por %p67, %p68
    %p70 = scmp.ne.s32.totalorder %s61, %s62
    %p71 = scmp.eq.s32.totalorder %s18, 0
    %p72 = por %p70, %p71
    %p73 = scmp.ne.s32.totalorder %s61, %s62
    %p74 = scmp.eq.s32.totalorder %s19, 1
    %p75 = por %p73, %p74
    %p77 = scmp.ne.s32.totalorder %s62, %s76
    %p78 = scmp.eq.s32.totalorder %s19, 0
    %p79 = por %p77, %p78
    %s81 = sadd.s32 %s80, 1
    %p84 = scmp.eq.s32.totalorder %s13, 1
    %p85 = scmp.ne.s32.totalorder %s80, %s82
    %p86 = scmp.eq.s32.totalorder %s13, 0
    %p87 = por %p85, %p86
    %p88 = scmp.ne.s32.totalorder %s80, %s82
    %p89 = scmp.eq.s32.totalorder %s18, 1
    %p90 = por %p88, %p89
    %p91 = scmp.ne.s32.totalorder %s82, %s83
    %p92 = scmp.eq.s32.totalorder %s18, 0
    %p93 = por %p91, %p92
    %p94 = scmp.ne.s32.totalorder %s82, %s83
    %p95 = scmp.eq.s32.totalorder %s19, 1
    %p96 = por %p94, %p95
    %p98 = scmp.ne.s32.totalorder %s83, %s97
    %p99 = scmp.eq.s32.totalorder %s19, 0
    %p100 = por %p98, %p99
    %s102 = sadd.s32 %s101, 1
    %p105 = scmp.eq.s32.totalorder %s13, 1
    %p106 = scmp.ne.s32.totalorder %s101, %s103
    %p107 = scmp.eq.s32.totalorder %s13, 0
    %p108 = por %p106, %p107
    %p109 = scmp.ne.s32.totalorder %s101, %s103
    %p110 = scmp.eq.s32.totalorder %s18, 1
    %p111 = por %p109, %p110
    %p112 = scmp.ne.s32.totalorder %s103, %s104
    %p113 = scmp.eq.s32.totalorder %s18, 0
    %p114 = por %p112, %p113
    %p115 = scmp.ne.s32.totalorder %s103, %s104
    %p116 = scmp.eq.s32.totalorder %s19, 1
    %p117 = por %p115, %p116
    %p119 = scmp.ne.s32.totalorder %s104, %s118
    %p120 = scmp.eq.s32.totalorder %s19, 0
    %p121 = por %p119, %p120
    %s122 = ssub.s32 %s20, %s32
    %s123 = ssub.s32 %s21, %s28
    %s124 = sor.u32 %s122, %s123
    %p125 = scmp.eq.s32.totalorder %s124, 0
    %s127 = sadd.s32 %s126, 1
    %s128 = scalar_select %p125, %s126, %s127
    %p131 = pneg %p125
    %p132 = scmp.eq.s32.totalorder %s13, 1
    %p133 = por %p131, %p132
    %p134 = scmp.ne.s32.totalorder %s126, %s129
    %p135 = scmp.eq.s32.totalorder %s13, 0
    %p136 = por %p134, %p135
    %p137 = scmp.ne.s32.totalorder %s126, %s129
    %p138 = scmp.eq.s32.totalorder %s18, 1
    %p139 = por %p137, %p138
    %p140 = scmp.ne.s32.totalorder %s129, %s130
    %p141 = scmp.eq.s32.totalorder %s18, 0
    %p142 = por %p140, %p141
    %p143 = scmp.ne.s32.totalorder %s129, %s130
    %p144 = scmp.eq.s32.totalorder %s19, 1
    %p145 = por %p143, %p144
    %p147 = scmp.ne.s32.totalorder %s130, %s146
    %p148 = scmp.eq.s32.totalorder %s19, 0
    %p149 = por %p147, %p148
    %s150 = ssub.s32 %s20, %s32
    %s151 = ssub.s32 %s21, %s28
    %s152 = sor.u32 %s150, %s151
    %p153 = scmp.eq.s32.totalorder %s152, 0
    %s155 = sadd.s32 %s154, 1
    %s156 = scalar_select %p153, %s154, %s155
    %p159 = pneg %p153
    %p160 = scmp.eq.s32.totalorder %s13, 1
    %p161 = por %p159, %p160
    %p162 = scmp.ne.s32.totalorder %s154, %s157
    %p163 = scmp.eq.s32.totalorder %s13, 0
    %p164 = por %p162, %p163
    %p165 = scmp.ne.s32.totalorder %s154, %s157
    %p166 = scmp.eq.s32.totalorder %s18, 1
    %p167 = por %p165, %p166
    %p168 = scmp.ne.s32.totalorder %s157, %s158
    %p169 = scmp.eq.s32.totalorder %s18, 0
    %p170 = por %p168, %p169
    %p171 = scmp.ne.s32.totalorder %s157, %s158
    %p172 = scmp.eq.s32.totalorder %s19, 1
    %p173 = por %p171, %p172
    %p175 = scmp.ne.s32.totalorder %s158, %s174
    %p176 = scmp.eq.s32.totalorder %s19, 0
    %p177 = por %p175, %p176
    %s178 = ssub.s32 %s20, %s32
    %s179 = ssub.s32 %s21, %s28
    %s180 = sor.u32 %s178, %s179
    %p181 = scmp.eq.s32.totalorder %s180, 0
    %s183 = sadd.s32 %s182, 1
    %s184 = scalar_select %p181, %s182, %s183
    %p187 = pneg %p181
    %p188 = scmp.eq.s32.totalorder %s13, 1
    %p189 = por %p187, %p188
    %p190 = scmp.ne.s32.totalorder %s182, %s185
    %p191 = scmp.eq.s32.totalorder %s13, 0
    %p192 = por %p190, %p191
    %p193 = scmp.ne.s32.totalorder %s182, %s185
    %p194 = scmp.eq.s32.totalorder %s18, 1
    %p195 = por %p193, %p194
    %p196 = scmp.ne.s32.totalorder %s185, %s186
    %p197 = scmp.eq.s32.totalorder %s18, 0
    %p198 = por %p196, %p197
    %p199 = scmp.ne.s32.totalorder %s185, %s186
    %p200 = scmp.eq.s32.totalorder %s19, 1
    %p201 = por %p199, %p200
    %p203 = scmp.ne.s32.totalorder %s186, %s202
    %p204 = scmp.eq.s32.totalorder %s19, 0
    %p205 = por %p203, %p204
    %p206 = scmp.le.s32.totalorder 1, %s13
    %p207 = scmp.lt.s32.totalorder %s13, 3
    %p208 = pnand %p206, %p207
    %p209 = pneg %p208
    // Predicated region
    $region9: #{residual_block_forward_nhwc.4} parent=5 // pred_check
      _
    $region10: #{residual_block_forward_nhwc.4} parent=5 // pred_check_branch
      %211 = sbr.rel (%p208) target = $region12
    $region11: #{residual_block_forward_nhwc.4} parent=5 // pred_region
      %s212 = ssub.s32 %s13, 1
      // Predicated region
      $region13: #{residual_block_forward_nhwc.4} parent=11 // pred_check
        %p213 = pneg %p72
      $region14: #{residual_block_forward_nhwc.4} parent=11 // pred_check_branch
        %215 = sbr.rel (%p213) target = $region16
      $region15: #{residual_block_forward_nhwc.4} parent=11 // pred_region
        _
      $region16: #{residual_block_forward_nhwc.4} parent=11 // pred_fallthru
        _
      // Predicated region
      $region17: #{residual_block_forward_nhwc.4} parent=11 // pred_check
        %p216 = pneg %p93
      $region18: #{residual_block_forward_nhwc.4} parent=11 // pred_check_branch
        %218 = sbr.rel (%p216) target = $region20
      $region19: #{residual_block_forward_nhwc.4} parent=11 // pred_region
        _
      $region20: #{residual_block_forward_nhwc.4} parent=11 // pred_fallthru
        _
      // Predicated region
      $region21: #{residual_block_forward_nhwc.4} parent=11 // pred_check
        %p219 = pneg %p114
      $region22: #{residual_block_forward_nhwc.4} parent=11 // pred_check_branch
        %221 = sbr.rel (%p219) target = $region24
      $region23: #{residual_block_forward_nhwc.4} parent=11 // pred_region
        _
      $region24: #{residual_block_forward_nhwc.4} parent=11 // pred_fallthru
        _
    $region12: #{residual_block_forward_nhwc.4} parent=5 // pred_fallthru
      _
    %p222 = scmp.lt.s32.totalorder %s13, 2
    // Predicated region
    $region25: #{residual_block_forward_nhwc.4} parent=5 // pred_check
      %p223 = pneg %p222
    $region26: #{residual_block_forward_nhwc.4} parent=5 // pred_check_branch
      %225 = sbr.rel (%p223) target = $region28
    $region27: #{residual_block_forward_nhwc.4} parent=5 // pred_region
      // Predicated region
      $region29: #{residual_block_forward_nhwc.4} parent=27 // pred_check
        %p226 = pneg %p45
      $region30: #{residual_block_forward_nhwc.4} parent=27 // pred_check_branch
        %228 = sbr.rel (%p226) target = $region32
      $region31: #{residual_block_forward_nhwc.4} parent=27 // pred_region
        %p229 = scmp.lt.s32.totalorder %s20, 1
        %s230 = scalar_select %p229, %s20, 1
        %s231 = smul.addr %s230, 32
        %s232 = smul.addr %s231, 8
        %s233 = scalar_lea.vmem %s0, %s232
      $region32: #{residual_block_forward_nhwc.4} parent=27 // pred_fallthru
        _
    $region28: #{residual_block_forward_nhwc.4} parent=5 // pred_fallthru
      _
    %p234 = scmp.le.s32.totalorder 1, %s13
    %p235 = scmp.lt.s32.totalorder %s13, 3
    %p236 = pnand %p234, %p235
    %p237 = pneg %p236
    // Predicated region
    $region33: #{residual_block_forward_nhwc.4} parent=5 // pred_check
      _
    $region34: #{residual_block_forward_nhwc.4} parent=5 // pred_check_branch
      %239 = sbr.rel (%p236) target = $region36
    $region35: #{residual_block_forward_nhwc.4} parent=5 // pred_region
      %s240 = ssub.s32 %s13, 1
      %p241 = scmp.lt.s32.totalorder %s22, 1
      %s242 = scalar_select %p241, %s22, 1
      %s243 = smul.addr %s242, 32
      %s244 = smul.addr %s243, 8
      %s245 = scalar_lea.vmem %s0, %s244
      %p246 = pneg %p51
      %p247 = pneg %p48
      %p248 = pneg %p72
      %p249 = pneg %p69
      %p250 = pneg %p93
      %p251 = pneg %p90
      %p252 = pneg %p114
      %p253 = pneg %p111
      %p254 = pneg %p142
      %p255 = pneg %p139
      %s256 = smul.u32 16, %s23
      %p257 = scmp.lt.s32.totalorder %s22, 1
      %s258 = scalar_select %p257, %s22, 1
      %p259 = scmp.lt.s32.totalorder %s256, 15
      %s260 = scalar_select %p259, %s256, 15
      %s261 = smul.addr %s260, 2
      %s262 = smul.addr %s258, 32
      %s263 = sadd.s32 %s261, %s262
      %s264 = smul.addr %s263, 8
      %s265 = scalar_lea.vmem %s4, %s264
      %p266 = pneg %p170
      %p267 = pneg %p167
      %p268 = scmp.lt.s32.totalorder %s22, 1
      %s269 = scalar_select %p268, %s22, 1
      %p270 = scmp.lt.s32.totalorder %s23, 0
      %s271 = scalar_select %p270, %s23, 0
      %s272 = sadd.s32 %s271, %s269
      %s273 = scalar_lea.vmem %s5, %s272
      %p274 = pneg %p198
      %p275 = pneg %p195
      %p276 = scmp.lt.s32.totalorder %s22, 1
      %s277 = scalar_select %p276, %s22, 1
      %p278 = scmp.lt.s32.totalorder %s23, 0
      %s279 = scalar_select %p278, %s23, 0
      %s280 = sadd.s32 %s279, %s277
      %s281 = scalar_lea.vmem %s6, %s280
      %p282 = scmp.lt.s32.totalorder %s22, 1
      %s283 = scalar_select %p282, %s22, 1
      %s284 = smul.addr %s283, 32
      %s285 = smul.addr %s284, 8
      %s286 = scalar_lea.vmem %s0, %s285
      %s287 = smul.u32 16, %s23
      %p288 = scmp.lt.s32.totalorder %s22, 1
      %s289 = scalar_select %p288, %s22, 1
      %p290 = scmp.lt.s32.totalorder %s287, 15
      %s291 = scalar_select %p290, %s287, 15
      %s292 = smul.addr %s291, 2
      %s293 = smul.addr %s289, 32
      %s294 = sadd.s32 %s292, %s293
      %s295 = smul.addr %s294, 8
      %s296 = scalar_lea.vmem %s4, %s295
      %s297 = smul.u32 16, %s23
      %p298 = scmp.lt.s32.totalorder %s22, 1
      %s299 = scalar_select %p298, %s22, 1
      %p300 = scmp.lt.s32.totalorder %s23, 0
      %s301 = scalar_select %p300, %s23, 0
      %s302 = sadd.s32 %s301, %s299
      %s303 = scalar_lea.vmem %s5, %s302
      %p304 = scmp.lt.s32.totalorder %s22, 1
      %s305 = scalar_select %p304, %s22, 1
      %p306 = scmp.lt.s32.totalorder %s23, 0
      %s307 = scalar_select %p306, %s23, 0
      %s308 = sadd.s32 %s307, %s305
      %s309 = scalar_lea.vmem %s6, %s308
      %s311 = smul.u32 %s23, 16
      %vm312 = vcmask 24576
      %vm313 = vsmask.f32 256
      %vm314 = vmand %vm312, %vm313
      %v315 = vld [vmem:[#allocation2] sm:$0x1]
      %v316 = vsel %vm314, 0, %v315
      %317 = vst [vmem:[#allocation2] sm:$0x1] %v316
      %v318 = vld [vmem:[#allocation2 + $0x8] sm:$0x1]
      %v319 = vsel %vm314, 0, %v318
      %320 = vst [vmem:[#allocation2 + $0x8] sm:$0x1] %v319
      %v321 = vld [vmem:[#allocation2 + $0x10] sm:$0x1]
      %v322 = vsel %vm314, 0, %v321
      %323 = vst [vmem:[#allocation2 + $0x10] sm:$0x1] %v322
      %v324 = vld [vmem:[#allocation2 + $0x18] sm:$0x1]
      %v325 = vsel %vm314, 0, %v324
      %326 = vst [vmem:[#allocation2 + $0x18] sm:$0x1] %v325
      %v327 = vld [vmem:[#allocation2 + $0x20] sm:$0x1]
      %v328 = vsel %vm314, 0, %v327
      %329 = vst [vmem:[#allocation2 + $0x20] sm:$0x1] %v328
      %v330 = vld [vmem:[#allocation2 + $0x28] sm:$0x1]
      %v331 = vsel %vm314, 0, %v330
      %332 = vst [vmem:[#allocation2 + $0x28] sm:$0x1] %v331
      %v333 = vld [vmem:[#allocation2 + $0x30] sm:$0x1]
      %v334 = vsel %vm314, 0, %v333
      %335 = vst [vmem:[#allocation2 + $0x30] sm:$0x1] %v334
      %v336 = vld [vmem:[#allocation2 + $0x38] sm:$0x1]
      %v337 = vsel %vm314, 0, %v336
      %338 = vst [vmem:[#allocation2 + $0x38] sm:$0x1] %v337
      %v339 = vld [vmem:[#allocation2 + $0x40] sm:$0x1]
      %v340 = vsel %vm314, 0, %v339
      %341 = vst [vmem:[#allocation2 + $0x40] sm:$0x1] %v340
      %v342 = vld [vmem:[#allocation2 + $0x48] sm:$0x1]
      %v343 = vsel %vm314, 0, %v342
      %344 = vst [vmem:[#allocation2 + $0x48] sm:$0x1] %v343
      %v345 = vld [vmem:[#allocation2 + $0x50] sm:$0x1]
      %v346 = vsel %vm314, 0, %v345
      %347 = vst [vmem:[#allocation2 + $0x50] sm:$0x1] %v346
      %v348 = vld [vmem:[#allocation2 + $0x58] sm:$0x1]
      %v349 = vsel %vm314, 0, %v348
      %350 = vst [vmem:[#allocation2 + $0x58] sm:$0x1] %v349
      %v351 = vld [vmem:[#allocation2 + $0x60] sm:$0x1]
      %v352 = vsel %vm314, 0, %v351
      %353 = vst [vmem:[#allocation2 + $0x60] sm:$0x1] %v352
      %v354 = vld [vmem:[#allocation2 + $0x68] sm:$0x1]
      %v355 = vsel %vm314, 0, %v354
      %356 = vst [vmem:[#allocation2 + $0x68] sm:$0x1] %v355
      %v357 = vld [vmem:[#allocation2 + $0x70] sm:$0x1]
      %v358 = vsel %vm314, 0, %v357
      %359 = vst [vmem:[#allocation2 + $0x70] sm:$0x1] %v358
      %v360 = vld [vmem:[#allocation2 + $0x78] sm:$0x1]
      %v361 = vsel %vm314, 0, %v360
      %362 = vst [vmem:[#allocation2 + $0x78] sm:$0x1] %v361
      %v363 = vld [vmem:[#allocation2 + $0x80] sm:$0x1]
      %v364 = vsel %vm314, 0, %v363
      %365 = vst [vmem:[#allocation2 + $0x80] sm:$0x1] %v364
      %v366 = vld [vmem:[#allocation2 + $0x88] sm:$0x1]
      %v367 = vsel %vm314, 0, %v366
      %368 = vst [vmem:[#allocation2 + $0x88] sm:$0x1] %v367
      %vm369 = vcmask 93251
      %vm370 = vsmask.f32 7950
      %vm371 = vmand %vm369, %vm370
      %v372 = vld [vmem:[#allocation2 + $0x4] sm:$0x8]
      %v373 = vsel %vm371, 0, %v372
      %374 = vst [vmem:[#allocation2 + $0x4] sm:$0x8] %v373
      %v375 = vld [vmem:[#allocation2 + $0xc] sm:$0x8]
      %v376 = vsel %vm371, 0, %v375
      %377 = vst [vmem:[#allocation2 + $0xc] sm:$0x8] %v376
      %v378 = vld [vmem:[#allocation2 + $0x14] sm:$0x8]
      %v379 = vsel %vm371, 0, %v378
      %380 = vst [vmem:[#allocation2 + $0x14] sm:$0x8] %v379
      %v381 = vld [vmem:[#allocation2 + $0x1c] sm:$0x8]
      %v382 = vsel %vm371, 0, %v381
      %383 = vst [vmem:[#allocation2 + $0x1c] sm:$0x8] %v382
      %v384 = vld [vmem:[#allocation2 + $0x24] sm:$0x8]
      %v385 = vsel %vm371, 0, %v384
      %386 = vst [vmem:[#allocation2 + $0x24] sm:$0x8] %v385
      %v387 = vld [vmem:[#allocation2 + $0x2c] sm:$0x8]
      %v388 = vsel %vm371, 0, %v387
      %389 = vst [vmem:[#allocation2 + $0x2c] sm:$0x8] %v388
      %v390 = vld [vmem:[#allocation2 + $0x34] sm:$0x8]
      %v391 = vsel %vm371, 0, %v390
      %392 = vst [vmem:[#allocation2 + $0x34] sm:$0x8] %v391
      %v393 = vld [vmem:[#allocation2 + $0x3c] sm:$0x8]
      %v394 = vsel %vm371, 0, %v393
      %395 = vst [vmem:[#allocation2 + $0x3c] sm:$0x8] %v394
      %v396 = vld [vmem:[#allocation2 + $0x44] sm:$0x8]
      %v397 = vsel %vm371, 0, %v396
      %398 = vst [vmem:[#allocation2 + $0x44] sm:$0x8] %v397
      %v399 = vld [vmem:[#allocation2 + $0x4c] sm:$0x8]
      %v400 = vsel %vm371, 0, %v399
      %401 = vst [vmem:[#allocation2 + $0x4c] sm:$0x8] %v400
      %v402 = vld [vmem:[#allocation2 + $0x54] sm:$0x8]
      %v403 = vsel %vm371, 0, %v402
      %404 = vst [vmem:[#allocation2 + $0x54] sm:$0x8] %v403
      %v405 = vld [vmem:[#allocation2 + $0x5c] sm:$0x8]
      %v406 = vsel %vm371, 0, %v405
      %407 = vst [vmem:[#allocation2 + $0x5c] sm:$0x8] %v406
      %v408 = vld [vmem:[#allocation2 + $0x64] sm:$0x8]
      %v409 = vsel %vm371, 0, %v408
      %410 = vst [vmem:[#allocation2 + $0x64] sm:$0x8] %v409
      %v411 = vld [vmem:[#allocation2 + $0x6c] sm:$0x8]
      %v412 = vsel %vm371, 0, %v411
      %413 = vst [vmem:[#allocation2 + $0x6c] sm:$0x8] %v412
      %v414 = vld [vmem:[#allocation2 + $0x74] sm:$0x8]
      %v415 = vsel %vm371, 0, %v414
      %416 = vst [vmem:[#allocation2 + $0x74] sm:$0x8] %v415
      %v417 = vld [vmem:[#allocation2 + $0x7c] sm:$0x8]
      %v418 = vsel %vm371, 0, %v417
      %419 = vst [vmem:[#allocation2 + $0x7c] sm:$0x8] %v418
      %v420 = vld [vmem:[#allocation2 + $0x84] sm:$0x8]
      %v421 = vsel %vm371, 0, %v420
      %422 = vst [vmem:[#allocation2 + $0x84] sm:$0x8] %v421
      %v423 = vld [vmem:[#allocation2 + $0x8c] sm:$0x8]
      %v424 = vsel %vm371, 0, %v423
      %425 = vst [vmem:[#allocation2 + $0x8c] sm:$0x8] %v424
      %s426 = smul.u32 %s311, 16
      %s427 = scalar_lea.vmem %s286, %s426
      %v428 = vld [vmem:[%s427] sm:$0xff]
      %v429 = vld [vmem:[%s427 + $0x8] sm:$0xff]
      %v430 = vld [vmem:[%s427 + $0x10] sm:$0xff]
      %v431 = vld [vmem:[%s427 + $0x18] sm:$0xff]
      %v432 = vld [vmem:[%s427 + $0x20] sm:$0xff]
      %v433 = vld [vmem:[%s427 + $0x28] sm:$0xff]
      %v434 = vld [vmem:[%s427 + $0x30] sm:$0xff]
      %v435 = vld [vmem:[%s427 + $0x38] sm:$0xff]
      %v436 = vld [vmem:[%s427 + $0x40] sm:$0xff]
      %v437 = vld [vmem:[%s427 + $0x48] sm:$0xff]
      %v438 = vld [vmem:[%s427 + $0x50] sm:$0xff]
      %v439 = vld [vmem:[%s427 + $0x58] sm:$0xff]
      %v440 = vld [vmem:[%s427 + $0x60] sm:$0xff]
      %v441 = vld [vmem:[%s427 + $0x68] sm:$0xff]
      %v442 = vld [vmem:[%s427 + $0x70] sm:$0xff]
      %v443 = vld [vmem:[%s427 + $0x78] sm:$0xff]
      %v444 = vld [vmem:[%s427 + $0x80] sm:$0xff]
      %v445 = vld [vmem:[%s427 + $0x88] sm:$0xff]
      %v446 = vld [vmem:[%s427 + $0x90] sm:$0xff]
      %v447 = vld [vmem:[%s427 + $0x98] sm:$0xff]
      %v448 = vld [vmem:[%s427 + $0xa0] sm:$0xff]
      %v449 = vld [vmem:[%s427 + $0xa8] sm:$0xff]
      %v450 = vld [vmem:[%s427 + $0xb0] sm:$0xff]
      %v451 = vld [vmem:[%s427 + $0xb8] sm:$0xff]
      %v452 = vld [vmem:[%s427 + $0xc0] sm:$0xff]
      %v453 = vld [vmem:[%s427 + $0xc8] sm:$0xff]
      %v454 = vld [vmem:[%s427 + $0xd0] sm:$0xff]
      %v455 = vld [vmem:[%s427 + $0xd8] sm:$0xff]
      %v456 = vld [vmem:[%s427 + $0xe0] sm:$0xff]
      %v457 = vld [vmem:[%s427 + $0xe8] sm:$0xff]
      %v458 = vld [vmem:[%s427 + $0xf0] sm:$0xff]
      %v459 = vld [vmem:[%s427 + $0xf8] sm:$0xff]
      %v460 = vld [vmem:[%s2] sm:$0x1]
      %v461 = vld [vmem:[%s3] sm:$0x1]
      %v463 = vperm.slane %v460, 0
      %v465 = vmul.f32 %v428, %v463
      %v466 = vmul.f32 %v429, %v463
      %v467 = vmul.f32 %v430, %v463
      %v468 = vmul.f32 %v431, %v463
      %v469 = vmul.f32 %v432, %v463
      %v470 = vmul.f32 %v433, %v463
      %v471 = vmul.f32 %v434, %v463
      %v472 = vmul.f32 %v435, %v463
      %v473 = vmul.f32 %v436, %v463
      %v474 = vmul.f32 %v437, %v463
      %v475 = vmul.f32 %v438, %v463
      %v476 = vmul.f32 %v439, %v463
      %v477 = vmul.f32 %v440, %v463
      %v478 = vmul.f32 %v441, %v463
      %v479 = vmul.f32 %v442, %v463
      %v480 = vmul.f32 %v443, %v463
      %v481 = vmul.f32 %v444, %v463
      %v482 = vmul.f32 %v445, %v463
      %v483 = vmul.f32 %v446, %v463
      %v484 = vmul.f32 %v447, %v463
      %v485 = vmul.f32 %v448, %v463
      %v486 = vmul.f32 %v449, %v463
      %v487 = vmul.f32 %v450, %v463
      %v488 = vmul.f32 %v451, %v463
      %v489 = vmul.f32 %v452, %v463
      %v490 = vmul.f32 %v453, %v463
      %v491 = vmul.f32 %v454, %v463
      %v492 = vmul.f32 %v455, %v463
      %v493 = vmul.f32 %v456, %v463
      %v494 = vmul.f32 %v457, %v463
      %v495 = vmul.f32 %v458, %v463
      %v496 = vmul.f32 %v459, %v463
      %v498 = vperm.slane %v461, 0
      %v500 = vadd.f32 %v465, %v498
      %v501 = vadd.f32 %v466, %v498
      %v502 = vadd.f32 %v467, %v498
      %v503 = vadd.f32 %v468, %v498
      %v504 = vadd.f32 %v469, %v498
      %v505 = vadd.f32 %v470, %v498
      %v506 = vadd.f32 %v471, %v498
      %v507 = vadd.f32 %v472, %v498
      %v508 = vadd.f32 %v473, %v498
      %v509 = vadd.f32 %v474, %v498
      %v510 = vadd.f32 %v475, %v498
      %v511 = vadd.f32 %v476, %v498
      %v512 = vadd.f32 %v477, %v498
      %v513 = vadd.f32 %v478, %v498
      %v514 = vadd.f32 %v479, %v498
      %v515 = vadd.f32 %v480, %v498
      %v516 = vadd.f32 %v481, %v498
      %v517 = vadd.f32 %v482, %v498
      %v518 = vadd.f32 %v483, %v498
      %v519 = vadd.f32 %v484, %v498
      %v520 = vadd.f32 %v485, %v498
      %v521 = vadd.f32 %v486, %v498
      %v522 = vadd.f32 %v487, %v498
      %v523 = vadd.f32 %v488, %v498
      %v524 = vadd.f32 %v489, %v498
      %v525 = vadd.f32 %v490, %v498
      %v526 = vadd.f32 %v491, %v498
      %v527 = vadd.f32 %v492, %v498
      %v528 = vadd.f32 %v493, %v498
      %v529 = vadd.f32 %v494, %v498
      %v530 = vadd.f32 %v495, %v498
      %v531 = vadd.f32 %v496, %v498
      %v532 = vmax.f32 %v500, 0.0
      %v533 = vmax.f32 %v501, 0.0
      %v534 = vmax.f32 %v502, 0.0
      %v535 = vmax.f32 %v503, 0.0
      %v536 = vmax.f32 %v504, 0.0
      %v537 = vmax.f32 %v505, 0.0
      %v538 = vmax.f32 %v506, 0.0
      %v539 = vmax.f32 %v507, 0.0
      %v540 = vmax.f32 %v508, 0.0
      %v541 = vmax.f32 %v509, 0.0
      %v542 = vmax.f32 %v510, 0.0
      %v543 = vmax.f32 %v511, 0.0
      %v544 = vmax.f32 %v512, 0.0
      %v545 = vmax.f32 %v513, 0.0
      %v546 = vmax.f32 %v514, 0.0
      %v547 = vmax.f32 %v515, 0.0
      %v548 = vmax.f32 %v516, 0.0
      %v549 = vmax.f32 %v517, 0.0
      %v550 = vmax.f32 %v518, 0.0
      %v551 = vmax.f32 %v519, 0.0
      %v552 = vmax.f32 %v520, 0.0
      %v553 = vmax.f32 %v521, 0.0
      %v554 = vmax.f32 %v522, 0.0
      %v555 = vmax.f32 %v523, 0.0
      %v556 = vmax.f32 %v524, 0.0
      %v557 = vmax.f32 %v525, 0.0
      %v558 = vmax.f32 %v526, 0.0
      %v559 = vmax.f32 %v527, 0.0
      %v560 = vmax.f32 %v528, 0.0
      %v561 = vmax.f32 %v529, 0.0
      %v562 = vmax.f32 %v530, 0.0
      %v563 = vmax.f32 %v531, 0.0
      %v564 = vpack.c.bf16 %v532, %v532
      %v565 = vpack.c.bf16 %v533, %v533
      %v566 = vpack.c.bf16 %v534, %v534
      %v567 = vpack.c.bf16 %v535, %v535
      %v568 = vpack.c.bf16 %v536, %v536
      %v569 = vpack.c.bf16 %v537, %v537
      %v570 = vpack.c.bf16 %v538, %v538
      %v571 = vpack.c.bf16 %v539, %v539
      %v572 = vpack.c.bf16 %v540, %v540
      %v573 = vpack.c.bf16 %v541, %v541
      %v574 = vpack.c.bf16 %v542, %v542
      %v575 = vpack.c.bf16 %v543, %v543
      %v576 = vpack.c.bf16 %v544, %v544
      %v577 = vpack.c.bf16 %v545, %v545
      %v578 = vpack.c.bf16 %v546, %v546
      %v579 = vpack.c.bf16 %v547, %v547
      %v580 = vpack.c.bf16 %v548, %v548
      %v581 = vpack.c.bf16 %v549, %v549
      %v582 = vpack.c.bf16 %v550, %v550
      %v583 = vpack.c.bf16 %v551, %v551
      %v584 = vpack.c.bf16 %v552, %v552
      %v585 = vpack.c.bf16 %v553, %v553
      %v586 = vpack.c.bf16 %v554, %v554
      %v587 = vpack.c.bf16 %v555, %v555
      %v588 = vpack.c.bf16 %v556, %v556
      %v589 = vpack.c.bf16 %v557, %v557
      %v590 = vpack.c.bf16 %v558, %v558
      %v591 = vpack.c.bf16 %v559, %v559
      %v592 = vpack.c.bf16 %v560, %v560
      %v593 = vpack.c.bf16 %v561, %v561
      %v594 = vpack.c.bf16 %v562, %v562
      %v595 = vpack.c.bf16 %v563, %v563
      %vm596 = vsmask.f32 4368
      %vm597 = vmor %vm313, %vm596
      %v599 = vshrl.u32 %v564, 16
      %v601 = vrot.slane %v599, 7
      %v602 = vshll.u32 %v564, 16
      %v604 = vor.u32 %v601, %v602
      %v605 = vrot.slane %v601, 4
      %v607 = vshrl.u32 %v565, 16
      %v609 = vrot.slane %v607, 7
      %v610 = vshll.u32 %v565, 16
      %v612 = vor.u32 %v609, %v610
      %v613 = vsel %vm597, %v605, %v612
      %v615 = vshrl.u32 %v566, 16
      %v617 = vrot.slane %v615, 7
      %v618 = vshll.u32 %v566, 16
      %v620 = vor.u32 %v617, %v618
      %v621 = vrot.slane %v617, 4
      %v623 = vshrl.u32 %v567, 16
      %v625 = vrot.slane %v623, 7
      %v626 = vshll.u32 %v567, 16
      %v628 = vor.u32 %v625, %v626
      %v629 = vsel %vm597, %v621, %v628
      %v631 = vshrl.u32 %v568, 16
      %v633 = vrot.slane %v631, 7
      %v634 = vshll.u32 %v568, 16
      %v636 = vor.u32 %v633, %v634
      %v637 = vrot.slane %v633, 4
      %v639 = vshrl.u32 %v569, 16
      %v641 = vrot.slane %v639, 7
      %v642 = vshll.u32 %v569, 16
      %v644 = vor.u32 %v641, %v642
      %v645 = vsel %vm597, %v637, %v644
      %v647 = vshrl.u32 %v570, 16
      %v649 = vrot.slane %v647, 7
      %v650 = vshll.u32 %v570, 16
      %v652 = vor.u32 %v649, %v650
      %v653 = vrot.slane %v649, 4
      %v655 = vshrl.u32 %v571, 16
      %v657 = vrot.slane %v655, 7
      %v658 = vshll.u32 %v571, 16
      %v660 = vor.u32 %v657, %v658
      %v661 = vsel %vm597, %v653, %v660
      %v663 = vshrl.u32 %v572, 16
      %v665 = vrot.slane %v663, 7
      %v666 = vshll.u32 %v572, 16
      %v668 = vor.u32 %v665, %v666
      %v669 = vrot.slane %v665, 4
      %v671 = vshrl.u32 %v573, 16
      %v673 = vrot.slane %v671, 7
      %v674 = vshll.u32 %v573, 16
      %v676 = vor.u32 %v673, %v674
      %v677 = vsel %vm597, %v669, %v676
      %v679 = vshrl.u32 %v574, 16
      %v681 = vrot.slane %v679, 7
      %v682 = vshll.u32 %v574, 16
      %v684 = vor.u32 %v681, %v682
      %v685 = vrot.slane %v681, 4
      %v687 = vshrl.u32 %v575, 16
      %v689 = vrot.slane %v687, 7
      %v690 = vshll.u32 %v575, 16
      %v692 = vor.u32 %v689, %v690
      %v693 = vsel %vm597, %v685, %v692
      %v695 = vshrl.u32 %v576, 16
      %v697 = vrot.slane %v695, 7
      %v698 = vshll.u32 %v576, 16
      %v700 = vor.u32 %v697, %v698
      %v701 = vrot.slane %v697, 4
      %v703 = vshrl.u32 %v577, 16
      %v705 = vrot.slane %v703, 7
      %v706 = vshll.u32 %v577, 16
      %v708 = vor.u32 %v705, %v706
      %v709 = vsel %vm597, %v701, %v708
      %v711 = vshrl.u32 %v578, 16
      %v713 = vrot.slane %v711, 7
      %v714 = vshll.u32 %v578, 16
      %v716 = vor.u32 %v713, %v714
      %v717 = vrot.slane %v713, 4
      %v719 = vshrl.u32 %v579, 16
      %v721 = vrot.slane %v719, 7
      %v722 = vshll.u32 %v579, 16
      %v724 = vor.u32 %v721, %v722
      %v725 = vsel %vm597, %v717, %v724
      %v727 = vshrl.u32 %v580, 16
      %v729 = vrot.slane %v727, 7
      %v730 = vshll.u32 %v580, 16
      %v732 = vor.u32 %v729, %v730
      %v733 = vrot.slane %v729, 4
      %v735 = vshrl.u32 %v581, 16
      %v737 = vrot.slane %v735, 7
      %v738 = vshll.u32 %v581, 16
      %v740 = vor.u32 %v737, %v738
      %v741 = vsel %vm597, %v733, %v740
      %v743 = vshrl.u32 %v582, 16
      %v745 = vrot.slane %v743, 7
      %v746 = vshll.u32 %v582, 16
      %v748 = vor.u32 %v745, %v746
      %v749 = vrot.slane %v745, 4
      %v751 = vshrl.u32 %v583, 16
      %v753 = vrot.slane %v751, 7
      %v754 = vshll.u32 %v583, 16
      %v756 = vor.u32 %v753, %v754
      %v757 = vsel %vm597, %v749, %v756
      %v759 = vshrl.u32 %v584, 16
      %v761 = vrot.slane %v759, 7
      %v762 = vshll.u32 %v584, 16
      %v764 = vor.u32 %v761, %v762
      %v765 = vrot.slane %v761, 4
      %v767 = vshrl.u32 %v585, 16
      %v769 = vrot.slane %v767, 7
      %v770 = vshll.u32 %v585, 16
      %v772 = vor.u32 %v769, %v770
      %v773 = vsel %vm597, %v765, %v772
      %v775 = vshrl.u32 %v586, 16
      %v777 = vrot.slane %v775, 7
      %v778 = vshll.u32 %v586, 16
      %v780 = vor.u32 %v777, %v778
      %v781 = vrot.slane %v777, 4
      %v783 = vshrl.u32 %v587, 16
      %v785 = vrot.slane %v783, 7
      %v786 = vshll.u32 %v587, 16
      %v788 = vor.u32 %v785, %v786
      %v789 = vsel %vm597, %v781, %v788
      %v791 = vshrl.u32 %v588, 16
      %v793 = vrot.slane %v791, 7
      %v794 = vshll.u32 %v588, 16
      %v796 = vor.u32 %v793, %v794
      %v797 = vrot.slane %v793, 4
      %v799 = vshrl.u32 %v589, 16
      %v801 = vrot.slane %v799, 7
      %v802 = vshll.u32 %v589, 16
      %v804 = vor.u32 %v801, %v802
      %v805 = vsel %vm597, %v797, %v804
      %v807 = vshrl.u32 %v590, 16
      %v809 = vrot.slane %v807, 7
      %v810 = vshll.u32 %v590, 16
      %v812 = vor.u32 %v809, %v810
      %v813 = vrot.slane %v809, 4
      %v815 = vshrl.u32 %v591, 16
      %v817 = vrot.slane %v815, 7
      %v818 = vshll.u32 %v591, 16
      %v820 = vor.u32 %v817, %v818
      %v821 = vsel %vm597, %v813, %v820
      %v823 = vshrl.u32 %v592, 16
      %v825 = vrot.slane %v823, 7
      %v826 = vshll.u32 %v592, 16
      %v828 = vor.u32 %v825, %v826
      %v829 = vrot.slane %v825, 4
      %v831 = vshrl.u32 %v593, 16
      %v833 = vrot.slane %v831, 7
      %v834 = vshll.u32 %v593, 16
      %v836 = vor.u32 %v833, %v834
      %v837 = vsel %vm597, %v829, %v836
      %v839 = vshrl.u32 %v594, 16
      %v841 = vrot.slane %v839, 7
      %v842 = vshll.u32 %v594, 16
      %v844 = vor.u32 %v841, %v842
      %v845 = vrot.slane %v841, 4
      %v847 = vshrl.u32 %v595, 16
      %v849 = vrot.slane %v847, 7
      %v850 = vshll.u32 %v595, 16
      %v852 = vor.u32 %v849, %v850
      %v853 = vsel %vm597, %v845, %v852
      %s886 = scalar_lea.vmem [#allocation2], 8
      %vm887 = vcmask 27648
      %vm888 = vsmask.f32 7938
      %vm889 = vmand %vm887, %vm888
      %v890 = vld [vmem:[%s886] sm:$0xf]
      %v891 = vsel %vm889, %v604, %v890
      %892 = vst [vmem:[%s886] sm:$0xf] %v891
      %vm893 = vcmask 27648
      %894 = vst.msk [vmem:[%s886 + $0x4] sm:$0xf] %vm893, %v613
      %v895 = vld [vmem:[%s886 + $0x8] sm:$0xf]
      %v896 = vsel %vm889, %v620, %v895
      %897 = vst [vmem:[%s886 + $0x8] sm:$0xf] %v896
      %898 = vst.msk [vmem:[%s886 + $0xc] sm:$0xf] %vm893, %v629
      %v899 = vld [vmem:[%s886 + $0x10] sm:$0xf]
      %v900 = vsel %vm889, %v636, %v899
      %901 = vst [vmem:[%s886 + $0x10] sm:$0xf] %v900
      %902 = vst.msk [vmem:[%s886 + $0x14] sm:$0xf] %vm893, %v645
      %v903 = vld [vmem:[%s886 + $0x18] sm:$0xf]
      %v904 = vsel %vm889, %v652, %v903
      %905 = vst [vmem:[%s886 + $0x18] sm:$0xf] %v904
      %906 = vst.msk [vmem:[%s886 + $0x1c] sm:$0xf] %vm893, %v661
      %v907 = vld [vmem:[%s886 + $0x20] sm:$0xf]
      %v908 = vsel %vm889, %v668, %v907
      %909 = vst [vmem:[%s886 + $0x20] sm:$0xf] %v908
      %910 = vst.msk [vmem:[%s886 + $0x24] sm:$0xf] %vm893, %v677
      %v911 = vld [vmem:[%s886 + $0x28] sm:$0xf]
      %v912 = vsel %vm889, %v684, %v911
      %913 = vst [vmem:[%s886 + $0x28] sm:$0xf] %v912
      %914 = vst.msk [vmem:[%s886 + $0x2c] sm:$0xf] %vm893, %v693
      %v915 = vld [vmem:[%s886 + $0x30] sm:$0xf]
      %v916 = vsel %vm889, %v700, %v915
      %917 = vst [vmem:[%s886 + $0x30] sm:$0xf] %v916
      %918 = vst.msk [vmem:[%s886 + $0x34] sm:$0xf] %vm893, %v709
      %v919 = vld [vmem:[%s886 + $0x38] sm:$0xf]
      %v920 = vsel %vm889, %v716, %v919
      %921 = vst [vmem:[%s886 + $0x38] sm:$0xf] %v920
      %922 = vst.msk [vmem:[%s886 + $0x3c] sm:$0xf] %vm893, %v725
      %v923 = vld [vmem:[%s886 + $0x40] sm:$0xf]
      %v924 = vsel %vm889, %v732, %v923
      %925 = vst [vmem:[%s886 + $0x40] sm:$0xf] %v924
      %926 = vst.msk [vmem:[%s886 + $0x44] sm:$0xf] %vm893, %v741
      %v927 = vld [vmem:[%s886 + $0x48] sm:$0xf]
      %v928 = vsel %vm889, %v748, %v927
      %929 = vst [vmem:[%s886 + $0x48] sm:$0xf] %v928
      %930 = vst.msk [vmem:[%s886 + $0x4c] sm:$0xf] %vm893, %v757
      %v931 = vld [vmem:[%s886 + $0x50] sm:$0xf]
      %v932 = vsel %vm889, %v764, %v931
      %933 = vst [vmem:[%s886 + $0x50] sm:$0xf] %v932
      %934 = vst.msk [vmem:[%s886 + $0x54] sm:$0xf] %vm893, %v773
      %v935 = vld [vmem:[%s886 + $0x58] sm:$0xf]
      %v936 = vsel %vm889, %v780, %v935
      %937 = vst [vmem:[%s886 + $0x58] sm:$0xf] %v936
      %938 = vst.msk [vmem:[%s886 + $0x5c] sm:$0xf] %vm893, %v789
      %v939 = vld [vmem:[%s886 + $0x60] sm:$0xf]
      %v940 = vsel %vm889, %v796, %v939
      %941 = vst [vmem:[%s886 + $0x60] sm:$0xf] %v940
      %942 = vst.msk [vmem:[%s886 + $0x64] sm:$0xf] %vm893, %v805
      %v943 = vld [vmem:[%s886 + $0x68] sm:$0xf]
      %v944 = vsel %vm889, %v812, %v943
      %945 = vst [vmem:[%s886 + $0x68] sm:$0xf] %v944
      %946 = vst.msk [vmem:[%s886 + $0x6c] sm:$0xf] %vm893, %v821
      %v947 = vld [vmem:[%s886 + $0x70] sm:$0xf]
      %v948 = vsel %vm889, %v828, %v947
      %949 = vst [vmem:[%s886 + $0x70] sm:$0xf] %v948
      %950 = vst.msk [vmem:[%s886 + $0x74] sm:$0xf] %vm893, %v837
      %v951 = vld [vmem:[%s886 + $0x78] sm:$0xf]
      %v952 = vsel %vm889, %v844, %v951
      %953 = vst [vmem:[%s886 + $0x78] sm:$0xf] %v952
      %954 = vst.msk [vmem:[%s886 + $0x7c] sm:$0xf] %vm893, %v853
      %987 = vrot.lane.b32.xlu0 %v564, 4
      %v988 = vpop.permute.xlu0 %987
      %989 = vrot.lane.b32.xlu0 %v565, 4
      %v990 = vpop.permute.xlu0 %989
      %991 = vrot.lane.b32.xlu0 %v566, 4
      %v992 = vpop.permute.xlu0 %991
      %993 = vrot.lane.b32.xlu0 %v567, 4
      %v994 = vpop.permute.xlu0 %993
      %995 = vrot.lane.b32.xlu0 %v568, 4
      %v996 = vpop.permute.xlu0 %995
      %997 = vrot.lane.b32.xlu0 %v569, 4
      %v998 = vpop.permute.xlu0 %997
      %999 = vrot.lane.b32.xlu0 %v570, 4
      %v1000 = vpop.permute.xlu0 %999
      %1001 = vrot.lane.b32.xlu0 %v571, 4
      %v1002 = vpop.permute.xlu0 %1001
      %1003 = vrot.lane.b32.xlu0 %v572, 4
      %v1004 = vpop.permute.xlu0 %1003
      %1005 = vrot.lane.b32.xlu0 %v573, 4
      %v1006 = vpop.permute.xlu0 %1005
      %1007 = vrot.lane.b32.xlu0 %v574, 4
      %v1008 = vpop.permute.xlu0 %1007
      %1009 = vrot.lane.b32.xlu0 %v575, 4
      %v1010 = vpop.permute.xlu0 %1009
      %1011 = vrot.lane.b32.xlu0 %v576, 4
      %v1012 = vpop.permute.xlu0 %1011
      %1013 = vrot.lane.b32.xlu0 %v577, 4
      %v1014 = vpop.permute.xlu0 %1013
      %1015 = vrot.lane.b32.xlu0 %v578, 4
      %v1016 = vpop.permute.xlu0 %1015
      %1017 = vrot.lane.b32.xlu0 %v579, 4
      %v1018 = vpop.permute.xlu0 %1017
      %1019 = vrot.lane.b32.xlu0 %v580, 4
      %v1020 = vpop.permute.xlu0 %1019
      %1021 = vrot.lane.b32.xlu0 %v581, 4
      %v1022 = vpop.permute.xlu0 %1021
      %1023 = vrot.lane.b32.xlu0 %v582, 4
      %v1024 = vpop.permute.xlu0 %1023
      %1025 = vrot.lane.b32.xlu0 %v583, 4
      %v1026 = vpop.permute.xlu0 %1025
      %1027 = vrot.lane.b32.xlu0 %v584, 4
      %v1028 = vpop.permute.xlu0 %1027
      %1029 = vrot.lane.b32.xlu0 %v585, 4
      %v1030 = vpop.permute.xlu0 %1029
      %1031 = vrot.lane.b32.xlu0 %v586, 4
      %v1032 = vpop.permute.xlu0 %1031
      %1033 = vrot.lane.b32.xlu0 %v587, 4
      %v1034 = vpop.permute.xlu0 %1033
      %1035 = vrot.lane.b32.xlu0 %v588, 4
      %v1036 = vpop.permute.xlu0 %1035
      %1037 = vrot.lane.b32.xlu0 %v589, 4
      %v1038 = vpop.permute.xlu0 %1037
      %1039 = vrot.lane.b32.xlu0 %v590, 4
      %v1040 = vpop.permute.xlu0 %1039
      %1041 = vrot.lane.b32.xlu0 %v591, 4
      %v1042 = vpop.permute.xlu0 %1041
      %1043 = vrot.lane.b32.xlu0 %v592, 4
      %v1044 = vpop.permute.xlu0 %1043
      %1045 = vrot.lane.b32.xlu0 %v593, 4
      %v1046 = vpop.permute.xlu0 %1045
      %1047 = vrot.lane.b32.xlu0 %v594, 4
      %v1048 = vpop.permute.xlu0 %1047
      %1049 = vrot.lane.b32.xlu0 %v595, 4
      %v1050 = vpop.permute.xlu0 %1049
      %vm1083 = vcmask 60448
      %1084 = vst.msk [vmem:[%s886] sm:$0xf] %vm1083, %v988
      %1085 = vst.msk [vmem:[%s886 + $0x4] sm:$0xf] %vm1083, %v990
      %1086 = vst.msk [vmem:[%s886 + $0x8] sm:$0xf] %vm1083, %v992
      %1087 = vst.msk [vmem:[%s886 + $0xc] sm:$0xf] %vm1083, %v994
      %1088 = vst.msk [vmem:[%s886 + $0x10] sm:$0xf] %vm1083, %v996
      %1089 = vst.msk [vmem:[%s886 + $0x14] sm:$0xf] %vm1083, %v998
      %1090 = vst.msk [vmem:[%s886 + $0x18] sm:$0xf] %vm1083, %v1000
      %1091 = vst.msk [vmem:[%s886 + $0x1c] sm:$0xf] %vm1083, %v1002
      %1092 = vst.msk [vmem:[%s886 + $0x20] sm:$0xf] %vm1083, %v1004
      %1093 = vst.msk [vmem:[%s886 + $0x24] sm:$0xf] %vm1083, %v1006
      %1094 = vst.msk [vmem:[%s886 + $0x28] sm:$0xf] %vm1083, %v1008
      %1095 = vst.msk [vmem:[%s886 + $0x2c] sm:$0xf] %vm1083, %v1010
      %1096 = vst.msk [vmem:[%s886 + $0x30] sm:$0xf] %vm1083, %v1012
      %1097 = vst.msk [vmem:[%s886 + $0x34] sm:$0xf] %vm1083, %v1014
      %1098 = vst.msk [vmem:[%s886 + $0x38] sm:$0xf] %vm1083, %v1016
      %1099 = vst.msk [vmem:[%s886 + $0x3c] sm:$0xf] %vm1083, %v1018
      %1100 = vst.msk [vmem:[%s886 + $0x40] sm:$0xf] %vm1083, %v1020
      %1101 = vst.msk [vmem:[%s886 + $0x44] sm:$0xf] %vm1083, %v1022
      %1102 = vst.msk [vmem:[%s886 + $0x48] sm:$0xf] %vm1083, %v1024
      %1103 = vst.msk [vmem:[%s886 + $0x4c] sm:$0xf] %vm1083, %v1026
      %1104 = vst.msk [vmem:[%s886 + $0x50] sm:$0xf] %vm1083, %v1028
      %1105 = vst.msk [vmem:[%s886 + $0x54] sm:$0xf] %vm1083, %v1030
      %1106 = vst.msk [vmem:[%s886 + $0x58] sm:$0xf] %vm1083, %v1032
      %1107 = vst.msk [vmem:[%s886 + $0x5c] sm:$0xf] %vm1083, %v1034
      %1108 = vst.msk [vmem:[%s886 + $0x60] sm:$0xf] %vm1083, %v1036
      %1109 = vst.msk [vmem:[%s886 + $0x64] sm:$0xf] %vm1083, %v1038
      %1110 = vst.msk [vmem:[%s886 + $0x68] sm:$0xf] %vm1083, %v1040
      %1111 = vst.msk [vmem:[%s886 + $0x6c] sm:$0xf] %vm1083, %v1042
      %1112 = vst.msk [vmem:[%s886 + $0x70] sm:$0xf] %vm1083, %v1044
      %1113 = vst.msk [vmem:[%s886 + $0x74] sm:$0xf] %vm1083, %v1046
      %1114 = vst.msk [vmem:[%s886 + $0x78] sm:$0xf] %vm1083, %v1048
      %1115 = vst.msk [vmem:[%s886 + $0x7c] sm:$0xf] %vm1083, %v1050
      %vm1116 = vsmask.f32 3328
      %vm1117 = vsmask.f32 7440
      %vm1118 = vmor %vm1116, %vm1117
      %v1119 = vrot.slane %v599, 4
      %v1120 = vrot.slane %v602, 5
      %v1121 = vor.u32 %v1119, %v1120
      %v1122 = vrot.slane %v1121, 4
      %v1123 = vrot.slane %v610, 5
      %v1124 = vsel %vm1118, %v1122, %v1123
      %v1125 = vrot.slane %v607, 4
      %v1126 = vor.u32 %v1125, %v1123
      %v1127 = vrot.slane %v1126, 4
      %v1128 = vrot.slane %v615, 4
      %v1129 = vrot.slane %v618, 5
      %v1130 = vor.u32 %v1128, %v1129
      %v1131 = vrot.slane %v1130, 4
      %v1132 = vrot.slane %v626, 5
      %v1133 = vsel %vm1118, %v1131, %v1132
      %v1134 = vrot.slane %v623, 4
      %v1135 = vor.u32 %v1134, %v1132
      %v1136 = vrot.slane %v1135, 4
      %v1137 = vrot.slane %v631, 4
      %v1138 = vrot.slane %v634, 5
      %v1139 = vor.u32 %v1137, %v1138
      %v1140 = vrot.slane %v1139, 4
      %v1141 = vrot.slane %v642, 5
      %v1142 = vsel %vm1118, %v1140, %v1141
      %v1143 = vrot.slane %v639, 4
      %v1144 = vor.u32 %v1143, %v1141
      %v1145 = vrot.slane %v1144, 4
      %v1146 = vrot.slane %v647, 4
      %v1147 = vrot.slane %v650, 5
      %v1148 = vor.u32 %v1146, %v1147
      %v1149 = vrot.slane %v1148, 4
      %v1150 = vrot.slane %v658, 5
      %v1151 = vsel %vm1118, %v1149, %v1150
      %v1152 = vrot.slane %v655, 4
      %v1153 = vor.u32 %v1152, %v1150
      %v1154 = vrot.slane %v1153, 4
      %v1155 = vrot.slane %v663, 4
      %v1156 = vrot.slane %v666, 5
      %v1157 = vor.u32 %v1155, %v1156
      %v1158 = vrot.slane %v1157, 4
      %v1159 = vrot.slane %v674, 5
      %v1160 = vsel %vm1118, %v1158, %v1159
      %v1161 = vrot.slane %v671, 4
      %v1162 = vor.u32 %v1161, %v1159
      %v1163 = vrot.slane %v1162, 4
      %v1164 = vrot.slane %v679, 4
      %v1165 = vrot.slane %v682, 5
      %v1166 = vor.u32 %v1164, %v1165
      %v1167 = vrot.slane %v1166, 4
      %v1168 = vrot.slane %v690, 5
      %v1169 = vsel %vm1118, %v1167, %v1168
      %v1170 = vrot.slane %v687, 4
      %v1171 = vor.u32 %v1170, %v1168
      %v1172 = vrot.slane %v1171, 4
      %v1173 = vrot.slane %v695, 4
      %v1174 = vrot.slane %v698, 5
      %v1175 = vor.u32 %v1173, %v1174
      %v1176 = vrot.slane %v1175, 4
      %v1177 = vrot.slane %v706, 5
      %v1178 = vsel %vm1118, %v1176, %v1177
      %v1179 = vrot.slane %v703, 4
      %v1180 = vor.u32 %v1179, %v1177
      %v1181 = vrot.slane %v1180, 4
      %v1182 = vrot.slane %v711, 4
      %v1183 = vrot.slane %v714, 5
      %v1184 = vor.u32 %v1182, %v1183
      %v1185 = vrot.slane %v1184, 4
      %v1186 = vrot.slane %v722, 5
      %v1187 = vsel %vm1118, %v1185, %v1186
      %v1188 = vrot.slane %v719, 4
      %v1189 = vor.u32 %v1188, %v1186
      %v1190 = vrot.slane %v1189, 4
      %v1191 = vrot.slane %v727, 4
      %v1192 = vrot.slane %v730, 5
      %v1193 = vor.u32 %v1191, %v1192
      %v1194 = vrot.slane %v1193, 4
      %v1195 = vrot.slane %v738, 5
      %v1196 = vsel %vm1118, %v1194, %v1195
      %v1197 = vrot.slane %v735, 4
      %v1198 = vor.u32 %v1197, %v1195
      %v1199 = vrot.slane %v1198, 4
      %v1200 = vrot.slane %v743, 4
      %v1201 = vrot.slane %v746, 5
      %v1202 = vor.u32 %v1200, %v1201
      %v1203 = vrot.slane %v1202, 4
      %v1204 = vrot.slane %v754, 5
      %v1205 = vsel %vm1118, %v1203, %v1204
      %v1206 = vrot.slane %v751, 4
      %v1207 = vor.u32 %v1206, %v1204
      %v1208 = vrot.slane %v1207, 4
      %v1209 = vrot.slane %v759, 4
      %v1210 = vrot.slane %v762, 5
      %v1211 = vor.u32 %v1209, %v1210
      %v1212 = vrot.slane %v1211, 4
      %v1213 = vrot.slane %v770, 5
      %v1214 = vsel %vm1118, %v1212, %v1213
      %v1215 = vrot.slane %v767, 4
      %v1216 = vor.u32 %v1215, %v1213
      %v1217 = vrot.slane %v1216, 4
      %v1218 = vrot.slane %v775, 4
      %v1219 = vrot.slane %v778, 5
      %v1220 = vor.u32 %v1218, %v1219
      %v1221 = vrot.slane %v1220, 4
      %v1222 = vrot.slane %v786, 5
      %v1223 = vsel %vm1118, %v1221, %v1222
      %v1224 = vrot.slane %v783, 4
      %v1225 = vor.u32 %v1224, %v1222
      %v1226 = vrot.slane %v1225, 4
      %v1227 = vrot.slane %v791, 4
      %v1228 = vrot.slane %v794, 5
      %v1229 = vor.u32 %v1227, %v1228
      %v1230 = vrot.slane %v1229, 4
      %v1231 = vrot.slane %v802, 5
      %v1232 = vsel %vm1118, %v1230, %v1231
      %v1233 = vrot.slane %v799, 4
      %v1234 = vor.u32 %v1233, %v1231
      %v1235 = vrot.slane %v1234, 4
      %v1236 = vrot.slane %v807, 4
      %v1237 = vrot.slane %v810, 5
      %v1238 = vor.u32 %v1236, %v1237
      %v1239 = vrot.slane %v1238, 4
      %v1240 = vrot.slane %v818, 5
      %v1241 = vsel %vm1118, %v1239, %v1240
      %v1242 = vrot.slane %v815, 4
      %v1243 = vor.u32 %v1242, %v1240
      %v1244 = vrot.slane %v1243, 4
      %v1245 = vrot.slane %v823, 4
      %v1246 = vrot.slane %v826, 5
      %v1247 = vor.u32 %v1245, %v1246
      %v1248 = vrot.slane %v1247, 4
      %v1249 = vrot.slane %v834, 5
      %v1250 = vsel %vm1118, %v1248, %v1249
      %v1251 = vrot.slane %v831, 4
      %v1252 = vor.u32 %v1251, %v1249
      %v1253 = vrot.slane %v1252, 4
      %v1254 = vrot.slane %v839, 4
      %v1255 = vrot.slane %v842, 5
      %v1256 = vor.u32 %v1254, %v1255
      %v1257 = vrot.slane %v1256, 4
      %v1258 = vrot.slane %v850, 5
      %v1259 = vsel %vm1118, %v1257, %v1258
      %v1260 = vrot.slane %v847, 4
      %v1261 = vor.u32 %v1260, %v1258
      %v1262 = vrot.slane %v1261, 4
      %1263 = vrot.lane.b32.xlu0 %v1124, 8
      %v1264 = vpop.permute.xlu0 %1263
      %1265 = vrot.lane.b32.xlu0 %v1127, 8
      %v1266 = vpop.permute.xlu0 %1265
      %1267 = vrot.lane.b32.xlu0 %v1133, 8
      %v1268 = vpop.permute.xlu0 %1267
      %1269 = vrot.lane.b32.xlu0 %v1136, 8
      %v1270 = vpop.permute.xlu0 %1269
      %1271 = vrot.lane.b32.xlu0 %v1142, 8
      %v1272 = vpop.permute.xlu0 %1271
      %1273 = vrot.lane.b32.xlu0 %v1145, 8
      %v1274 = vpop.permute.xlu0 %1273
      %1275 = vrot.lane.b32.xlu0 %v1151, 8
      %v1276 = vpop.permute.xlu0 %1275
      %1277 = vrot.lane.b32.xlu0 %v1154, 8
      %v1278 = vpop.permute.xlu0 %1277
      %1279 = vrot.lane.b32.xlu0 %v1160, 8
      %v1280 = vpop.permute.xlu0 %1279
      %1281 = vrot.lane.b32.xlu0 %v1163, 8
      %v1282 = vpop.permute.xlu0 %1281
      %1283 = vrot.lane.b32.xlu0 %v1169, 8
      %v1284 = vpop.permute.xlu0 %1283
      %1285 = vrot.lane.b32.xlu0 %v1172, 8
      %v1286 = vpop.permute.xlu0 %1285
      %1287 = vrot.lane.b32.xlu0 %v1178, 8
      %v1288 = vpop.permute.xlu0 %1287
      %1289 = vrot.lane.b32.xlu0 %v1181, 8
      %v1290 = vpop.permute.xlu0 %1289
      %1291 = vrot.lane.b32.xlu0 %v1187, 8
      %v1292 = vpop.permute.xlu0 %1291
      %1293 = vrot.lane.b32.xlu0 %v1190, 8
      %v1294 = vpop.permute.xlu0 %1293
      %1295 = vrot.lane.b32.xlu0 %v1196, 8
      %v1296 = vpop.permute.xlu0 %1295
      %1297 = vrot.lane.b32.xlu0 %v1199, 8
      %v1298 = vpop.permute.xlu0 %1297
      %1299 = vrot.lane.b32.xlu0 %v1205, 8
      %v1300 = vpop.permute.xlu0 %1299
      %1301 = vrot.lane.b32.xlu0 %v1208, 8
      %v1302 = vpop.permute.xlu0 %1301
      %1303 = vrot.lane.b32.xlu0 %v1214, 8
      %v1304 = vpop.permute.xlu0 %1303
      %1305 = vrot.lane.b32.xlu0 %v1217, 8
      %v1306 = vpop.permute.xlu0 %1305
      %1307 = vrot.lane.b32.xlu0 %v1223, 8
      %v1308 = vpop.permute.xlu0 %1307
      %1309 = vrot.lane.b32.xlu0 %v1226, 8
      %v1310 = vpop.permute.xlu0 %1309
      %1311 = vrot.lane.b32.xlu0 %v1232, 8
      %v1312 = vpop.permute.xlu0 %1311
      %1313 = vrot.lane.b32.xlu0 %v1235, 8
      %v1314 = vpop.permute.xlu0 %1313
      %1315 = vrot.lane.b32.xlu0 %v1241, 8
      %v1316 = vpop.permute.xlu0 %1315
      %1317 = vrot.lane.b32.xlu0 %v1244, 8
      %v1318 = vpop.permute.xlu0 %1317
      %1319 = vrot.lane.b32.xlu0 %v1250, 8
      %v1320 = vpop.permute.xlu0 %1319
      %1321 = vrot.lane.b32.xlu0 %v1253, 8
      %v1322 = vpop.permute.xlu0 %1321
      %1323 = vrot.lane.b32.xlu0 %v1259, 8
      %v1324 = vpop.permute.xlu0 %1323
      %1325 = vrot.lane.b32.xlu0 %v1262, 8
      %v1326 = vpop.permute.xlu0 %1325
      %vm1359 = vcmask 93248
      %1360 = vst.msk [vmem:[%s886] sm:$0xf] %vm1359, %v1264
      %vm1361 = vcmask 93248
      %vm1362 = vmand %vm1361, %vm1116
      %v1363 = vld [vmem:[%s886 + $0x4] sm:$0xf]
      %v1364 = vsel %vm1362, %v1266, %v1363
      %1365 = vst [vmem:[%s886 + $0x4] sm:$0xf] %v1364
      %1366 = vst.msk [vmem:[%s886 + $0x8] sm:$0xf] %vm1359, %v1268
      %v1367 = vld [vmem:[%s886 + $0xc] sm:$0xf]
      %v1368 = vsel %vm1362, %v1270, %v1367
      %1369 = vst [vmem:[%s886 + $0xc] sm:$0xf] %v1368
      %1370 = vst.msk [vmem:[%s886 + $0x10] sm:$0xf] %vm1359, %v1272
      %v1371 = vld [vmem:[%s886 + $0x14] sm:$0xf]
      %v1372 = vsel %vm1362, %v1274, %v1371
      %1373 = vst [vmem:[%s886 + $0x14] sm:$0xf] %v1372
      %1374 = vst.msk [vmem:[%s886 + $0x18] sm:$0xf] %vm1359, %v1276
      %v1375 = vld [vmem:[%s886 + $0x1c] sm:$0xf]
      %v1376 = vsel %vm1362, %v1278, %v1375
      %1377 = vst [vmem:[%s886 + $0x1c] sm:$0xf] %v1376
      %1378 = vst.msk [vmem:[%s886 + $0x20] sm:$0xf] %vm1359, %v1280
      %v1379 = vld [vmem:[%s886 + $0x24] sm:$0xf]
      %v1380 = vsel %vm1362, %v1282, %v1379
      %1381 = vst [vmem:[%s886 + $0x24] sm:$0xf] %v1380
      %1382 = vst.msk [vmem:[%s886 + $0x28] sm:$0xf] %vm1359, %v1284
      %v1383 = vld [vmem:[%s886 + $0x2c] sm:$0xf]
      %v1384 = vsel %vm1362, %v1286, %v1383
      %1385 = vst [vmem:[%s886 + $0x2c] sm:$0xf] %v1384
      %1386 = vst.msk [vmem:[%s886 + $0x30] sm:$0xf] %vm1359, %v1288
      %v1387 = vld [vmem:[%s886 + $0x34] sm:$0xf]
      %v1388 = vsel %vm1362, %v1290, %v1387
      %1389 = vst [vmem:[%s886 + $0x34] sm:$0xf] %v1388
      %1390 = vst.msk [vmem:[%s886 + $0x38] sm:$0xf] %vm1359, %v1292
      %v1391 = vld [vmem:[%s886 + $0x3c] sm:$0xf]
      %v1392 = vsel %vm1362, %v1294, %v1391
      %1393 = vst [vmem:[%s886 + $0x3c] sm:$0xf] %v1392
      %1394 = vst.msk [vmem:[%s886 + $0x40] sm:$0xf] %vm1359, %v1296
      %v1395 = vld [vmem:[%s886 + $0x44] sm:$0xf]
      %v1396 = vsel %vm1362, %v1298, %v1395
      %1397 = vst [vmem:[%s886 + $0x44] sm:$0xf] %v1396
      %1398 = vst.msk [vmem:[%s886 + $0x48] sm:$0xf] %vm1359, %v1300
      %v1399 = vld [vmem:[%s886 + $0x4c] sm:$0xf]
      %v1400 = vsel %vm1362, %v1302, %v1399
      %1401 = vst [vmem:[%s886 + $0x4c] sm:$0xf] %v1400
      %1402 = vst.msk [vmem:[%s886 + $0x50] sm:$0xf] %vm1359, %v1304
      %v1403 = vld [vmem:[%s886 + $0x54] sm:$0xf]
      %v1404 = vsel %vm1362, %v1306, %v1403
      %1405 = vst [vmem:[%s886 + $0x54] sm:$0xf] %v1404
      %1406 = vst.msk [vmem:[%s886 + $0x58] sm:$0xf] %vm1359, %v1308
      %v1407 = vld [vmem:[%s886 + $0x5c] sm:$0xf]
      %v1408 = vsel %vm1362, %v1310, %v1407
      %1409 = vst [vmem:[%s886 + $0x5c] sm:$0xf] %v1408
      %1410 = vst.msk [vmem:[%s886 + $0x60] sm:$0xf] %vm1359, %v1312
      %v1411 = vld [vmem:[%s886 + $0x64] sm:$0xf]
      %v1412 = vsel %vm1362, %v1314, %v1411
      %1413 = vst [vmem:[%s886 + $0x64] sm:$0xf] %v1412
      %1414 = vst.msk [vmem:[%s886 + $0x68] sm:$0xf] %vm1359, %v1316
      %v1415 = vld [vmem:[%s886 + $0x6c] sm:$0xf]
      %v1416 = vsel %vm1362, %v1318, %v1415
      %1417 = vst [vmem:[%s886 + $0x6c] sm:$0xf] %v1416
      %1418 = vst.msk [vmem:[%s886 + $0x70] sm:$0xf] %vm1359, %v1320
      %v1419 = vld [vmem:[%s886 + $0x74] sm:$0xf]
      %v1420 = vsel %vm1362, %v1322, %v1419
      %1421 = vst [vmem:[%s886 + $0x74] sm:$0xf] %v1420
      %1422 = vst.msk [vmem:[%s886 + $0x78] sm:$0xf] %vm1359, %v1324
      %v1423 = vld [vmem:[%s886 + $0x7c] sm:$0xf]
      %v1424 = vsel %vm1362, %v1326, %v1423
      %1425 = vst [vmem:[%s886 + $0x7c] sm:$0xf] %v1424
      %p1426 = scmp.eq.s32.totalorder %s23, 0
      // Predicated region
      $region37: #{residual_block_forward_nhwc.4} parent=35 // pred_check
        %p1427 = pneg %p1426
      $region38: #{residual_block_forward_nhwc.4} parent=35 // pred_check_branch
        %1429 = sbr.rel (%p1427) target = $region40
      $region39: #{residual_block_forward_nhwc.4} parent=35 // pred_region
        %vm1430 = vcmask 93184
        %1431 = vst.msk [vmem:[#allocation2] sm:$0xf] %vm1430, 0
        %1432 = vst.msk [vmem:[#allocation2 + $0x4] sm:$0xf] %vm1430, 0
      $region40: #{residual_block_forward_nhwc.4} parent=35 // pred_fallthru
        _
      %p1433 = scmp.gt.s32.totalorder %s23, 0
      // Predicated region
      $region41: #{residual_block_forward_nhwc.4} parent=35 // pred_check
        %p1434 = pneg %p1433
      $region42: #{residual_block_forward_nhwc.4} parent=35 // pred_check_branch
        %1436 = sbr.rel (%p1434) target = $region44
      $region43: #{residual_block_forward_nhwc.4} parent=35 // pred_region
        %s1437 = ssub.s32 %s311, 1
        %s1438 = smul.u32 %s1437, 16
        %s1439 = scalar_lea.vmem %s286, %s1438
        %v1440 = vld [vmem:[%s1439] sm:$0xff]
        %v1441 = vld [vmem:[%s1439 + $0x8] sm:$0xff]
        %v1442 = vld [vmem:[%s2] sm:$0x1]
        %v1443 = vld [vmem:[%s3] sm:$0x1]
        %v1445 = vperm.slane %v1442, 0
        %v1447 = vmul.f32 %v1440, %v1445
        %v1448 = vmul.f32 %v1441, %v1445
        %v1450 = vperm.slane %v1443, 0
        %v1452 = vadd.f32 %v1447, %v1450
        %v1453 = vadd.f32 %v1448, %v1450
        %v1454 = vmax.f32 %v1452, 0.0
        %v1455 = vmax.f32 %v1453, 0.0
        %v1456 = vpack.c.bf16 %v1454, %v1454
        %v1457 = vpack.c.bf16 %v1455, %v1455
        %v1459 = vshrl.u32 %v1456, 16
        %v1461 = vrot.slane %v1459, 7
        %v1462 = vshll.u32 %v1456, 16
        %v1464 = vor.u32 %v1461, %v1462
        %v1465 = vrot.slane %v1461, 4
        %v1467 = vshrl.u32 %v1457, 16
        %v1469 = vrot.slane %v1467, 7
        %v1470 = vshll.u32 %v1457, 16
        %v1472 = vor.u32 %v1469, %v1470
        %v1473 = vsel %vm597, %v1465, %v1472
        %v1476 = vld [vmem:[#allocation2] sm:$0xf]
        %v1477 = vsel %vm889, %v1464, %v1476
        %1478 = vst [vmem:[#allocation2] sm:$0xf] %v1477
        %1479 = vst.msk [vmem:[#allocation2 + $0x4] sm:$0xf] %vm893, %v1473
        %1482 = vrot.lane.b32.xlu0 %v1456, 4
        %v1483 = vpop.permute.xlu0 %1482
        %1484 = vrot.lane.b32.xlu0 %v1457, 4
        %v1485 = vpop.permute.xlu0 %1484
        %1488 = vst.msk [vmem:[#allocation2] sm:$0xf] %vm1083, %v1483
        %1489 = vst.msk [vmem:[#allocation2 + $0x4] sm:$0xf] %vm1083, %v1485
        %v1490 = vrot.slane %v1459, 4
        %v1491 = vrot.slane %v1462, 5
        %v1492 = vor.u32 %v1490, %v1491
        %v1493 = vrot.slane %v1492, 4
        %v1494 = vrot.slane %v1470, 5
        %v1495 = vsel %vm1118, %v1493, %v1494
        %v1496 = vrot.slane %v1467, 4
        %v1497 = vor.u32 %v1496, %v1494
        %v1498 = vrot.slane %v1497, 4
        %1499 = vrot.lane.b32.xlu0 %v1495, 8
        %v1500 = vpop.permute.xlu0 %1499
        %1501 = vrot.lane.b32.xlu0 %v1498, 8
        %v1502 = vpop.permute.xlu0 %1501
        %1505 = vst.msk [vmem:[#allocation2] sm:$0xf] %vm1359, %v1500
        %v1506 = vld [vmem:[#allocation2 + $0x4] sm:$0xf]
        %v1507 = vsel %vm1362, %v1502, %v1506
        %1508 = vst [vmem:[#allocation2 + $0x4] sm:$0xf] %v1507
      $region44: #{residual_block_forward_nhwc.4} parent=35 // pred_fallthru
        _
      // Predicated region
      $region45: #{residual_block_forward_nhwc.4} parent=35 // pred_check
        %p1509 = pneg %p1426
      $region46: #{residual_block_forward_nhwc.4} parent=35 // pred_check_branch
        %1511 = sbr.rel (%p1509) target = $region48
      $region47: #{residual_block_forward_nhwc.4} parent=35 // pred_region
        %s1512 = scalar_lea.vmem [#allocation2], 136
        %vm1513 = vcmask 93184
        %1514 = vst.msk [vmem:[%s1512] sm:$0xf] %vm1513, 0
        %1515 = vst.msk [vmem:[%s1512 + $0x4] sm:$0xf] %vm1513, 0
      $region48: #{residual_block_forward_nhwc.4} parent=35 // pred_fallthru
        _
      %p1516 = scmp.lt.s32.totalorder %s23, 0
      // Predicated region
      $region49: #{residual_block_forward_nhwc.4} parent=35 // pred_check
        %p1517 = pneg %p1516
      $region50: #{residual_block_forward_nhwc.4} parent=35 // pred_check_branch
        %1519 = sbr.rel (%p1517) target = $region52
      $region51: #{residual_block_forward_nhwc.4} parent=35 // pred_region
        %s1520 = sadd.s32 %s311, 16
        %s1521 = smul.u32 %s1520, 16
        %s1522 = scalar_lea.vmem %s286, %s1521
        %v1523 = vld [vmem:[%s1522] sm:$0xff]
        %v1524 = vld [vmem:[%s1522 + $0x8] sm:$0xff]
        %v1525 = vld [vmem:[%s2] sm:$0x1]
        %v1526 = vld [vmem:[%s3] sm:$0x1]
        %v1528 = vperm.slane %v1525, 0
        %v1530 = vmul.f32 %v1523, %v1528
        %v1531 = vmul.f32 %v1524, %v1528
        %v1533 = vperm.slane %v1526, 0
        %v1535 = vadd.f32 %v1530, %v1533
        %v1536 = vadd.f32 %v1531, %v1533
        %v1537 = vmax.f32 %v1535, 0.0
        %v1538 = vmax.f32 %v1536, 0.0
        %v1539 = vpack.c.bf16 %v1537, %v1537
        %v1540 = vpack.c.bf16 %v1538, %v1538
        %v1542 = vshrl.u32 %v1539, 16
        %v1544 = vrot.slane %v1542, 7
        %v1545 = vshll.u32 %v1539, 16
        %v1547 = vor.u32 %v1544, %v1545
        %v1548 = vrot.slane %v1544, 4
        %v1550 = vshrl.u32 %v1540, 16
        %v1552 = vrot.slane %v1550, 7
        %v1553 = vshll.u32 %v1540, 16
        %v1555 = vor.u32 %v1552, %v1553
        %v1556 = vsel %vm597, %v1548, %v1555
        %s1559 = scalar_lea.vmem [#allocation2], 136
        %v1560 = vld [vmem:[%s1559] sm:$0xf]
        %v1561 = vsel %vm889, %v1547, %v1560
        %1562 = vst [vmem:[%s1559] sm:$0xf] %v1561
        %1563 = vst.msk [vmem:[%s1559 + $0x4] sm:$0xf] %vm893, %v1556
        %1566 = vrot.lane.b32.xlu0 %v1539, 4
        %v1567 = vpop.permute.xlu0 %1566
        %1568 = vrot.lane.b32.xlu0 %v1540, 4
        %v1569 = vpop.permute.xlu0 %1568
        %1572 = vst.msk [vmem:[%s1559] sm:$0xf] %vm1083, %v1567
        %1573 = vst.msk [vmem:[%s1559 + $0x4] sm:$0xf] %vm1083, %v1569
        %v1574 = vrot.slane %v1542, 4
        %v1575 = vrot.slane %v1545, 5
        %v1576 = vor.u32 %v1574, %v1575
        %v1577 = vrot.slane %v1576, 4
        %v1578 = vrot.slane %v1553, 5
        %v1579 = vsel %vm1118, %v1577, %v1578
        %v1580 = vrot.slane %v1550, 4
        %v1581 = vor.u32 %v1580, %v1578
        %v1582 = vrot.slane %v1581, 4
        %1583 = vrot.lane.b32.xlu0 %v1579, 8
        %v1584 = vpop.permute.xlu0 %1583
        %1585 = vrot.lane.b32.xlu0 %v1582, 8
        %v1586 = vpop.permute.xlu0 %1585
        %1589 = vst.msk [vmem:[%s1559] sm:$0xf] %vm1359, %v1584
        %v1590 = vld [vmem:[%s1559 + $0x4] sm:$0xf]
        %v1591 = vsel %vm1362, %v1586, %v1590
        %1592 = vst [vmem:[%s1559 + $0x4] sm:$0xf] %v1591
      $region52: #{residual_block_forward_nhwc.4} parent=35 // pred_fallthru
        _
      %v1593 = vld [vmem:[%s1] sm:$0xf]
      %v1594 = vld [vmem:[%s1 + $0x4] sm:$0x3]
      %v1595 = vld [vmem:[%s1 + $0x8] sm:$0xf]
      %v1596 = vld [vmem:[%s1 + $0xc] sm:$0x3]
      %v1597 = vld [vmem:[%s1 + $0x10] sm:$0xf]
      %v1598 = vld [vmem:[%s1 + $0x14] sm:$0x3]
      %v1599 = vld [vmem:[#allocation2] sm:$0xf]
      %v1600 = vld [vmem:[#allocation2 + $0x4] sm:$0xf]
      %v1601 = vld [vmem:[#allocation2 + $0x8] sm:$0xf]
      %v1602 = vld [vmem:[#allocation2 + $0xc] sm:$0xf]
      %v1603 = vld [vmem:[#allocation2 + $0x10] sm:$0xf]
      %v1604 = vld [vmem:[#allocation2 + $0x14] sm:$0xf]
      %v1605 = vld [vmem:[#allocation2 + $0x18] sm:$0xf]
      %v1606 = vld [vmem:[#allocation2 + $0x1c] sm:$0xf]
      %v1607 = vld [vmem:[#allocation2 + $0x20] sm:$0xf]
      %v1608 = vld [vmem:[#allocation2 + $0x24] sm:$0xf]
      %v1609 = vld [vmem:[#allocation2 + $0x28] sm:$0xf]
      %v1610 = vld [vmem:[#allocation2 + $0x2c] sm:$0xf]
      %v1611 = vld [vmem:[#allocation2 + $0x30] sm:$0xf]
      %v1612 = vld [vmem:[#allocation2 + $0x34] sm:$0xf]
      %v1613 = vld [vmem:[#allocation2 + $0x38] sm:$0xf]
      %v1614 = vld [vmem:[#allocation2 + $0x3c] sm:$0xf]
      %v1615 = vld [vmem:[#allocation2 + $0x40] sm:$0xf]
      %v1616 = vld [vmem:[#allocation2 + $0x44] sm:$0xf]
      %v1617 = vld [vmem:[#allocation2 + $0x48] sm:$0xf]
      %v1618 = vld [vmem:[#allocation2 + $0x4c] sm:$0xf]
      %v1619 = vld [vmem:[#allocation2 + $0x50] sm:$0xf]
      %v1620 = vld [vmem:[#allocation2 + $0x54] sm:$0xf]
      %v1621 = vld [vmem:[#allocation2 + $0x58] sm:$0xf]
      %v1622 = vld [vmem:[#allocation2 + $0x5c] sm:$0xf]
      %v1623 = vld [vmem:[#allocation2 + $0x60] sm:$0xf]
      %v1624 = vld [vmem:[#allocation2 + $0x64] sm:$0xf]
      %v1625 = vld [vmem:[#allocation2 + $0x68] sm:$0xf]
      %v1626 = vld [vmem:[#allocation2 + $0x6c] sm:$0xf]
      %v1627 = vld [vmem:[#allocation2 + $0x70] sm:$0xf]
      %v1628 = vld [vmem:[#allocation2 + $0x74] sm:$0xf]
      %v1629 = vld [vmem:[#allocation2 + $0x78] sm:$0xf]
      %v1630 = vld [vmem:[#allocation2 + $0x7c] sm:$0xf]
      %v1631 = vld [vmem:[%s886] sm:$0xf]
      %v1632 = vld [vmem:[%s886 + $0x4] sm:$0xf]
      %v1633 = vld [vmem:[%s886 + $0x8] sm:$0xf]
      %v1634 = vld [vmem:[%s886 + $0xc] sm:$0xf]
      %v1635 = vld [vmem:[%s886 + $0x10] sm:$0xf]
      %v1636 = vld [vmem:[%s886 + $0x14] sm:$0xf]
      %v1637 = vld [vmem:[%s886 + $0x18] sm:$0xf]
      %v1638 = vld [vmem:[%s886 + $0x1c] sm:$0xf]
      %v1639 = vld [vmem:[%s886 + $0x20] sm:$0xf]
      %v1640 = vld [vmem:[%s886 + $0x24] sm:$0xf]
      %v1641 = vld [vmem:[%s886 + $0x28] sm:$0xf]
      %v1642 = vld [vmem:[%s886 + $0x2c] sm:$0xf]
      %v1643 = vld [vmem:[%s886 + $0x30] sm:$0xf]
      %v1644 = vld [vmem:[%s886 + $0x34] sm:$0xf]
      %v1645 = vld [vmem:[%s886 + $0x38] sm:$0xf]
      %v1646 = vld [vmem:[%s886 + $0x3c] sm:$0xf]
      %v1647 = vld [vmem:[%s886 + $0x40] sm:$0xf]
      %v1648 = vld [vmem:[%s886 + $0x44] sm:$0xf]
      %v1649 = vld [vmem:[%s886 + $0x48] sm:$0xf]
      %v1650 = vld [vmem:[%s886 + $0x4c] sm:$0xf]
      %v1651 = vld [vmem:[%s886 + $0x50] sm:$0xf]
      %v1652 = vld [vmem:[%s886 + $0x54] sm:$0xf]
      %v1653 = vld [vmem:[%s886 + $0x58] sm:$0xf]
      %v1654 = vld [vmem:[%s886 + $0x5c] sm:$0xf]
      %v1655 = vld [vmem:[%s886 + $0x60] sm:$0xf]
      %v1656 = vld [vmem:[%s886 + $0x64] sm:$0xf]
      %v1657 = vld [vmem:[%s886 + $0x68] sm:$0xf]
      %v1658 = vld [vmem:[%s886 + $0x6c] sm:$0xf]
      %v1659 = vld [vmem:[%s886 + $0x70] sm:$0xf]
      %v1660 = vld [vmem:[%s886 + $0x74] sm:$0xf]
      %v1661 = vld [vmem:[%s886 + $0x78] sm:$0xf]
      %v1662 = vld [vmem:[%s886 + $0x7c] sm:$0xf]
      %v1695 = vunpack.c.l.b16 %v1631
      %v1696 = vunpack.c.l.b16 %v1632
      %v1697 = vunpack.c.l.b16 %v1633
      %v1698 = vunpack.c.l.b16 %v1634
      %v1699 = vunpack.c.l.b16 %v1635
      %v1700 = vunpack.c.l.b16 %v1636
      %v1701 = vunpack.c.l.b16 %v1637
      %v1702 = vunpack.c.l.b16 %v1638
      %v1703 = vunpack.c.l.b16 %v1639
      %v1704 = vunpack.c.l.b16 %v1640
      %v1705 = vunpack.c.l.b16 %v1641
      %v1706 = vunpack.c.l.b16 %v1642
      %v1707 = vunpack.c.l.b16 %v1643
      %v1708 = vunpack.c.l.b16 %v1644
      %v1709 = vunpack.c.l.b16 %v1645
      %v1710 = vunpack.c.l.b16 %v1646
      %v1711 = vunpack.c.l.b16 %v1647
      %v1712 = vunpack.c.l.b16 %v1648
      %v1713 = vunpack.c.l.b16 %v1649
      %v1714 = vunpack.c.l.b16 %v1650
      %v1715 = vunpack.c.l.b16 %v1651
      %v1716 = vunpack.c.l.b16 %v1652
      %v1717 = vunpack.c.l.b16 %v1653
      %v1718 = vunpack.c.l.b16 %v1654
      %v1719 = vunpack.c.l.b16 %v1655
      %v1720 = vunpack.c.l.b16 %v1656
      %v1721 = vunpack.c.l.b16 %v1657
      %v1722 = vunpack.c.l.b16 %v1658
      %v1723 = vunpack.c.l.b16 %v1659
      %v1724 = vunpack.c.l.b16 %v1660
      %v1725 = vunpack.c.l.b16 %v1661
      %v1726 = vunpack.c.l.b16 %v1662
      %v1727 = vpack.c.b16 %v1696, %v1695
      %v1728 = vpack.c.b16 %v1698, %v1697
      %v1729 = vpack.c.b16 %v1700, %v1699
      %v1730 = vpack.c.b16 %v1702, %v1701
      %v1731 = vpack.c.b16 %v1704, %v1703
      %v1732 = vpack.c.b16 %v1706, %v1705
      %v1733 = vpack.c.b16 %v1708, %v1707
      %v1734 = vpack.c.b16 %v1710, %v1709
      %v1735 = vpack.c.b16 %v1712, %v1711
      %v1736 = vpack.c.b16 %v1714, %v1713
      %v1737 = vpack.c.b16 %v1716, %v1715
      %v1738 = vpack.c.b16 %v1718, %v1717
      %v1739 = vpack.c.b16 %v1720, %v1719
      %v1740 = vpack.c.b16 %v1722, %v1721
      %v1741 = vpack.c.b16 %v1724, %v1723
      %v1742 = vpack.c.b16 %v1726, %v1725
      %v1745 = vunpack.c.l.b16 %v1595
      %v1746 = vunpack.c.l.b16 %v1596
      %v1747 = vpack.c.b16 %v1746, %v1745
      %vm1748 = vcmask 97280
      %v1750 = vsel %vm1748, %v1727, 0
      %v1753 = vsel %vm1748, %v1728, 0
      %v1756 = vsel %vm1748, %v1729, 0
      %v1759 = vsel %vm1748, %v1730, 0
      %v1762 = vsel %vm1748, %v1731, 0
      %v1765 = vsel %vm1748, %v1732, 0
      %v1768 = vsel %vm1748, %v1733, 0
      %v1771 = vsel %vm1748, %v1734, 0
      %v1774 = vsel %vm1748, %v1735, 0
      %v1777 = vsel %vm1748, %v1736, 0
      %v1780 = vsel %vm1748, %v1737, 0
      %v1783 = vsel %vm1748, %v1738, 0
      %v1786 = vsel %vm1748, %v1739, 0
      %v1789 = vsel %vm1748, %v1740, 0
      %v1792 = vsel %vm1748, %v1741, 0
      %v1795 = vsel %vm1748, %v1742, 0
      %vm1797 = vcmask 1045504
      %v1799 = vsel %vm1797, %v1747, 0
      %1801 = vmatpush.bf16.msra.mxu0 0
      %1802 = vmatpush.bf16.msra.mxu0 0
      %1803 = vmatpush.bf16.msra.mxu0 0
      %1804 = vmatpush.bf16.msra.mxu0 0
      %1805 = vmatpush.bf16.msra.mxu0 0
      %1806 = vmatpush.bf16.msra.mxu0 0
      %1807 = vmatpush.bf16.msra.mxu0 0
      %1808 = vmatpush.bf16.msra.mxu0 %v1799
      %1809 = vmatmul.bf16.gmra.mxu0 %v1750
      %v1810 = vpop.f32.mrf.mxu0
      %v1811 = vadd.f32 0.0, %v1810
      %v1812 = vpop.f32.mrf.mxu0
      %v1813 = vadd.f32 0.0, %v1812
      %1814 = vmatmul.bf16.gmra.mxu0 %v1753
      %v1815 = vpop.f32.mrf.mxu0
      %v1816 = vadd.f32 0.0, %v1815
      %v1817 = vpop.f32.mrf.mxu0
      %v1818 = vadd.f32 0.0, %v1817
      %1819 = vmatmul.bf16.gmra.mxu0 %v1756
      %v1820 = vpop.f32.mrf.mxu0
      %v1821 = vadd.f32 0.0, %v1820
      %v1822 = vpop.f32.mrf.mxu0
      %v1823 = vadd.f32 0.0, %v1822
      %1824 = vmatmul.bf16.gmra.mxu0 %v1759
      %v1825 = vpop.f32.mrf.mxu0
      %v1826 = vadd.f32 0.0, %v1825
      %v1827 = vpop.f32.mrf.mxu0
      %v1828 = vadd.f32 0.0, %v1827
      %1829 = vmatmul.bf16.gmra.mxu0 %v1762
      %v1830 = vpop.f32.mrf.mxu0
      %v1831 = vadd.f32 0.0, %v1830
      %v1832 = vpop.f32.mrf.mxu0
      %v1833 = vadd.f32 0.0, %v1832
      %1834 = vmatmul.bf16.gmra.mxu0 %v1765
      %v1835 = vpop.f32.mrf.mxu0
      %v1836 = vadd.f32 0.0, %v1835
      %v1837 = vpop.f32.mrf.mxu0
      %v1838 = vadd.f32 0.0, %v1837
      %1839 = vmatmul.bf16.gmra.mxu0 %v1768
      %v1840 = vpop.f32.mrf.mxu0
      %v1841 = vadd.f32 0.0, %v1840
      %v1842 = vpop.f32.mrf.mxu0
      %v1843 = vadd.f32 0.0, %v1842
      %1844 = vmatmul.bf16.gmra.mxu0 %v1771
      %v1845 = vpop.f32.mrf.mxu0
      %v1846 = vadd.f32 0.0, %v1845
      %v1847 = vpop.f32.mrf.mxu0
      %v1848 = vadd.f32 0.0, %v1847
      %1849 = vmatmul.bf16.gmra.mxu0 %v1774
      %v1850 = vpop.f32.mrf.mxu0
      %v1851 = vadd.f32 0.0, %v1850
      %v1852 = vpop.f32.mrf.mxu0
      %v1853 = vadd.f32 0.0, %v1852
      %1854 = vmatmul.bf16.gmra.mxu0 %v1777
      %v1855 = vpop.f32.mrf.mxu0
      %v1856 = vadd.f32 0.0, %v1855
      %v1857 = vpop.f32.mrf.mxu0
      %v1858 = vadd.f32 0.0, %v1857
      %1859 = vmatmul.bf16.gmra.mxu0 %v1780
      %v1860 = vpop.f32.mrf.mxu0
      %v1861 = vadd.f32 0.0, %v1860
      %v1862 = vpop.f32.mrf.mxu0
      %v1863 = vadd.f32 0.0, %v1862
      %1864 = vmatmul.bf16.gmra.mxu0 %v1783
      %v1865 = vpop.f32.mrf.mxu0
      %v1866 = vadd.f32 0.0, %v1865
      %v1867 = vpop.f32.mrf.mxu0
      %v1868 = vadd.f32 0.0, %v1867
      %1869 = vmatmul.bf16.gmra.mxu0 %v1786
      %v1870 = vpop.f32.mrf.mxu0
      %v1871 = vadd.f32 0.0, %v1870
      %v1872 = vpop.f32.mrf.mxu0
      %v1873 = vadd.f32 0.0, %v1872
      %1874 = vmatmul.bf16.gmra.mxu0 %v1789
      %v1875 = vpop.f32.mrf.mxu0
      %v1876 = vadd.f32 0.0, %v1875
      %v1877 = vpop.f32.mrf.mxu0
      %v1878 = vadd.f32 0.0, %v1877
      %1879 = vmatmul.bf16.gmra.mxu0 %v1792
      %v1880 = vpop.f32.mrf.mxu0
      %v1881 = vadd.f32 0.0, %v1880
      %v1882 = vpop.f32.mrf.mxu0
      %v1883 = vadd.f32 0.0, %v1882
      %1884 = vmatmul.bf16.gmra.mxu0 %v1795
      %v1885 = vpop.f32.mrf.mxu0
      %v1886 = vadd.f32 0.0, %v1885
      %v1887 = vpop.f32.mrf.mxu0
      %v1888 = vadd.f32 0.0, %v1887
      %1889 = vdwg.mxu0
      %v1922 = vunpack.c.l.b16 %v1599
      %v1923 = vunpack.c.l.b16 %v1600
      %v1924 = vunpack.c.l.b16 %v1601
      %v1925 = vunpack.c.l.b16 %v1602
      %v1926 = vunpack.c.l.b16 %v1603
      %v1927 = vunpack.c.l.b16 %v1604
      %v1928 = vunpack.c.l.b16 %v1605
      %v1929 = vunpack.c.l.b16 %v1606
      %v1930 = vunpack.c.l.b16 %v1607
      %v1931 = vunpack.c.l.b16 %v1608
      %v1932 = vunpack.c.l.b16 %v1609
      %v1933 = vunpack.c.l.b16 %v1610
      %v1934 = vunpack.c.l.b16 %v1611
      %v1935 = vunpack.c.l.b16 %v1612
      %v1936 = vunpack.c.l.b16 %v1613
      %v1937 = vunpack.c.l.b16 %v1614
      %v1938 = vunpack.c.l.b16 %v1615
      %v1939 = vunpack.c.l.b16 %v1616
      %v1940 = vunpack.c.l.b16 %v1617
      %v1941 = vunpack.c.l.b16 %v1618
      %v1942 = vunpack.c.l.b16 %v1619
      %v1943 = vunpack.c.l.b16 %v1620
      %v1944 = vunpack.c.l.b16 %v1621
      %v1945 = vunpack.c.l.b16 %v1622
      %v1946 = vunpack.c.l.b16 %v1623
      %v1947 = vunpack.c.l.b16 %v1624
      %v1948 = vunpack.c.l.b16 %v1625
      %v1949 = vunpack.c.l.b16 %v1626
      %v1950 = vunpack.c.l.b16 %v1627
      %v1951 = vunpack.c.l.b16 %v1628
      %v1952 = vunpack.c.l.b16 %v1629
      %v1953 = vunpack.c.l.b16 %v1630
      %v1954 = vpack.c.b16 %v1923, %v1922
      %v1955 = vpack.c.b16 %v1925, %v1924
      %v1956 = vpack.c.b16 %v1927, %v1926
      %v1957 = vpack.c.b16 %v1929, %v1928
      %v1958 = vpack.c.b16 %v1931, %v1930
      %v1959 = vpack.c.b16 %v1933, %v1932
      %v1960 = vpack.c.b16 %v1935, %v1934
      %v1961 = vpack.c.b16 %v1937, %v1936
      %v1962 = vpack.c.b16 %v1939, %v1938
      %v1963 = vpack.c.b16 %v1941, %v1940
      %v1964 = vpack.c.b16 %v1943, %v1942
      %v1965 = vpack.c.b16 %v1945, %v1944
      %v1966 = vpack.c.b16 %v1947, %v1946
      %v1967 = vpack.c.b16 %v1949, %v1948
      %v1968 = vpack.c.b16 %v1951, %v1950
      %v1969 = vpack.c.b16 %v1953, %v1952
      %v1972 = vunpack.c.l.b16 %v1593
      %v1973 = vunpack.c.l.b16 %v1594
      %v1974 = vpack.c.b16 %v1973, %v1972
      %v1976 = vsel %vm1748, %v1954, 0
      %v1979 = vsel %vm1748, %v1955, 0
      %v1982 = vsel %vm1748, %v1956, 0
      %v1985 = vsel %vm1748, %v1957, 0
      %v1988 = vsel %vm1748, %v1958, 0
      %v1991 = vsel %vm1748, %v1959, 0
      %v1994 = vsel %vm1748, %v1960, 0
      %v1997 = vsel %vm1748, %v1961, 0
      %v2000 = vsel %vm1748, %v1962, 0
      %v2003 = vsel %vm1748, %v1963, 0
      %v2006 = vsel %vm1748, %v1964, 0
      %v2009 = vsel %vm1748, %v1965, 0
      %v2012 = vsel %vm1748, %v1966, 0
      %v2015 = vsel %vm1748, %v1967, 0
      %v2018 = vsel %vm1748, %v1968, 0
      %v2021 = vsel %vm1748, %v1969, 0
      %v2024 = vsel %vm1797, %v1974, 0
      %2026 = vmatpush.bf16.msra.mxu0 0
      %2027 = vmatpush.bf16.msra.mxu0 0
      %2028 = vmatpush.bf16.msra.mxu0 0
      %2029 = vmatpush.bf16.msra.mxu0 0
      %2030 = vmatpush.bf16.msra.mxu0 0
      %2031 = vmatpush.bf16.msra.mxu0 0
      %2032 = vmatpush.bf16.msra.mxu0 0
      %2033 = vmatpush.bf16.msra.mxu0 %v2024
      %2034 = vmatmul.bf16.gmra.mxu0 %v1976
      %v2035 = vpop.f32.mrf.mxu0
      %v2036 = vadd.f32 %v1811, %v2035
      %v2037 = vpop.f32.mrf.mxu0
      %v2038 = vadd.f32 %v1813, %v2037
      %2039 = vmatmul.bf16.gmra.mxu0 %v1979
      %v2040 = vpop.f32.mrf.mxu0
      %v2041 = vadd.f32 %v1816, %v2040
      %v2042 = vpop.f32.mrf.mxu0
      %v2043 = vadd.f32 %v1818, %v2042
      %2044 = vmatmul.bf16.gmra.mxu0 %v1982
      %v2045 = vpop.f32.mrf.mxu0
      %v2046 = vadd.f32 %v1821, %v2045
      %v2047 = vpop.f32.mrf.mxu0
      %v2048 = vadd.f32 %v1823, %v2047
      %2049 = vmatmul.bf16.gmra.mxu0 %v1985
      %v2050 = vpop.f32.mrf.mxu0
      %v2051 = vadd.f32 %v1826, %v2050
      %v2052 = vpop.f32.mrf.mxu0
      %v2053 = vadd.f32 %v1828, %v2052
      %2054 = vmatmul.bf16.gmra.mxu0 %v1988
      %v2055 = vpop.f32.mrf.mxu0
      %v2056 = vadd.f32 %v1831, %v2055
      %v2057 = vpop.f32.mrf.mxu0
      %v2058 = vadd.f32 %v1833, %v2057
      %2059 = vmatmul.bf16.gmra.mxu0 %v1991
      %v2060 = vpop.f32.mrf.mxu0
      %v2061 = vadd.f32 %v1836, %v2060
      %v2062 = vpop.f32.mrf.mxu0
      %v2063 = vadd.f32 %v1838, %v2062
      %2064 = vmatmul.bf16.gmra.mxu0 %v1994
      %v2065 = vpop.f32.mrf.mxu0
      %v2066 = vadd.f32 %v1841, %v2065
      %v2067 = vpop.f32.mrf.mxu0
      %v2068 = vadd.f32 %v1843, %v2067
      %2069 = vmatmul.bf16.gmra.mxu0 %v1997
      %v2070 = vpop.f32.mrf.mxu0
      %v2071 = vadd.f32 %v1846, %v2070
      %v2072 = vpop.f32.mrf.mxu0
      %v2073 = vadd.f32 %v1848, %v2072
      %2074 = vmatmul.bf16.gmra.mxu0 %v2000
      %v2075 = vpop.f32.mrf.mxu0
      %v2076 = vadd.f32 %v1851, %v2075
      %v2077 = vpop.f32.mrf.mxu0
      %v2078 = vadd.f32 %v1853, %v2077
      %2079 = vmatmul.bf16.gmra.mxu0 %v2003
      %v2080 = vpop.f32.mrf.mxu0
      %v2081 = vadd.f32 %v1856, %v2080
      %v2082 = vpop.f32.mrf.mxu0
      %v2083 = vadd.f32 %v1858, %v2082
      %2084 = vmatmul.bf16.gmra.mxu0 %v2006
      %v2085 = vpop.f32.mrf.mxu0
      %v2086 = vadd.f32 %v1861, %v2085
      %v2087 = vpop.f32.mrf.mxu0
      %v2088 = vadd.f32 %v1863, %v2087
      %2089 = vmatmul.bf16.gmra.mxu0 %v2009
      %v2090 = vpop.f32.mrf.mxu0
      %v2091 = vadd.f32 %v1866, %v2090
      %v2092 = vpop.f32.mrf.mxu0
      %v2093 = vadd.f32 %v1868, %v2092
      %2094 = vmatmul.bf16.gmra.mxu0 %v2012
      %v2095 = vpop.f32.mrf.mxu0
      %v2096 = vadd.f32 %v1871, %v2095
      %v2097 = vpop.f32.mrf.mxu0
      %v2098 = vadd.f32 %v1873, %v2097
      %2099 = vmatmul.bf16.gmra.mxu0 %v2015
      %v2100 = vpop.f32.mrf.mxu0
      %v2101 = vadd.f32 %v1876, %v2100
      %v2102 = vpop.f32.mrf.mxu0
      %v2103 = vadd.f32 %v1878, %v2102
      %2104 = vmatmul.bf16.gmra.mxu0 %v2018
      %v2105 = vpop.f32.mrf.mxu0
      %v2106 = vadd.f32 %v1881, %v2105
      %v2107 = vpop.f32.mrf.mxu0
      %v2108 = vadd.f32 %v1883, %v2107
      %2109 = vmatmul.bf16.gmra.mxu0 %v2021
      %v2110 = vpop.f32.mrf.mxu0
      %v2111 = vadd.f32 %v1886, %v2110
      %v2112 = vpop.f32.mrf.mxu0
      %v2113 = vadd.f32 %v1888, %v2112
      %2114 = vdwg.mxu0
      %s2115 = scalar_lea.vmem [#allocation2], 16
      %v2116 = vld [vmem:[%s2115] sm:$0xf]
      %v2117 = vld [vmem:[%s2115 + $0x4] sm:$0xf]
      %v2118 = vld [vmem:[%s2115 + $0x8] sm:$0xf]
      %v2119 = vld [vmem:[%s2115 + $0xc] sm:$0xf]
      %v2120 = vld [vmem:[%s2115 + $0x10] sm:$0xf]
      %v2121 = vld [vmem:[%s2115 + $0x14] sm:$0xf]
      %v2122 = vld [vmem:[%s2115 + $0x18] sm:$0xf]
      %v2123 = vld [vmem:[%s2115 + $0x1c] sm:$0xf]
      %v2124 = vld [vmem:[%s2115 + $0x20] sm:$0xf]
      %v2125 = vld [vmem:[%s2115 + $0x24] sm:$0xf]
      %v2126 = vld [vmem:[%s2115 + $0x28] sm:$0xf]
      %v2127 = vld [vmem:[%s2115 + $0x2c] sm:$0xf]
      %v2128 = vld [vmem:[%s2115 + $0x30] sm:$0xf]
      %v2129 = vld [vmem:[%s2115 + $0x34] sm:$0xf]
      %v2130 = vld [vmem:[%s2115 + $0x38] sm:$0xf]
      %v2131 = vld [vmem:[%s2115 + $0x3c] sm:$0xf]
      %v2132 = vld [vmem:[%s2115 + $0x40] sm:$0xf]
      %v2133 = vld [vmem:[%s2115 + $0x44] sm:$0xf]
      %v2134 = vld [vmem:[%s2115 + $0x48] sm:$0xf]
      %v2135 = vld [vmem:[%s2115 + $0x4c] sm:$0xf]
      %v2136 = vld [vmem:[%s2115 + $0x50] sm:$0xf]
      %v2137 = vld [vmem:[%s2115 + $0x54] sm:$0xf]
      %v2138 = vld [vmem:[%s2115 + $0x58] sm:$0xf]
      %v2139 = vld [vmem:[%s2115 + $0x5c] sm:$0xf]
      %v2140 = vld [vmem:[%s2115 + $0x60] sm:$0xf]
      %v2141 = vld [vmem:[%s2115 + $0x64] sm:$0xf]
      %v2142 = vld [vmem:[%s2115 + $0x68] sm:$0xf]
      %v2143 = vld [vmem:[%s2115 + $0x6c] sm:$0xf]
      %v2144 = vld [vmem:[%s2115 + $0x70] sm:$0xf]
      %v2145 = vld [vmem:[%s2115 + $0x74] sm:$0xf]
      %v2146 = vld [vmem:[%s2115 + $0x78] sm:$0xf]
      %v2147 = vld [vmem:[%s2115 + $0x7c] sm:$0xf]
      %v2180 = vunpack.c.l.b16 %v2116
      %v2181 = vunpack.c.l.b16 %v2117
      %v2182 = vunpack.c.l.b16 %v2118
      %v2183 = vunpack.c.l.b16 %v2119
      %v2184 = vunpack.c.l.b16 %v2120
      %v2185 = vunpack.c.l.b16 %v2121
      %v2186 = vunpack.c.l.b16 %v2122
      %v2187 = vunpack.c.l.b16 %v2123
      %v2188 = vunpack.c.l.b16 %v2124
      %v2189 = vunpack.c.l.b16 %v2125
      %v2190 = vunpack.c.l.b16 %v2126
      %v2191 = vunpack.c.l.b16 %v2127
      %v2192 = vunpack.c.l.b16 %v2128
      %v2193 = vunpack.c.l.b16 %v2129
      %v2194 = vunpack.c.l.b16 %v2130
      %v2195 = vunpack.c.l.b16 %v2131
      %v2196 = vunpack.c.l.b16 %v2132
      %v2197 = vunpack.c.l.b16 %v2133
      %v2198 = vunpack.c.l.b16 %v2134
      %v2199 = vunpack.c.l.b16 %v2135
      %v2200 = vunpack.c.l.b16 %v2136
      %v2201 = vunpack.c.l.b16 %v2137
      %v2202 = vunpack.c.l.b16 %v2138
      %v2203 = vunpack.c.l.b16 %v2139
      %v2204 = vunpack.c.l.b16 %v2140
      %v2205 = vunpack.c.l.b16 %v2141
      %v2206 = vunpack.c.l.b16 %v2142
      %v2207 = vunpack.c.l.b16 %v2143
      %v2208 = vunpack.c.l.b16 %v2144
      %v2209 = vunpack.c.l.b16 %v2145
      %v2210 = vunpack.c.l.b16 %v2146
      %v2211 = vunpack.c.l.b16 %v2147
      %v2212 = vpack.c.b16 %v2181, %v2180
      %v2213 = vpack.c.b16 %v2183, %v2182
      %v2214 = vpack.c.b16 %v2185, %v2184
      %v2215 = vpack.c.b16 %v2187, %v2186
      %v2216 = vpack.c.b16 %v2189, %v2188
      %v2217 = vpack.c.b16 %v2191, %v2190
      %v2218 = vpack.c.b16 %v2193, %v2192
      %v2219 = vpack.c.b16 %v2195, %v2194
      %v2220 = vpack.c.b16 %v2197, %v2196
      %v2221 = vpack.c.b16 %v2199, %v2198
      %v2222 = vpack.c.b16 %v2201, %v2200
      %v2223 = vpack.c.b16 %v2203, %v2202
      %v2224 = vpack.c.b16 %v2205, %v2204
      %v2225 = vpack.c.b16 %v2207, %v2206
      %v2226 = vpack.c.b16 %v2209, %v2208
      %v2227 = vpack.c.b16 %v2211, %v2210
      %v2230 = vunpack.c.l.b16 %v1597
      %v2231 = vunpack.c.l.b16 %v1598
      %v2232 = vpack.c.b16 %v2231, %v2230
      %v2234 = vsel %vm1748, %v2212, 0
      %v2237 = vsel %vm1748, %v2213, 0
      %v2240 = vsel %vm1748, %v2214, 0
      %v2243 = vsel %vm1748, %v2215, 0
      %v2246 = vsel %vm1748, %v2216, 0
      %v2249 = vsel %vm1748, %v2217, 0
      %v2252 = vsel %vm1748, %v2218, 0
      %v2255 = vsel %vm1748, %v2219, 0
      %v2258 = vsel %vm1748, %v2220, 0
      %v2261 = vsel %vm1748, %v2221, 0
      %v2264 = vsel %vm1748, %v2222, 0
      %v2267 = vsel %vm1748, %v2223, 0
      %v2270 = vsel %vm1748, %v2224, 0
      %v2273 = vsel %vm1748, %v2225, 0
      %v2276 = vsel %vm1748, %v2226, 0
      %v2279 = vsel %vm1748, %v2227, 0
      %v2282 = vsel %vm1797, %v2232, 0
      %2284 = vmatpush.bf16.msra.mxu0 0
      %2285 = vmatpush.bf16.msra.mxu0 0
      %2286 = vmatpush.bf16.msra.mxu0 0
      %2287 = vmatpush.bf16.msra.mxu0 0
      %2288 = vmatpush.bf16.msra.mxu0 0
      %2289 = vmatpush.bf16.msra.mxu0 0
      %2290 = vmatpush.bf16.msra.mxu0 0
      %2291 = vmatpush.bf16.msra.mxu0 %v2282
      %2292 = vmatmul.bf16.gmra.mxu0 %v2234
      %v2293 = vpop.f32.mrf.mxu0
      %v2294 = vadd.f32 0.0, %v2293
      %v2295 = vpop.f32.mrf.mxu0
      %v2296 = vadd.f32 0.0, %v2295
      %2297 = vmatmul.bf16.gmra.mxu0 %v2237
      %v2298 = vpop.f32.mrf.mxu0
      %v2299 = vadd.f32 0.0, %v2298
      %v2300 = vpop.f32.mrf.mxu0
      %v2301 = vadd.f32 0.0, %v2300
      %2302 = vmatmul.bf16.gmra.mxu0 %v2240
      %v2303 = vpop.f32.mrf.mxu0
      %v2304 = vadd.f32 0.0, %v2303
      %v2305 = vpop.f32.mrf.mxu0
      %v2306 = vadd.f32 0.0, %v2305
      %2307 = vmatmul.bf16.gmra.mxu0 %v2243
      %v2308 = vpop.f32.mrf.mxu0
      %v2309 = vadd.f32 0.0, %v2308
      %v2310 = vpop.f32.mrf.mxu0
      %v2311 = vadd.f32 0.0, %v2310
      %2312 = vmatmul.bf16.gmra.mxu0 %v2246
      %v2313 = vpop.f32.mrf.mxu0
      %v2314 = vadd.f32 0.0, %v2313
      %v2315 = vpop.f32.mrf.mxu0
      %v2316 = vadd.f32 0.0, %v2315
      %2317 = vmatmul.bf16.gmra.mxu0 %v2249
      %v2318 = vpop.f32.mrf.mxu0
      %v2319 = vadd.f32 0.0, %v2318
      %v2320 = vpop.f32.mrf.mxu0
      %v2321 = vadd.f32 0.0, %v2320
      %2322 = vmatmul.bf16.gmra.mxu0 %v2252
      %v2323 = vpop.f32.mrf.mxu0
      %v2324 = vadd.f32 0.0, %v2323
      %v2325 = vpop.f32.mrf.mxu0
      %v2326 = vadd.f32 0.0, %v2325
      %2327 = vmatmul.bf16.gmra.mxu0 %v2255
      %v2328 = vpop.f32.mrf.mxu0
      %v2329 = vadd.f32 0.0, %v2328
      %v2330 = vpop.f32.mrf.mxu0
      %v2331 = vadd.f32 0.0, %v2330
      %2332 = vmatmul.bf16.gmra.mxu0 %v2258
      %v2333 = vpop.f32.mrf.mxu0
      %v2334 = vadd.f32 0.0, %v2333
      %v2335 = vpop.f32.mrf.mxu0
      %v2336 = vadd.f32 0.0, %v2335
      %2337 = vmatmul.bf16.gmra.mxu0 %v2261
      %v2338 = vpop.f32.mrf.mxu0
      %v2339 = vadd.f32 0.0, %v2338
      %v2340 = vpop.f32.mrf.mxu0
      %v2341 = vadd.f32 0.0, %v2340
      %2342 = vmatmul.bf16.gmra.mxu0 %v2264
      %v2343 = vpop.f32.mrf.mxu0
      %v2344 = vadd.f32 0.0, %v2343
      %v2345 = vpop.f32.mrf.mxu0
      %v2346 = vadd.f32 0.0, %v2345
      %2347 = vmatmul.bf16.gmra.mxu0 %v2267
      %v2348 = vpop.f32.mrf.mxu0
      %v2349 = vadd.f32 0.0, %v2348
      %v2350 = vpop.f32.mrf.mxu0
      %v2351 = vadd.f32 0.0, %v2350
      %2352 = vmatmul.bf16.gmra.mxu0 %v2270
      %v2353 = vpop.f32.mrf.mxu0
      %v2354 = vadd.f32 0.0, %v2353
      %v2355 = vpop.f32.mrf.mxu0
      %v2356 = vadd.f32 0.0, %v2355
      %2357 = vmatmul.bf16.gmra.mxu0 %v2273
      %v2358 = vpop.f32.mrf.mxu0
      %v2359 = vadd.f32 0.0, %v2358
      %v2360 = vpop.f32.mrf.mxu0
      %v2361 = vadd.f32 0.0, %v2360
      %2362 = vmatmul.bf16.gmra.mxu0 %v2276
      %v2363 = vpop.f32.mrf.mxu0
      %v2364 = vadd.f32 0.0, %v2363
      %v2365 = vpop.f32.mrf.mxu0
      %v2366 = vadd.f32 0.0, %v2365
      %2367 = vmatmul.bf16.gmra.mxu0 %v2279
      %v2368 = vpop.f32.mrf.mxu0
      %v2369 = vadd.f32 0.0, %v2368
      %v2370 = vpop.f32.mrf.mxu0
      %v2371 = vadd.f32 0.0, %v2370
      %2372 = vdwg.mxu0
      %v2373 = vadd.f32 %v2036, %v2294
      %v2374 = vadd.f32 %v2038, %v2296
      %v2375 = vadd.f32 %v2041, %v2299
      %v2376 = vadd.f32 %v2043, %v2301
      %v2377 = vadd.f32 %v2046, %v2304
      %v2378 = vadd.f32 %v2048, %v2306
      %v2379 = vadd.f32 %v2051, %v2309
      %v2380 = vadd.f32 %v2053, %v2311
      %v2381 = vadd.f32 %v2056, %v2314
      %v2382 = vadd.f32 %v2058, %v2316
      %v2383 = vadd.f32 %v2061, %v2319
      %v2384 = vadd.f32 %v2063, %v2321
      %v2385 = vadd.f32 %v2066, %v2324
      %v2386 = vadd.f32 %v2068, %v2326
      %v2387 = vadd.f32 %v2071, %v2329
      %v2388 = vadd.f32 %v2073, %v2331
      %v2389 = vadd.f32 %v2076, %v2334
      %v2390 = vadd.f32 %v2078, %v2336
      %v2391 = vadd.f32 %v2081, %v2339
      %v2392 = vadd.f32 %v2083, %v2341
      %v2393 = vadd.f32 %v2086, %v2344
      %v2394 = vadd.f32 %v2088, %v2346
      %v2395 = vadd.f32 %v2091, %v2349
      %v2396 = vadd.f32 %v2093, %v2351
      %v2397 = vadd.f32 %v2096, %v2354
      %v2398 = vadd.f32 %v2098, %v2356
      %v2399 = vadd.f32 %v2101, %v2359
      %v2400 = vadd.f32 %v2103, %v2361
      %v2401 = vadd.f32 %v2106, %v2364
      %v2402 = vadd.f32 %v2108, %v2366
      %v2403 = vadd.f32 %v2111, %v2369
      %v2404 = vadd.f32 %v2113, %v2371
      %vm2405 = vcmask 31744
      %2406 = vst.msk [vmem:[%s296] sm:$0xff] %vm2405, %v2373
      %2407 = vst.msk [vmem:[%s296 + $0x8] sm:$0xff] %vm2405, %v2374
      %2408 = vst.msk [vmem:[%s296 + $0x10] sm:$0xff] %vm2405, %v2375
      %2409 = vst.msk [vmem:[%s296 + $0x18] sm:$0xff] %vm2405, %v2376
      %2410 = vst.msk [vmem:[%s296 + $0x20] sm:$0xff] %vm2405, %v2377
      %2411 = vst.msk [vmem:[%s296 + $0x28] sm:$0xff] %vm2405, %v2378
      %2412 = vst.msk [vmem:[%s296 + $0x30] sm:$0xff] %vm2405, %v2379
      %2413 = vst.msk [vmem:[%s296 + $0x38] sm:$0xff] %vm2405, %v2380
      %2414 = vst.msk [vmem:[%s296 + $0x40] sm:$0xff] %vm2405, %v2381
      %2415 = vst.msk [vmem:[%s296 + $0x48] sm:$0xff] %vm2405, %v2382
      %2416 = vst.msk [vmem:[%s296 + $0x50] sm:$0xff] %vm2405, %v2383
      %2417 = vst.msk [vmem:[%s296 + $0x58] sm:$0xff] %vm2405, %v2384
      %2418 = vst.msk [vmem:[%s296 + $0x60] sm:$0xff] %vm2405, %v2385
      %2419 = vst.msk [vmem:[%s296 + $0x68] sm:$0xff] %vm2405, %v2386
      %2420 = vst.msk [vmem:[%s296 + $0x70] sm:$0xff] %vm2405, %v2387
      %2421 = vst.msk [vmem:[%s296 + $0x78] sm:$0xff] %vm2405, %v2388
      %2422 = vst.msk [vmem:[%s296 + $0x80] sm:$0xff] %vm2405, %v2389
      %2423 = vst.msk [vmem:[%s296 + $0x88] sm:$0xff] %vm2405, %v2390
      %2424 = vst.msk [vmem:[%s296 + $0x90] sm:$0xff] %vm2405, %v2391
      %2425 = vst.msk [vmem:[%s296 + $0x98] sm:$0xff] %vm2405, %v2392
      %2426 = vst.msk [vmem:[%s296 + $0xa0] sm:$0xff] %vm2405, %v2393
      %2427 = vst.msk [vmem:[%s296 + $0xa8] sm:$0xff] %vm2405, %v2394
      %2428 = vst.msk [vmem:[%s296 + $0xb0] sm:$0xff] %vm2405, %v2395
      %2429 = vst.msk [vmem:[%s296 + $0xb8] sm:$0xff] %vm2405, %v2396
      %2430 = vst.msk [vmem:[%s296 + $0xc0] sm:$0xff] %vm2405, %v2397
      %2431 = vst.msk [vmem:[%s296 + $0xc8] sm:$0xff] %vm2405, %v2398
      %2432 = vst.msk [vmem:[%s296 + $0xd0] sm:$0xff] %vm2405, %v2399
      %2433 = vst.msk [vmem:[%s296 + $0xd8] sm:$0xff] %vm2405, %v2400
      %2434 = vst.msk [vmem:[%s296 + $0xe0] sm:$0xff] %vm2405, %v2401
      %2435 = vst.msk [vmem:[%s296 + $0xe8] sm:$0xff] %vm2405, %v2402
      %2436 = vst.msk [vmem:[%s296 + $0xf0] sm:$0xff] %vm2405, %v2403
      %2437 = vst.msk [vmem:[%s296 + $0xf8] sm:$0xff] %vm2405, %v2404
      %v2438 = vsel %vm2405, %v2373, 0.0
      %v2439 = vsel %vm2405, %v2374, 0.0
      %v2440 = vadd.f32 %v2438, %v2439
      %v2441 = vsel %vm2405, %v2375, 0.0
      %v2442 = vadd.f32 %v2440, %v2441
      %v2443 = vsel %vm2405, %v2376, 0.0
      %v2444 = vadd.f32 %v2442, %v2443
      %v2445 = vsel %vm2405, %v2377, 0.0
      %v2446 = vadd.f32 %v2444, %v2445
      %v2447 = vsel %vm2405, %v2378, 0.0
      %v2448 = vadd.f32 %v2446, %v2447
      %v2449 = vsel %vm2405, %v2379, 0.0
      %v2450 = vadd.f32 %v2448, %v2449
      %v2451 = vsel %vm2405, %v2380, 0.0
      %v2452 = vadd.f32 %v2450, %v2451
      %v2453 = vsel %vm2405, %v2381, 0.0
      %v2454 = vadd.f32 %v2452, %v2453
      %v2455 = vsel %vm2405, %v2382, 0.0
      %v2456 = vadd.f32 %v2454, %v2455
      %v2457 = vsel %vm2405, %v2383, 0.0
      %v2458 = vadd.f32 %v2456, %v2457
      %v2459 = vsel %vm2405, %v2384, 0.0
      %v2460 = vadd.f32 %v2458, %v2459
      %v2461 = vsel %vm2405, %v2385, 0.0
      %v2462 = vadd.f32 %v2460, %v2461
      %v2463 = vsel %vm2405, %v2386, 0.0
      %v2464 = vadd.f32 %v2462, %v2463
      %v2465 = vsel %vm2405, %v2387, 0.0
      %v2466 = vadd.f32 %v2464, %v2465
      %v2467 = vsel %vm2405, %v2388, 0.0
      %v2468 = vadd.f32 %v2466, %v2467
      %v2469 = vsel %vm2405, %v2389, 0.0
      %v2470 = vadd.f32 %v2468, %v2469
      %v2471 = vsel %vm2405, %v2390, 0.0
      %v2472 = vadd.f32 %v2470, %v2471
      %v2473 = vsel %vm2405, %v2391, 0.0
      %v2474 = vadd.f32 %v2472, %v2473
      %v2475 = vsel %vm2405, %v2392, 0.0
      %v2476 = vadd.f32 %v2474, %v2475
      %v2477 = vsel %vm2405, %v2393, 0.0
      %v2478 = vadd.f32 %v2476, %v2477
      %v2479 = vsel %vm2405, %v2394, 0.0
      %v2480 = vadd.f32 %v2478, %v2479
      %v2481 = vsel %vm2405, %v2395, 0.0
      %v2482 = vadd.f32 %v2480, %v2481
      %v2483 = vsel %vm2405, %v2396, 0.0
      %v2484 = vadd.f32 %v2482, %v2483
      %v2485 = vsel %vm2405, %v2397, 0.0
      %v2486 = vadd.f32 %v2484, %v2485
      %v2487 = vsel %vm2405, %v2398, 0.0
      %v2488 = vadd.f32 %v2486, %v2487
      %v2489 = vsel %vm2405, %v2399, 0.0
      %v2490 = vadd.f32 %v2488, %v2489
      %v2491 = vsel %vm2405, %v2400, 0.0
      %v2492 = vadd.f32 %v2490, %v2491
      %v2493 = vsel %vm2405, %v2401, 0.0
      %v2494 = vadd.f32 %v2492, %v2493
      %v2495 = vsel %vm2405, %v2402, 0.0
      %v2496 = vadd.f32 %v2494, %v2495
      %v2497 = vsel %vm2405, %v2403, 0.0
      %v2498 = vadd.f32 %v2496, %v2497
      %v2499 = vsel %vm2405, %v2404, 0.0
      %v2500 = vadd.f32 %v2498, %v2499
      %v2501 = vrot.slane %v2500, 4
      %v2502 = vadd.f32 %v2500, %v2501
      %v2503 = vrot.slane %v2502, 2
      %v2504 = vadd.f32 %v2502, %v2503
      %v2505 = vrot.slane %v2504, 1
      %v2506 = vadd.f32 %v2504, %v2505
      %vm2507 = vcmask 24576
      %2508 = vst.msk [vmem:[%s303] sm:$0x1] %vm2507, %v2506
      %v2509 = vmul.f32 %v2373, %v2373
      %v2510 = vmul.f32 %v2374, %v2374
      %v2511 = vmul.f32 %v2375, %v2375
      %v2512 = vmul.f32 %v2376, %v2376
      %v2513 = vmul.f32 %v2377, %v2377
      %v2514 = vmul.f32 %v2378, %v2378
      %v2515 = vmul.f32 %v2379, %v2379
      %v2516 = vmul.f32 %v2380, %v2380
      %v2517 = vmul.f32 %v2381, %v2381
      %v2518 = vmul.f32 %v2382, %v2382
      %v2519 = vmul.f32 %v2383, %v2383
      %v2520 = vmul.f32 %v2384, %v2384
      %v2521 = vmul.f32 %v2385, %v2385
      %v2522 = vmul.f32 %v2386, %v2386
      %v2523 = vmul.f32 %v2387, %v2387
      %v2524 = vmul.f32 %v2388, %v2388
      %v2525 = vmul.f32 %v2389, %v2389
      %v2526 = vmul.f32 %v2390, %v2390
      %v2527 = vmul.f32 %v2391, %v2391
      %v2528 = vmul.f32 %v2392, %v2392
      %v2529 = vmul.f32 %v2393, %v2393
      %v2530 = vmul.f32 %v2394, %v2394
      %v2531 = vmul.f32 %v2395, %v2395
      %v2532 = vmul.f32 %v2396, %v2396
      %v2533 = vmul.f32 %v2397, %v2397
      %v2534 = vmul.f32 %v2398, %v2398
      %v2535 = vmul.f32 %v2399, %v2399
      %v2536 = vmul.f32 %v2400, %v2400
      %v2537 = vmul.f32 %v2401, %v2401
      %v2538 = vmul.f32 %v2402, %v2402
      %v2539 = vmul.f32 %v2403, %v2403
      %v2540 = vmul.f32 %v2404, %v2404
      %v2541 = vsel %vm2405, %v2509, 0.0
      %v2542 = vsel %vm2405, %v2510, 0.0
      %v2543 = vadd.f32 %v2541, %v2542
      %v2544 = vsel %vm2405, %v2511, 0.0
      %v2545 = vadd.f32 %v2543, %v2544
      %v2546 = vsel %vm2405, %v2512, 0.0
      %v2547 = vadd.f32 %v2545, %v2546
      %v2548 = vsel %vm2405, %v2513, 0.0
      %v2549 = vadd.f32 %v2547, %v2548
      %v2550 = vsel %vm2405, %v2514, 0.0
      %v2551 = vadd.f32 %v2549, %v2550
      %v2552 = vsel %vm2405, %v2515, 0.0
      %v2553 = vadd.f32 %v2551, %v2552
      %v2554 = vsel %vm2405, %v2516, 0.0
      %v2555 = vadd.f32 %v2553, %v2554
      %v2556 = vsel %vm2405, %v2517, 0.0
      %v2557 = vadd.f32 %v2555, %v2556
      %v2558 = vsel %vm2405, %v2518, 0.0
      %v2559 = vadd.f32 %v2557, %v2558
      %v2560 = vsel %vm2405, %v2519, 0.0
      %v2561 = vadd.f32 %v2559, %v2560
      %v2562 = vsel %vm2405, %v2520, 0.0
      %v2563 = vadd.f32 %v2561, %v2562
      %v2564 = vsel %vm2405, %v2521, 0.0
      %v2565 = vadd.f32 %v2563, %v2564
      %v2566 = vsel %vm2405, %v2522, 0.0
      %v2567 = vadd.f32 %v2565, %v2566
      %v2568 = vsel %vm2405, %v2523, 0.0
      %v2569 = vadd.f32 %v2567, %v2568
      %v2570 = vsel %vm2405, %v2524, 0.0
      %v2571 = vadd.f32 %v2569, %v2570
      %v2572 = vsel %vm2405, %v2525, 0.0
      %v2573 = vadd.f32 %v2571, %v2572
      %v2574 = vsel %vm2405, %v2526, 0.0
      %v2575 = vadd.f32 %v2573, %v2574
      %v2576 = vsel %vm2405, %v2527, 0.0
      %v2577 = vadd.f32 %v2575, %v2576
      %v2578 = vsel %vm2405, %v2528, 0.0
      %v2579 = vadd.f32 %v2577, %v2578
      %v2580 = vsel %vm2405, %v2529, 0.0
      %v2581 = vadd.f32 %v2579, %v2580
      %v2582 = vsel %vm2405, %v2530, 0.0
      %v2583 = vadd.f32 %v2581, %v2582
      %v2584 = vsel %vm2405, %v2531, 0.0
      %v2585 = vadd.f32 %v2583, %v2584
      %v2586 = vsel %vm2405, %v2532, 0.0
      %v2587 = vadd.f32 %v2585, %v2586
      %v2588 = vsel %vm2405, %v2533, 0.0
      %v2589 = vadd.f32 %v2587, %v2588
      %v2590 = vsel %vm2405, %v2534, 0.0
      %v2591 = vadd.f32 %v2589, %v2590
      %v2592 = vsel %vm2405, %v2535, 0.0
      %v2593 = vadd.f32 %v2591, %v2592
      %v2594 = vsel %vm2405, %v2536, 0.0
      %v2595 = vadd.f32 %v2593, %v2594
      %v2596 = vsel %vm2405, %v2537, 0.0
      %v2597 = vadd.f32 %v2595, %v2596
      %v2598 = vsel %vm2405, %v2538, 0.0
      %v2599 = vadd.f32 %v2597, %v2598
      %v2600 = vsel %vm2405, %v2539, 0.0
      %v2601 = vadd.f32 %v2599, %v2600
      %v2602 = vsel %vm2405, %v2540, 0.0
      %v2603 = vadd.f32 %v2601, %v2602
      %v2604 = vrot.slane %v2603, 4
      %v2605 = vadd.f32 %v2603, %v2604
      %v2606 = vrot.slane %v2605, 2
      %v2607 = vadd.f32 %v2605, %v2606
      %v2608 = vrot.slane %v2607, 1
      %v2609 = vadd.f32 %v2607, %v2608
      %2610 = vst.msk [vmem:[%s309] sm:$0x1] %vm2507, %v2609
      %s2611 = smul.u32 16, %s23
      %p2612 = scmp.lt.s32.totalorder %s22, 1
      %s2613 = scalar_select %p2612, %s22, 1
      %p2614 = scmp.lt.s32.totalorder %s2611, 15
      %s2615 = scalar_select %p2614, %s2611, 15
      %s2616 = smul.addr %s2615, 2
      %s2617 = smul.addr %s2613, 32
      %s2618 = sadd.s32 %s2616, %s2617
      %s2619 = smul.addr %s2618, 8
      %s2620 = scalar_lea.vmem %s4, %s2619
      %p2621 = scmp.lt.s32.totalorder %s22, 1
      %s2622 = scalar_select %p2621, %s22, 1
      %p2623 = scmp.lt.s32.totalorder %s23, 0
      %s2624 = scalar_select %p2623, %s23, 0
      %s2625 = sadd.s32 %s2624, %s2622
      %s2626 = scalar_lea.vmem %s5, %s2625
      %p2627 = scmp.lt.s32.totalorder %s22, 1
      %s2628 = scalar_select %p2627, %s22, 1
      %p2629 = scmp.lt.s32.totalorder %s23, 0
      %s2630 = scalar_select %p2629, %s23, 0
      %s2631 = sadd.s32 %s2630, %s2628
      %s2632 = scalar_lea.vmem %s6, %s2631
      // Predicated region
      $region53: #{residual_block_forward_nhwc.4} parent=35 // pred_check
        %p2633 = pneg %p139
      $region54: #{residual_block_forward_nhwc.4} parent=35 // pred_check_branch
        %2635 = sbr.rel (%p2633) target = $region56
      $region55: #{residual_block_forward_nhwc.4} parent=35 // pred_region
        %s2636 = smul.u32 16, %s23
      $region56: #{residual_block_forward_nhwc.4} parent=35 // pred_fallthru
        _
      // Predicated region
      $region57: #{residual_block_forward_nhwc.4} parent=35 // pred_check
        %p2637 = pneg %p167
      $region58: #{residual_block_forward_nhwc.4} parent=35 // pred_check_branch
        %2639 = sbr.rel (%p2637) target = $region60
      $region59: #{residual_block_forward_nhwc.4} parent=35 // pred_region
        _
      $region60: #{residual_block_forward_nhwc.4} parent=35 // pred_fallthru
        _
      // Predicated region
      $region61: #{residual_block_forward_nhwc.4} parent=35 // pred_check
        %p2640 = pneg %p195
      $region62: #{residual_block_forward_nhwc.4} parent=35 // pred_check_branch
        %2642 = sbr.rel (%p2640) target = $region64
      $region63: #{residual_block_forward_nhwc.4} parent=35 // pred_region
        _
      $region64: #{residual_block_forward_nhwc.4} parent=35 // pred_fallthru
        _
    $region36: #{residual_block_forward_nhwc.4} parent=5 // pred_fallthru
      _
    %p2643 = scmp.le.s32.totalorder 2, %s13
    // Predicated region
    $region65: #{residual_block_forward_nhwc.4} parent=5 // pred_check
      %p2644 = pneg %p2643
    $region66: #{residual_block_forward_nhwc.4} parent=5 // pred_check_branch
      %2646 = sbr.rel (%p2644) target = $region68
    $region67: #{residual_block_forward_nhwc.4} parent=5 // pred_region
      %s2647 = ssub.s32 %s13, 2
      // Predicated region
      $region69: #{residual_block_forward_nhwc.4} parent=67 // pred_check
        %p2648 = pneg %p145
      $region70: #{residual_block_forward_nhwc.4} parent=67 // pred_check_branch
        %2650 = sbr.rel (%p2648) target = $region72
      $region71: #{residual_block_forward_nhwc.4} parent=67 // pred_region
        %s2651 = smul.u32 16, %s25
        %p2652 = scmp.lt.s32.totalorder %s24, 1
        %s2653 = scalar_select %p2652, %s24, 1
        %p2654 = scmp.lt.s32.totalorder %s2651, 15
        %s2655 = scalar_select %p2654, %s2651, 15
        %s2656 = smul.addr %s2655, 2
        %s2657 = smul.addr %s2653, 32
        %s2658 = sadd.s32 %s2656, %s2657
        %s2659 = smul.addr %s2658, 8
        %s2660 = scalar_lea.vmem %s4, %s2659
      $region72: #{residual_block_forward_nhwc.4} parent=67 // pred_fallthru
        _
      // Predicated region
      $region73: #{residual_block_forward_nhwc.4} parent=67 // pred_check
        %p2661 = pneg %p173
      $region74: #{residual_block_forward_nhwc.4} parent=67 // pred_check_branch
        %2663 = sbr.rel (%p2661) target = $region76
      $region75: #{residual_block_forward_nhwc.4} parent=67 // pred_region
        %p2664 = scmp.lt.s32.totalorder %s24, 1
        %s2665 = scalar_select %p2664, %s24, 1
        %p2666 = scmp.lt.s32.totalorder %s25, 0
        %s2667 = scalar_select %p2666, %s25, 0
        %s2668 = sadd.s32 %s2667, %s2665
        %s2669 = scalar_lea.vmem %s5, %s2668
      $region76: #{residual_block_forward_nhwc.4} parent=67 // pred_fallthru
        _
      // Predicated region
      $region77: #{residual_block_forward_nhwc.4} parent=67 // pred_check
        %p2670 = pneg %p201
      $region78: #{residual_block_forward_nhwc.4} parent=67 // pred_check_branch
        %2672 = sbr.rel (%p2670) target = $region80
      $region79: #{residual_block_forward_nhwc.4} parent=67 // pred_region
        %p2673 = scmp.lt.s32.totalorder %s24, 1
        %s2674 = scalar_select %p2673, %s24, 1
        %p2675 = scmp.lt.s32.totalorder %s25, 0
        %s2676 = scalar_select %p2675, %s25, 0
        %s2677 = sadd.s32 %s2676, %s2674
        %s2678 = scalar_lea.vmem %s6, %s2677
      $region80: #{residual_block_forward_nhwc.4} parent=67 // pred_fallthru
        _
    $region68: #{residual_block_forward_nhwc.4} parent=5 // pred_fallthru
      _
  $region6: #{residual_block_forward_nhwc.4} parent=0 // loop_footer
    %s17 = sadd.s32 1, %s13
  $region7: #{residual_block_forward_nhwc.4} parent=0 // loop_footer_branch
    %12 = sbr.rel target = $region3
  $region8: #{residual_block_forward_nhwc.4} parent=0 // loop_exit
    _

</llo_original>
